<compile_context>
chip_gen: v6e
topology: v6e:2x2x1
jax: 0.10.0
libtpu: 0.0.40
codegen_flags: <defaults>
</compile_context>

<pallas_src>
import functools

import jax
import jax.numpy as jnp
from jax import lax
from jax.experimental import pallas as pl
from jax.experimental.pallas import tpu as pltpu

EPS = 1e-5


def _relu(x):
    return jnp.maximum(x, 0.0)


def _bn_train(x, gamma, beta):
    # PyTorch BatchNorm1d (training mode): stats over the batch (axis 0).
    mean = jnp.mean(x, axis=0, keepdims=True)
    var = jnp.mean((x - mean) ** 2, axis=0, keepdims=True)
    return (x - mean) * lax.rsqrt(var + EPS) * gamma + beta


# ------------------------------ fused kernel -------------------------------- #

def _fused_autoencoder_kernel(
        x_ref,
        w_me1, b_me1, w_me2, b_me2,
        w_se1, b_se1, w_se2, b_se2, g_se, bt_se,
        w_sd1, b_sd1, g_sd, bt_sd, w_sd2, b_sd2,
        g_md0, bt_md0, w_md1, b_md1, g_md1, bt_md1, w_md2, b_md2,
        o_ref, *, num_measures):
    B = x_ref.shape[0]                       # rows in this batch block
    mi = w_me1.shape[0]
    mo = w_me2.shape[1]
    NM = num_measures

    def dot16(a, w):
        # bf16 operands on the MXU, f32 accumulation; everything else is f32.
        return jnp.dot(a.astype(jnp.bfloat16), w,
                       preferred_element_type=jnp.float32)

    # ---- measureEncoder: Linear(mi,1024)->ReLU->Linear(1024,mo)->ReLU ------
    # Row independent; stack all NM lane slices of x into one (NM*B, mi)
    # block (rows ordered m*B + b) so each weight is pushed through the MXU
    # exactly once.  Sublane concat of 8-row tiles is tile-aligned (B % 8 == 0).
    xs = jnp.concatenate([x_ref[:, m * mi:(m + 1) * mi] for m in range(NM)],
                         axis=0)                                  # (NM*B, mi)
    h = _relu(dot16(xs, w_me1[...]) + b_me1[...])
    enc = _relu(dot16(h, w_me2[...]) + b_me2[...])                # (NM*B, mo)

    # ---- songEncoder: Linear(NM*mo,512)->ReLU->Linear(512,so)->BN(128) -----
    # Lane-concat the per-measure encodings back into (B, NM*mo): one K=NM*mo
    # matmul instead of NM K=mo matmuls + adds.  Lane concat at 128-lane
    # multiples is tile-aligned.
    hs = jnp.concatenate([enc[m * B:(m + 1) * B, :] for m in range(NM)],
                         axis=1)                                  # (B, NM*mo)
    h1 = _relu(dot16(hs, w_se1[...]) + b_se1[...])
    z = dot16(h1, w_se2[...]) + b_se2[...]
    z = _bn_train(z, g_se[...], bt_se[...])

    # ---- songDecoder: Linear(so,512)->BN(512)->ReLU->Linear(512,NM*mo) -----
    d = dot16(z, w_sd1[...]) + b_sd1[...]
    d = _relu(_bn_train(d, g_sd[...], bt_sd[...]))
    dout = dot16(d, w_sd2[...]) + b_sd2[...]                      # (B, NM*mo)
    # Rows grouped as (m*B + b): a permutation of PyTorch's (b*NM + m) order.
    # BatchNorm stats are permutation invariant; all other ops are per-row.
    dm = jnp.concatenate([dout[:, m * mo:(m + 1) * mo] for m in range(NM)],
                         axis=0)                                  # (NM*B, mo)

    # ---- measureDecoder: BN(128)->ReLU->Linear->BN(1024)->ReLU->Linear->Sig -
    y = _relu(_bn_train(dm, g_md0[...], bt_md0[...]))
    y = dot16(y, w_md1[...]) + b_md1[...]
    y = _relu(_bn_train(y, g_md1[...], bt_md1[...]))
    y = dot16(y, w_md2[...]) + b_md2[...]
    y = pl.reciprocal(1.0 + jnp.exp(-y), approx=True)             # sigmoid on EUP

    # Scatter row (m*B + b) -> out[b, m*mi:(m+1)*mi]  (== PyTorch's reshape).
    for m in range(NM):
        o_ref[:, m * mi:(m + 1) * mi] = y[m * B:(m + 1) * B, :]


# ------------------------------ call wrapper -------------------------------- #

def autoencoder_forward(x, p, num_measures, block_b=None):
    B = x.shape[0]
    mi = p["w_me1"].shape[0]
    mo = p["w_me2"].shape[1]
    NM = num_measures
    assert x.shape[1] == NM * mi
    # All "free" slices / concats rely on (8,128) tile alignment.
    assert B % 8 == 0, "batch must be a multiple of 8 (sublane tile)"
    assert mi % 128 == 0 and mo % 128 == 0, "features must be 128-lane multiples"

    # One block == whole batch by default -> BatchNorm over the full batch,
    # exactly matching the PyTorch module.  Smaller blocks amortize weight DMA
    # across grid steps (weights pinned to block (0,0)) but make BN per-block.
    if block_b is None:
        block_b = B
    assert B % block_b == 0 and block_b % 8 == 0
    num_blocks = B // block_b

    bf = lambda w: w.astype(jnp.bfloat16)   # cast matmul weights once

    weights = (
        bf(p["w_me1"]), p["b_me1"], bf(p["w_me2"]), p["b_me2"],
        bf(p["w_se1"]), p["b_se1"], bf(p["w_se2"]), p["b_se2"],
        p["g_se"], p["bt_se"],
        bf(p["w_sd1"]), p["b_sd1"], p["g_sd"], p["bt_sd"],
        bf(p["w_sd2"]), p["b_sd2"],
        p["g_md0"], p["bt_md0"], bf(p["w_md1"]), p["b_md1"],
        p["g_md1"], p["bt_md1"], bf(p["w_md2"]), p["b_md2"],
    )

    # x / out tiled per batch block; every weight's index_map returns the same
    # block so it stays VMEM-resident across all grid steps (no re-DMA).
    x_spec = pl.BlockSpec((block_b, NM * mi), lambda i: (i, 0))
    w_specs = [pl.BlockSpec(w.shape, lambda i, _nd=w.ndim: (0,) * _nd)
               for w in weights]
    out_spec = pl.BlockSpec((block_b, NM * mi), lambda i: (i, 0))

    nmb = B * NM
    so = p["w_se2"].shape[1]
    flops = 2 * (nmb * mi * 1024 + nmb * 1024 * mo          # measureEncoder
                 + B * NM * mo * 512 + B * 512 * so          # songEncoder
                 + B * so * 512 + B * 512 * NM * mo          # songDecoder
                 + nmb * mo * 1024 + nmb * 1024 * mi)        # measureDecoder
    bytes_accessed = (int(x.size) * 4
                      + sum(int(a.size) * a.dtype.itemsize for a in weights)
                      + B * NM * mi * 4)
    cost = pl.CostEstimate(flops=flops, transcendentals=nmb * mi,
                           bytes_accessed=bytes_accessed)

    kernel = functools.partial(_fused_autoencoder_kernel, num_measures=NM)

    # Weights (~2.4 MB bf16) + activations fit well inside the 32 MiB scoped
    # VMEM limit on every generation (incl. v7x's 64 MiB physical ceiling).
    return pl.pallas_call(
        kernel,
        out_shape=jax.ShapeDtypeStruct((B, NM * mi), jnp.float32),
        grid=(num_blocks,),
        in_specs=[x_spec] + w_specs,
        out_specs=out_spec,
        compiler_params=pltpu.CompilerParams(
            dimension_semantics=("parallel",),           # v7x: both TCs usable
            vmem_limit_bytes=32 * 1024 * 1024),
        cost_estimate=cost,
    )(x, *weights)


# ---------------------- deterministic parameter init ----------------------- #

def init_params(key, measure_in, measure_out, num_measures, song_out):
    ks = jax.random.split(key, 8)

    def lin(k, fi, fo, scale=0.05):
        kw, kb = jax.random.split(k)
        w = jax.random.normal(kw, (fi, fo), jnp.float32) * scale
        b = jax.random.normal(kb, (1, fo), jnp.float32) * 0.01
        return w, b

    p = {}
    p["w_me1"], p["b_me1"] = lin(ks[0], measure_in, 1024)
    p["w_me2"], p["b_me2"] = lin(ks[1], 1024, measure_out)
    p["w_se1"], p["b_se1"] = lin(ks[2], measure_out * num_measures, 512)
    p["w_se2"], p["b_se2"] = lin(ks[3], 512, song_out)
    p["g_se"] = jnp.ones((1, song_out), jnp.float32)          # BatchNorm1d(128)
    p["bt_se"] = jnp.zeros((1, song_out), jnp.float32)
    p["w_sd1"], p["b_sd1"] = lin(ks[4], song_out, 512)
    p["g_sd"] = jnp.ones((1, 512), jnp.float32)               # BatchNorm1d(512)
    p["bt_sd"] = jnp.zeros((1, 512), jnp.float32)
    p["w_sd2"], p["b_sd2"] = lin(ks[5], 512, measure_out * num_measures)
    p["g_md0"] = jnp.ones((1, measure_out), jnp.float32)      # BatchNorm1d(128)
    p["bt_md0"] = jnp.zeros((1, measure_out), jnp.float32)
    p["w_md1"], p["b_md1"] = lin(ks[6], measure_out, 1024)
    p["g_md1"] = jnp.ones((1, 1024), jnp.float32)             # BatchNorm1d(1024)
    p["bt_md1"] = jnp.zeros((1, 1024), jnp.float32)
    p["w_md2"], p["b_md2"] = lin(ks[7], 1024, measure_in)
    return p


# ----------------------------- pure-JAX reference --------------------------- #

def reference_forward(x, p, num_measures):
    B = x.shape[0]
    mi = p["w_me1"].shape[0]
    mo = p["w_me2"].shape[1]
    hp = lambda a, w, b: jnp.dot(a, w, precision=lax.Precision.HIGHEST) + b

    x = x.reshape(B * num_measures, mi)
    x = _relu(hp(x, p["w_me1"], p["b_me1"]))
    x = _relu(hp(x, p["w_me2"], p["b_me2"]))
    x = x.reshape(B, num_measures * mo)
    x = _relu(hp(x, p["w_se1"], p["b_se1"]))
    x = _bn_train(hp(x, p["w_se2"], p["b_se2"]), p["g_se"], p["bt_se"])
    x = _relu(_bn_train(hp(x, p["w_sd1"], p["b_sd1"]), p["g_sd"], p["bt_sd"]))
    x = hp(x, p["w_sd2"], p["b_sd2"])
    x = x.reshape(B * num_measures, mo)
    x = _relu(_bn_train(x, p["g_md0"], p["bt_md0"]))
    x = _relu(_bn_train(hp(x, p["w_md1"], p["b_md1"]), p["g_md1"], p["bt_md1"]))
    x = jax.nn.sigmoid(hp(x, p["w_md2"], p["b_md2"]))
    return x.reshape(B, num_measures * mi)


if __name__ == "__main__":
    # measure_out and song_out must be 128 because the original module
    # hard-codes BatchNorm1d(128) in songEncoder and measureDecoder.
    B = 8
    num_measures = 2
    measure_in = 256
    measure_out = 128
    song_out = 128

    x = jax.random.normal(jax.random.PRNGKey(0),
                          (B, num_measures * measure_in), jnp.float32)
    params = init_params(jax.random.PRNGKey(1),
                         measure_in, measure_out, num_measures, song_out)

    out = jax.block_until_ready(autoencoder_forward(x, params, num_measures))
    ref = reference_forward(x, params, num_measures)

    assert out.shape == (B, num_measures * measure_in)
    # bf16 matmul operands (f32 accumulation) vs. f32 HIGHEST reference.
    assert bool(jnp.allclose(out, ref, rtol=3e-2, atol=3e-2)), \
        float(jnp.max(jnp.abs(out - ref)))
    print("KERNEL_OK")
</pallas_src>

<mosaic_0001>
module attributes {stable_mosaic.version = 11 : i64} {
  func.func @_fused_autoencoder_kernel(%arg0: i32, %arg1: memref<8x512xf32, #tpu.memory_space<vmem>>, %arg2: memref<256x1024xbf16, #tpu.memory_space<vmem>>, %arg3: memref<1x1024xf32, #tpu.memory_space<vmem>>, %arg4: memref<1024x128xbf16, #tpu.memory_space<vmem>>, %arg5: memref<1x128xf32, #tpu.memory_space<vmem>>, %arg6: memref<256x512xbf16, #tpu.memory_space<vmem>>, %arg7: memref<1x512xf32, #tpu.memory_space<vmem>>, %arg8: memref<512x128xbf16, #tpu.memory_space<vmem>>, %arg9: memref<1x128xf32, #tpu.memory_space<vmem>>, %arg10: memref<1x128xf32, #tpu.memory_space<vmem>>, %arg11: memref<1x128xf32, #tpu.memory_space<vmem>>, %arg12: memref<128x512xbf16, #tpu.memory_space<vmem>>, %arg13: memref<1x512xf32, #tpu.memory_space<vmem>>, %arg14: memref<1x512xf32, #tpu.memory_space<vmem>>, %arg15: memref<1x512xf32, #tpu.memory_space<vmem>>, %arg16: memref<512x256xbf16, #tpu.memory_space<vmem>>, %arg17: memref<1x256xf32, #tpu.memory_space<vmem>>, %arg18: memref<1x128xf32, #tpu.memory_space<vmem>>, %arg19: memref<1x128xf32, #tpu.memory_space<vmem>>, %arg20: memref<128x1024xbf16, #tpu.memory_space<vmem>>, %arg21: memref<1x1024xf32, #tpu.memory_space<vmem>>, %arg22: memref<1x1024xf32, #tpu.memory_space<vmem>>, %arg23: memref<1x1024xf32, #tpu.memory_space<vmem>>, %arg24: memref<1024x256xbf16, #tpu.memory_space<vmem>>, %arg25: memref<1x256xf32, #tpu.memory_space<vmem>>, %arg26: memref<8x512xf32, #tpu.memory_space<vmem>>) attributes {dimension_semantics = [#tpu.dimension_semantics<parallel>], iteration_bounds = array<i64: 1>, scalar_prefetch = 0 : i64, scratch_operands = 0 : i64, tpu.core_type = #tpu.core_type<tc>, window_params = [{transform_indices = @transform_0, window_bounds = array<i64: 8, 512>}, {pipeline_mode = #tpu.pipeline_mode<synchronous>, transform_indices = @transform_1, window_bounds = array<i64: 256, 1024>}, {pipeline_mode = #tpu.pipeline_mode<synchronous>, transform_indices = @transform_2, window_bounds = array<i64: 1, 1024>}, {pipeline_mode = #tpu.pipeline_mode<synchronous>, transform_indices = @transform_3, window_bounds = array<i64: 1024, 128>}, {pipeline_mode = #tpu.pipeline_mode<synchronous>, transform_indices = @transform_4, window_bounds = array<i64: 1, 128>}, {pipeline_mode = #tpu.pipeline_mode<synchronous>, transform_indices = @transform_5, window_bounds = array<i64: 256, 512>}, {pipeline_mode = #tpu.pipeline_mode<synchronous>, transform_indices = @transform_6, window_bounds = array<i64: 1, 512>}, {pipeline_mode = #tpu.pipeline_mode<synchronous>, transform_indices = @transform_7, window_bounds = array<i64: 512, 128>}, {pipeline_mode = #tpu.pipeline_mode<synchronous>, transform_indices = @transform_8, window_bounds = array<i64: 1, 128>}, {pipeline_mode = #tpu.pipeline_mode<synchronous>, transform_indices = @transform_9, window_bounds = array<i64: 1, 128>}, {pipeline_mode = #tpu.pipeline_mode<synchronous>, transform_indices = @transform_10, window_bounds = array<i64: 1, 128>}, {pipeline_mode = #tpu.pipeline_mode<synchronous>, transform_indices = @transform_11, window_bounds = array<i64: 128, 512>}, {pipeline_mode = #tpu.pipeline_mode<synchronous>, transform_indices = @transform_12, window_bounds = array<i64: 1, 512>}, {pipeline_mode = #tpu.pipeline_mode<synchronous>, transform_indices = @transform_13, window_bounds = array<i64: 1, 512>}, {pipeline_mode = #tpu.pipeline_mode<synchronous>, transform_indices = @transform_14, window_bounds = array<i64: 1, 512>}, {pipeline_mode = #tpu.pipeline_mode<synchronous>, transform_indices = @transform_15, window_bounds = array<i64: 512, 256>}, {pipeline_mode = #tpu.pipeline_mode<synchronous>, transform_indices = @transform_16, window_bounds = array<i64: 1, 256>}, {pipeline_mode = #tpu.pipeline_mode<synchronous>, transform_indices = @transform_17, window_bounds = array<i64: 1, 128>}, {pipeline_mode = #tpu.pipeline_mode<synchronous>, transform_indices = @transform_18, window_bounds = array<i64: 1, 128>}, {pipeline_mode = #tpu.pipeline_mode<synchronous>, transform_indices = @transform_19, window_bounds = array<i64: 128, 1024>}, {pipeline_mode = #tpu.pipeline_mode<synchronous>, transform_indices = @transform_20, window_bounds = array<i64: 1, 1024>}, {pipeline_mode = #tpu.pipeline_mode<synchronous>, transform_indices = @transform_21, window_bounds = array<i64: 1, 1024>}, {pipeline_mode = #tpu.pipeline_mode<synchronous>, transform_indices = @transform_22, window_bounds = array<i64: 1, 1024>}, {pipeline_mode = #tpu.pipeline_mode<synchronous>, transform_indices = @transform_23, window_bounds = array<i64: 1024, 256>}, {pipeline_mode = #tpu.pipeline_mode<synchronous>, transform_indices = @transform_24, window_bounds = array<i64: 1, 256>}, {transform_indices = @transform_25, window_bounds = array<i64: 8, 512>}]} {
    %c0 = arith.constant 0 : index
    %c0_0 = arith.constant 0 : index
    %0 = vector.load %arg1[%c0, %c0_0] : memref<8x512xf32, #tpu.memory_space<vmem>>, vector<8x256xf32>
    %c0_1 = arith.constant 0 : index
    %c256 = arith.constant 256 : index
    %1 = vector.load %arg1[%c0_1, %c256] : memref<8x512xf32, #tpu.memory_space<vmem>>, vector<8x256xf32>
    %2 = tpu.concatenate %0, %1 in 0 : vector<8x256xf32>, vector<8x256xf32> -> vector<16x256xf32>
    %c0_2 = arith.constant 0 : index
    %c0_3 = arith.constant 0 : index
    %3 = vector.load %arg2[%c0_2, %c0_3] : memref<256x1024xbf16, #tpu.memory_space<vmem>>, vector<256x1024xbf16>
    %4 = arith.truncf %2 : vector<16x256xf32> to vector<16x256xbf16>
    %cst = arith.constant dense<0.000000e+00> : vector<16x1024xf32>
    %5 = tpu.matmul %4, %3, %cst {dimension_numbers = #tpu.dot_dimension_numbers<[1], [0], [0], [1], [0, 0, 1, 1], [], []>} : vector<16x256xbf16>, vector<256x1024xbf16>, vector<16x1024xf32> -> vector<16x1024xf32>
    %c0_4 = arith.constant 0 : index
    %c0_5 = arith.constant 0 : index
    %6 = vector.load %arg3[%c0_4, %c0_5] : memref<1x1024xf32, #tpu.memory_space<vmem>>, vector<1x1024xf32>
    %7 = vector.broadcast %6 : vector<1x1024xf32> to vector<16x1024xf32>
    %8 = arith.addf %5, %7 : vector<16x1024xf32>
    %cst_6 = arith.constant 0.000000e+00 : f32
    %9 = vector.broadcast %cst_6 : f32 to vector<16x1024xf32>
    %10 = arith.maximumf %8, %9 : vector<16x1024xf32>
    %c0_7 = arith.constant 0 : index
    %c0_8 = arith.constant 0 : index
    %11 = vector.load %arg4[%c0_7, %c0_8] : memref<1024x128xbf16, #tpu.memory_space<vmem>>, vector<1024x128xbf16>
    %12 = arith.truncf %10 : vector<16x1024xf32> to vector<16x1024xbf16>
    %cst_9 = arith.constant dense<0.000000e+00> : vector<16x128xf32>
    %13 = tpu.matmul %12, %11, %cst_9 {dimension_numbers = #tpu.dot_dimension_numbers<[1], [0], [0], [1], [0, 0, 1, 1], [], []>} : vector<16x1024xbf16>, vector<1024x128xbf16>, vector<16x128xf32> -> vector<16x128xf32>
    %c0_10 = arith.constant 0 : index
    %c0_11 = arith.constant 0 : index
    %14 = vector.load %arg5[%c0_10, %c0_11] : memref<1x128xf32, #tpu.memory_space<vmem>>, vector<1x128xf32>
    %15 = vector.broadcast %14 : vector<1x128xf32> to vector<16x128xf32>
    %16 = arith.addf %13, %15 : vector<16x128xf32>
    %cst_12 = arith.constant 0.000000e+00 : f32
    %17 = vector.broadcast %cst_12 : f32 to vector<16x128xf32>
    %18 = arith.maximumf %16, %17 : vector<16x128xf32>
    %19 = vector.extract_strided_slice %18 {offsets = [0, 0], sizes = [8, 128], strides = [1, 1]} : vector<16x128xf32> to vector<8x128xf32>
    %20 = vector.extract_strided_slice %18 {offsets = [8, 0], sizes = [8, 128], strides = [1, 1]} : vector<16x128xf32> to vector<8x128xf32>
    %21 = tpu.concatenate %19, %20 in 1 : vector<8x128xf32>, vector<8x128xf32> -> vector<8x256xf32>
    %c0_13 = arith.constant 0 : index
    %c0_14 = arith.constant 0 : index
    %22 = vector.load %arg6[%c0_13, %c0_14] : memref<256x512xbf16, #tpu.memory_space<vmem>>, vector<256x512xbf16>
    %23 = arith.truncf %21 : vector<8x256xf32> to vector<8x256xbf16>
    %cst_15 = arith.constant dense<0.000000e+00> : vector<8x512xf32>
    %24 = tpu.matmul %23, %22, %cst_15 {dimension_numbers = #tpu.dot_dimension_numbers<[1], [0], [0], [1], [0, 0, 1, 1], [], []>} : vector<8x256xbf16>, vector<256x512xbf16>, vector<8x512xf32> -> vector<8x512xf32>
    %c0_16 = arith.constant 0 : index
    %c0_17 = arith.constant 0 : index
    %25 = vector.load %arg7[%c0_16, %c0_17] : memref<1x512xf32, #tpu.memory_space<vmem>>, vector<1x512xf32>
    %26 = vector.broadcast %25 : vector<1x512xf32> to vector<8x512xf32>
    %27 = arith.addf %24, %26 : vector<8x512xf32>
    %cst_18 = arith.constant 0.000000e+00 : f32
    %28 = vector.broadcast %cst_18 : f32 to vector<8x512xf32>
    %29 = arith.maximumf %27, %28 : vector<8x512xf32>
    %c0_19 = arith.constant 0 : index
    %c0_20 = arith.constant 0 : index
    %30 = vector.load %arg8[%c0_19, %c0_20] : memref<512x128xbf16, #tpu.memory_space<vmem>>, vector<512x128xbf16>
    %31 = arith.truncf %29 : vector<8x512xf32> to vector<8x512xbf16>
    %cst_21 = arith.constant dense<0.000000e+00> : vector<8x128xf32>
    %32 = tpu.matmul %31, %30, %cst_21 {dimension_numbers = #tpu.dot_dimension_numbers<[1], [0], [0], [1], [0, 0, 1, 1], [], []>} : vector<8x512xbf16>, vector<512x128xbf16>, vector<8x128xf32> -> vector<8x128xf32>
    %c0_22 = arith.constant 0 : index
    %c0_23 = arith.constant 0 : index
    %33 = vector.load %arg9[%c0_22, %c0_23] : memref<1x128xf32, #tpu.memory_space<vmem>>, vector<1x128xf32>
    %34 = vector.broadcast %33 : vector<1x128xf32> to vector<8x128xf32>
    %35 = arith.addf %32, %34 : vector<8x128xf32>
    %c0_24 = arith.constant 0 : index
    %c0_25 = arith.constant 0 : index
    %36 = vector.load %arg10[%c0_24, %c0_25] : memref<1x128xf32, #tpu.memory_space<vmem>>, vector<1x128xf32>
    %c0_26 = arith.constant 0 : index
    %c0_27 = arith.constant 0 : index
    %37 = vector.load %arg11[%c0_26, %c0_27] : memref<1x128xf32, #tpu.memory_space<vmem>>, vector<1x128xf32>
    %cst_28 = arith.constant dense<0.000000e+00> : vector<128xf32>
    %38 = vector.multi_reduction <add>, %35, %cst_28 [0] : vector<8x128xf32> to vector<128xf32>
    %39 = vector.shape_cast %38 : vector<128xf32> to vector<1x128xf32>
    %cst_29 = arith.constant 8.000000e+00 : f32
    %40 = vector.broadcast %cst_29 : f32 to vector<1x128xf32>
    %41 = arith.divf %39, %40 : vector<1x128xf32>
    %42 = vector.broadcast %41 : vector<1x128xf32> to vector<8x128xf32>
    %43 = arith.subf %35, %42 : vector<8x128xf32>
    %44 = arith.mulf %43, %43 : vector<8x128xf32>
    %cst_30 = arith.constant dense<0.000000e+00> : vector<128xf32>
    %45 = vector.multi_reduction <add>, %44, %cst_30 [0] : vector<8x128xf32> to vector<128xf32>
    %46 = vector.shape_cast %45 : vector<128xf32> to vector<1x128xf32>
    %cst_31 = arith.constant 8.000000e+00 : f32
    %47 = vector.broadcast %cst_31 : f32 to vector<1x128xf32>
    %48 = arith.divf %46, %47 : vector<1x128xf32>
    %49 = vector.broadcast %41 : vector<1x128xf32> to vector<8x128xf32>
    %50 = arith.subf %35, %49 : vector<8x128xf32>
    %cst_32 = arith.constant 9.99999974E-6 : f32
    %51 = vector.broadcast %cst_32 : f32 to vector<1x128xf32>
    %52 = arith.addf %48, %51 : vector<1x128xf32>
    %53 = math.rsqrt %52 : vector<1x128xf32>
    %54 = vector.broadcast %53 : vector<1x128xf32> to vector<8x128xf32>
    %55 = arith.mulf %50, %54 : vector<8x128xf32>
    %56 = vector.broadcast %36 : vector<1x128xf32> to vector<8x128xf32>
    %57 = arith.mulf %55, %56 : vector<8x128xf32>
    %58 = vector.broadcast %37 : vector<1x128xf32> to vector<8x128xf32>
    %59 = arith.addf %57, %58 : vector<8x128xf32>
    %c0_33 = arith.constant 0 : index
    %c0_34 = arith.constant 0 : index
    %60 = vector.load %arg12[%c0_33, %c0_34] : memref<128x512xbf16, #tpu.memory_space<vmem>>, vector<128x512xbf16>
    %61 = arith.truncf %59 : vector<8x128xf32> to vector<8x128xbf16>
    %cst_35 = arith.constant dense<0.000000e+00> : vector<8x512xf32>
    %62 = tpu.matmul %61, %60, %cst_35 {dimension_numbers = #tpu.dot_dimension_numbers<[1], [0], [0], [1], [0, 0, 1, 1], [], []>} : vector<8x128xbf16>, vector<128x512xbf16>, vector<8x512xf32> -> vector<8x512xf32>
    %c0_36 = arith.constant 0 : index
    %c0_37 = arith.constant 0 : index
    %63 = vector.load %arg13[%c0_36, %c0_37] : memref<1x512xf32, #tpu.memory_space<vmem>>, vector<1x512xf32>
    %64 = vector.broadcast %63 : vector<1x512xf32> to vector<8x512xf32>
    %65 = arith.addf %62, %64 : vector<8x512xf32>
    %c0_38 = arith.constant 0 : index
    %c0_39 = arith.constant 0 : index
    %66 = vector.load %arg14[%c0_38, %c0_39] : memref<1x512xf32, #tpu.memory_space<vmem>>, vector<1x512xf32>
    %c0_40 = arith.constant 0 : index
    %c0_41 = arith.constant 0 : index
    %67 = vector.load %arg15[%c0_40, %c0_41] : memref<1x512xf32, #tpu.memory_space<vmem>>, vector<1x512xf32>
    %cst_42 = arith.constant dense<0.000000e+00> : vector<512xf32>
    %68 = vector.multi_reduction <add>, %65, %cst_42 [0] : vector<8x512xf32> to vector<512xf32>
    %69 = vector.shape_cast %68 : vector<512xf32> to vector<1x512xf32>
    %cst_43 = arith.constant 8.000000e+00 : f32
    %70 = vector.broadcast %cst_43 : f32 to vector<1x512xf32>
    %71 = arith.divf %69, %70 : vector<1x512xf32>
    %72 = vector.broadcast %71 : vector<1x512xf32> to vector<8x512xf32>
    %73 = arith.subf %65, %72 : vector<8x512xf32>
    %74 = arith.mulf %73, %73 : vector<8x512xf32>
    %cst_44 = arith.constant dense<0.000000e+00> : vector<512xf32>
    %75 = vector.multi_reduction <add>, %74, %cst_44 [0] : vector<8x512xf32> to vector<512xf32>
    %76 = vector.shape_cast %75 : vector<512xf32> to vector<1x512xf32>
    %cst_45 = arith.constant 8.000000e+00 : f32
    %77 = vector.broadcast %cst_45 : f32 to vector<1x512xf32>
    %78 = arith.divf %76, %77 : vector<1x512xf32>
    %79 = vector.broadcast %71 : vector<1x512xf32> to vector<8x512xf32>
    %80 = arith.subf %65, %79 : vector<8x512xf32>
    %cst_46 = arith.constant 9.99999974E-6 : f32
    %81 = vector.broadcast %cst_46 : f32 to vector<1x512xf32>
    %82 = arith.addf %78, %81 : vector<1x512xf32>
    %83 = math.rsqrt %82 : vector<1x512xf32>
    %84 = vector.broadcast %83 : vector<1x512xf32> to vector<8x512xf32>
    %85 = arith.mulf %80, %84 : vector<8x512xf32>
    %86 = vector.broadcast %66 : vector<1x512xf32> to vector<8x512xf32>
    %87 = arith.mulf %85, %86 : vector<8x512xf32>
    %88 = vector.broadcast %67 : vector<1x512xf32> to vector<8x512xf32>
    %89 = arith.addf %87, %88 : vector<8x512xf32>
    %cst_47 = arith.constant 0.000000e+00 : f32
    %90 = vector.broadcast %cst_47 : f32 to vector<8x512xf32>
    %91 = arith.maximumf %89, %90 : vector<8x512xf32>
    %c0_48 = arith.constant 0 : index
    %c0_49 = arith.constant 0 : index
    %92 = vector.load %arg16[%c0_48, %c0_49] : memref<512x256xbf16, #tpu.memory_space<vmem>>, vector<512x256xbf16>
    %93 = arith.truncf %91 : vector<8x512xf32> to vector<8x512xbf16>
    %cst_50 = arith.constant dense<0.000000e+00> : vector<8x256xf32>
    %94 = tpu.matmul %93, %92, %cst_50 {dimension_numbers = #tpu.dot_dimension_numbers<[1], [0], [0], [1], [0, 0, 1, 1], [], []>} : vector<8x512xbf16>, vector<512x256xbf16>, vector<8x256xf32> -> vector<8x256xf32>
    %c0_51 = arith.constant 0 : index
    %c0_52 = arith.constant 0 : index
    %95 = vector.load %arg17[%c0_51, %c0_52] : memref<1x256xf32, #tpu.memory_space<vmem>>, vector<1x256xf32>
    %96 = vector.broadcast %95 : vector<1x256xf32> to vector<8x256xf32>
    %97 = arith.addf %94, %96 : vector<8x256xf32>
    %98 = vector.extract_strided_slice %97 {offsets = [0, 0], sizes = [8, 128], strides = [1, 1]} : vector<8x256xf32> to vector<8x128xf32>
    %99 = vector.extract_strided_slice %97 {offsets = [0, 128], sizes = [8, 128], strides = [1, 1]} : vector<8x256xf32> to vector<8x128xf32>
    %100 = tpu.concatenate %98, %99 in 0 : vector<8x128xf32>, vector<8x128xf32> -> vector<16x128xf32>
    %c0_53 = arith.constant 0 : index
    %c0_54 = arith.constant 0 : index
    %101 = vector.load %arg18[%c0_53, %c0_54] : memref<1x128xf32, #tpu.memory_space<vmem>>, vector<1x128xf32>
    %c0_55 = arith.constant 0 : index
    %c0_56 = arith.constant 0 : index
    %102 = vector.load %arg19[%c0_55, %c0_56] : memref<1x128xf32, #tpu.memory_space<vmem>>, vector<1x128xf32>
    %cst_57 = arith.constant dense<0.000000e+00> : vector<128xf32>
    %103 = vector.multi_reduction <add>, %100, %cst_57 [0] : vector<16x128xf32> to vector<128xf32>
    %104 = vector.shape_cast %103 : vector<128xf32> to vector<1x128xf32>
    %cst_58 = arith.constant 1.600000e+01 : f32
    %105 = vector.broadcast %cst_58 : f32 to vector<1x128xf32>
    %106 = arith.divf %104, %105 : vector<1x128xf32>
    %107 = vector.broadcast %106 : vector<1x128xf32> to vector<16x128xf32>
    %108 = arith.subf %100, %107 : vector<16x128xf32>
    %109 = arith.mulf %108, %108 : vector<16x128xf32>
    %cst_59 = arith.constant dense<0.000000e+00> : vector<128xf32>
    %110 = vector.multi_reduction <add>, %109, %cst_59 [0] : vector<16x128xf32> to vector<128xf32>
    %111 = vector.shape_cast %110 : vector<128xf32> to vector<1x128xf32>
    %cst_60 = arith.constant 1.600000e+01 : f32
    %112 = vector.broadcast %cst_60 : f32 to vector<1x128xf32>
    %113 = arith.divf %111, %112 : vector<1x128xf32>
    %114 = vector.broadcast %106 : vector<1x128xf32> to vector<16x128xf32>
    %115 = arith.subf %100, %114 : vector<16x128xf32>
    %cst_61 = arith.constant 9.99999974E-6 : f32
    %116 = vector.broadcast %cst_61 : f32 to vector<1x128xf32>
    %117 = arith.addf %113, %116 : vector<1x128xf32>
    %118 = math.rsqrt %117 : vector<1x128xf32>
    %119 = vector.broadcast %118 : vector<1x128xf32> to vector<16x128xf32>
    %120 = arith.mulf %115, %119 : vector<16x128xf32>
    %121 = vector.broadcast %101 : vector<1x128xf32> to vector<16x128xf32>
    %122 = arith.mulf %120, %121 : vector<16x128xf32>
    %123 = vector.broadcast %102 : vector<1x128xf32> to vector<16x128xf32>
    %124 = arith.addf %122, %123 : vector<16x128xf32>
    %cst_62 = arith.constant 0.000000e+00 : f32
    %125 = vector.broadcast %cst_62 : f32 to vector<16x128xf32>
    %126 = arith.maximumf %124, %125 : vector<16x128xf32>
    %c0_63 = arith.constant 0 : index
    %c0_64 = arith.constant 0 : index
    %127 = vector.load %arg20[%c0_63, %c0_64] : memref<128x1024xbf16, #tpu.memory_space<vmem>>, vector<128x1024xbf16>
    %128 = arith.truncf %126 : vector<16x128xf32> to vector<16x128xbf16>
    %cst_65 = arith.constant dense<0.000000e+00> : vector<16x1024xf32>
    %129 = tpu.matmul %128, %127, %cst_65 {dimension_numbers = #tpu.dot_dimension_numbers<[1], [0], [0], [1], [0, 0, 1, 1], [], []>} : vector<16x128xbf16>, vector<128x1024xbf16>, vector<16x1024xf32> -> vector<16x1024xf32>
    %c0_66 = arith.constant 0 : index
    %c0_67 = arith.constant 0 : index
    %130 = vector.load %arg21[%c0_66, %c0_67] : memref<1x1024xf32, #tpu.memory_space<vmem>>, vector<1x1024xf32>
    %131 = vector.broadcast %130 : vector<1x1024xf32> to vector<16x1024xf32>
    %132 = arith.addf %129, %131 : vector<16x1024xf32>
    %c0_68 = arith.constant 0 : index
    %c0_69 = arith.constant 0 : index
    %133 = vector.load %arg22[%c0_68, %c0_69] : memref<1x1024xf32, #tpu.memory_space<vmem>>, vector<1x1024xf32>
    %c0_70 = arith.constant 0 : index
    %c0_71 = arith.constant 0 : index
    %134 = vector.load %arg23[%c0_70, %c0_71] : memref<1x1024xf32, #tpu.memory_space<vmem>>, vector<1x1024xf32>
    %cst_72 = arith.constant dense<0.000000e+00> : vector<1024xf32>
    %135 = vector.multi_reduction <add>, %132, %cst_72 [0] : vector<16x1024xf32> to vector<1024xf32>
    %136 = vector.shape_cast %135 : vector<1024xf32> to vector<1x1024xf32>
    %cst_73 = arith.constant 1.600000e+01 : f32
    %137 = vector.broadcast %cst_73 : f32 to vector<1x1024xf32>
    %138 = arith.divf %136, %137 : vector<1x1024xf32>
    %139 = vector.broadcast %138 : vector<1x1024xf32> to vector<16x1024xf32>
    %140 = arith.subf %132, %139 : vector<16x1024xf32>
    %141 = arith.mulf %140, %140 : vector<16x1024xf32>
    %cst_74 = arith.constant dense<0.000000e+00> : vector<1024xf32>
    %142 = vector.multi_reduction <add>, %141, %cst_74 [0] : vector<16x1024xf32> to vector<1024xf32>
    %143 = vector.shape_cast %142 : vector<1024xf32> to vector<1x1024xf32>
    %cst_75 = arith.constant 1.600000e+01 : f32
    %144 = vector.broadcast %cst_75 : f32 to vector<1x1024xf32>
    %145 = arith.divf %143, %144 : vector<1x1024xf32>
    %146 = vector.broadcast %138 : vector<1x1024xf32> to vector<16x1024xf32>
    %147 = arith.subf %132, %146 : vector<16x1024xf32>
    %cst_76 = arith.constant 9.99999974E-6 : f32
    %148 = vector.broadcast %cst_76 : f32 to vector<1x1024xf32>
    %149 = arith.addf %145, %148 : vector<1x1024xf32>
    %150 = math.rsqrt %149 : vector<1x1024xf32>
    %151 = vector.broadcast %150 : vector<1x1024xf32> to vector<16x1024xf32>
    %152 = arith.mulf %147, %151 : vector<16x1024xf32>
    %153 = vector.broadcast %133 : vector<1x1024xf32> to vector<16x1024xf32>
    %154 = arith.mulf %152, %153 : vector<16x1024xf32>
    %155 = vector.broadcast %134 : vector<1x1024xf32> to vector<16x1024xf32>
    %156 = arith.addf %154, %155 : vector<16x1024xf32>
    %cst_77 = arith.constant 0.000000e+00 : f32
    %157 = vector.broadcast %cst_77 : f32 to vector<16x1024xf32>
    %158 = arith.maximumf %156, %157 : vector<16x1024xf32>
    %c0_78 = arith.constant 0 : index
    %c0_79 = arith.constant 0 : index
    %159 = vector.load %arg24[%c0_78, %c0_79] : memref<1024x256xbf16, #tpu.memory_space<vmem>>, vector<1024x256xbf16>
    %160 = arith.truncf %158 : vector<16x1024xf32> to vector<16x1024xbf16>
    %cst_80 = arith.constant dense<0.000000e+00> : vector<16x256xf32>
    %161 = tpu.matmul %160, %159, %cst_80 {dimension_numbers = #tpu.dot_dimension_numbers<[1], [0], [0], [1], [0, 0, 1, 1], [], []>} : vector<16x1024xbf16>, vector<1024x256xbf16>, vector<16x256xf32> -> vector<16x256xf32>
    %c0_81 = arith.constant 0 : index
    %c0_82 = arith.constant 0 : index
    %162 = vector.load %arg25[%c0_81, %c0_82] : memref<1x256xf32, #tpu.memory_space<vmem>>, vector<1x256xf32>
    %163 = vector.broadcast %162 : vector<1x256xf32> to vector<16x256xf32>
    %164 = arith.addf %161, %163 : vector<16x256xf32>
    %cst_83 = arith.constant 0.000000e+00 : f32
    %165 = vector.broadcast %cst_83 : f32 to vector<16x256xf32>
    %166 = arith.subf %165, %164 : vector<16x256xf32>
    %167 = math.exp %166 : vector<16x256xf32>
    %cst_84 = arith.constant 1.000000e+00 : f32
    %168 = vector.broadcast %cst_84 : f32 to vector<16x256xf32>
    %169 = arith.addf %168, %167 : vector<16x256xf32>
    %170 = tpu.reciprocal %169 {approx = true} : vector<16x256xf32> -> vector<16x256xf32>
    %171 = vector.extract_strided_slice %170 {offsets = [0, 0], sizes = [8, 256], strides = [1, 1]} : vector<16x256xf32> to vector<8x256xf32>
    %c0_85 = arith.constant 0 : index
    %c0_86 = arith.constant 0 : index
    %172 = vector.load %arg26[%c0_85, %c0_86] : memref<8x512xf32, #tpu.memory_space<vmem>>, vector<8x256xf32>
    tpu.vector_store %arg26[%c0_85, %c0_86], %171 {strides = array<i32>} : memref<8x512xf32, #tpu.memory_space<vmem>>, vector<8x256xf32>,
    %173 = vector.extract_strided_slice %170 {offsets = [8, 0], sizes = [8, 256], strides = [1, 1]} : vector<16x256xf32> to vector<8x256xf32>
    %c0_87 = arith.constant 0 : index
    %c256_88 = arith.constant 256 : index
    %174 = vector.load %arg26[%c0_87, %c256_88] : memref<8x512xf32, #tpu.memory_space<vmem>>, vector<8x256xf32>
    tpu.vector_store %arg26[%c0_87, %c256_88], %173 {strides = array<i32>} : memref<8x512xf32, #tpu.memory_space<vmem>>, vector<8x256xf32>,
    return
  }
  func.func @transform_0(%arg0: i32) -> (i32, i32) {
    %c0_i32 = arith.constant 0 : i32
    %c0_i32_0 = arith.constant 0 : i32
    return %arg0, %c0_i32 : i32, i32
  }
  func.func @transform_1(%arg0: i32) -> (i32, i32) {
    %c0_i32 = arith.constant 0 : i32
    %c0_i32_0 = arith.constant 0 : i32
    %c0_i32_1 = arith.constant 0 : i32
    return %c0_i32, %c0_i32_0 : i32, i32
  }
  func.func @transform_2(%arg0: i32) -> (i32, i32) {
    %c0_i32 = arith.constant 0 : i32
    %c0_i32_0 = arith.constant 0 : i32
    %c0_i32_1 = arith.constant 0 : i32
    return %c0_i32, %c0_i32_0 : i32, i32
  }
  func.func @transform_3(%arg0: i32) -> (i32, i32) {
    %c0_i32 = arith.constant 0 : i32
    %c0_i32_0 = arith.constant 0 : i32
    %c0_i32_1 = arith.constant 0 : i32
    return %c0_i32, %c0_i32_0 : i32, i32
  }
  func.func @transform_4(%arg0: i32) -> (i32, i32) {
    %c0_i32 = arith.constant 0 : i32
    %c0_i32_0 = arith.constant 0 : i32
    %c0_i32_1 = arith.constant 0 : i32
    return %c0_i32, %c0_i32_0 : i32, i32
  }
  func.func @transform_5(%arg0: i32) -> (i32, i32) {
    %c0_i32 = arith.constant 0 : i32
    %c0_i32_0 = arith.constant 0 : i32
    %c0_i32_1 = arith.constant 0 : i32
    return %c0_i32, %c0_i32_0 : i32, i32
  }
  func.func @transform_6(%arg0: i32) -> (i32, i32) {
    %c0_i32 = arith.constant 0 : i32
    %c0_i32_0 = arith.constant 0 : i32
    %c0_i32_1 = arith.constant 0 : i32
    return %c0_i32, %c0_i32_0 : i32, i32
  }
  func.func @transform_7(%arg0: i32) -> (i32, i32) {
    %c0_i32 = arith.constant 0 : i32
    %c0_i32_0 = arith.constant 0 : i32
    %c0_i32_1 = arith.constant 0 : i32
    return %c0_i32, %c0_i32_0 : i32, i32
  }
  func.func @transform_8(%arg0: i32) -> (i32, i32) {
    %c0_i32 = arith.constant 0 : i32
    %c0_i32_0 = arith.constant 0 : i32
    %c0_i32_1 = arith.constant 0 : i32
    return %c0_i32, %c0_i32_0 : i32, i32
  }
  func.func @transform_9(%arg0: i32) -> (i32, i32) {
    %c0_i32 = arith.constant 0 : i32
    %c0_i32_0 = arith.constant 0 : i32
    %c0_i32_1 = arith.constant 0 : i32
    return %c0_i32, %c0_i32_0 : i32, i32
  }
  func.func @transform_10(%arg0: i32) -> (i32, i32) {
    %c0_i32 = arith.constant 0 : i32
    %c0_i32_0 = arith.constant 0 : i32
    %c0_i32_1 = arith.constant 0 : i32
    return %c0_i32, %c0_i32_0 : i32, i32
  }
  func.func @transform_11(%arg0: i32) -> (i32, i32) {
    %c0_i32 = arith.constant 0 : i32
    %c0_i32_0 = arith.constant 0 : i32
    %c0_i32_1 = arith.constant 0 : i32
    return %c0_i32, %c0_i32_0 : i32, i32
  }
  func.func @transform_12(%arg0: i32) -> (i32, i32) {
    %c0_i32 = arith.constant 0 : i32
    %c0_i32_0 = arith.constant 0 : i32
    %c0_i32_1 = arith.constant 0 : i32
    return %c0_i32, %c0_i32_0 : i32, i32
  }
  func.func @transform_13(%arg0: i32) -> (i32, i32) {
    %c0_i32 = arith.constant 0 : i32
    %c0_i32_0 = arith.constant 0 : i32
    %c0_i32_1 = arith.constant 0 : i32
    return %c0_i32, %c0_i32_0 : i32, i32
  }
  func.func @transform_14(%arg0: i32) -> (i32, i32) {
    %c0_i32 = arith.constant 0 : i32
    %c0_i32_0 = arith.constant 0 : i32
    %c0_i32_1 = arith.constant 0 : i32
    return %c0_i32, %c0_i32_0 : i32, i32
  }
  func.func @transform_15(%arg0: i32) -> (i32, i32) {
    %c0_i32 = arith.constant 0 : i32
    %c0_i32_0 = arith.constant 0 : i32
    %c0_i32_1 = arith.constant 0 : i32
    return %c0_i32, %c0_i32_0 : i32, i32
  }
  func.func @transform_16(%arg0: i32) -> (i32, i32) {
    %c0_i32 = arith.constant 0 : i32
    %c0_i32_0 = arith.constant 0 : i32
    %c0_i32_1 = arith.constant 0 : i32
    return %c0_i32, %c0_i32_0 : i32, i32
  }
  func.func @transform_17(%arg0: i32) -> (i32, i32) {
    %c0_i32 = arith.constant 0 : i32
    %c0_i32_0 = arith.constant 0 : i32
    %c0_i32_1 = arith.constant 0 : i32
    return %c0_i32, %c0_i32_0 : i32, i32
  }
  func.func @transform_18(%arg0: i32) -> (i32, i32) {
    %c0_i32 = arith.constant 0 : i32
    %c0_i32_0 = arith.constant 0 : i32
    %c0_i32_1 = arith.constant 0 : i32
    return %c0_i32, %c0_i32_0 : i32, i32
  }
  func.func @transform_19(%arg0: i32) -> (i32, i32) {
    %c0_i32 = arith.constant 0 : i32
    %c0_i32_0 = arith.constant 0 : i32
    %c0_i32_1 = arith.constant 0 : i32
    return %c0_i32, %c0_i32_0 : i32, i32
  }
  func.func @transform_20(%arg0: i32) -> (i32, i32) {
    %c0_i32 = arith.constant 0 : i32
    %c0_i32_0 = arith.constant 0 : i32
    %c0_i32_1 = arith.constant 0 : i32
    return %c0_i32, %c0_i32_0 : i32, i32
  }
  func.func @transform_21(%arg0: i32) -> (i32, i32) {
    %c0_i32 = arith.constant 0 : i32
    %c0_i32_0 = arith.constant 0 : i32
    %c0_i32_1 = arith.constant 0 : i32
    return %c0_i32, %c0_i32_0 : i32, i32
  }
  func.func @transform_22(%arg0: i32) -> (i32, i32) {
    %c0_i32 = arith.constant 0 : i32
    %c0_i32_0 = arith.constant 0 : i32
    %c0_i32_1 = arith.constant 0 : i32
    return %c0_i32, %c0_i32_0 : i32, i32
  }
  func.func @transform_23(%arg0: i32) -> (i32, i32) {
    %c0_i32 = arith.constant 0 : i32
    %c0_i32_0 = arith.constant 0 : i32
    %c0_i32_1 = arith.constant 0 : i32
    return %c0_i32, %c0_i32_0 : i32, i32
  }
  func.func @transform_24(%arg0: i32) -> (i32, i32) {
    %c0_i32 = arith.constant 0 : i32
    %c0_i32_0 = arith.constant 0 : i32
    %c0_i32_1 = arith.constant 0 : i32
    return %c0_i32, %c0_i32_0 : i32, i32
  }
  func.func @transform_25(%arg0: i32) -> (i32, i32) {
    %c0_i32 = arith.constant 0 : i32
    %c0_i32_0 = arith.constant 0 : i32
    return %arg0, %c0_i32 : i32, i32
  }
}

</mosaic_0001>

<llo_original>
// kernel: tpu_custom_call.1
$region0: #{tpu_custom_call.1}
  #allocation0 [shape = 'u32[]', space=smem, size = 0x4, offset = 0x4, fixed_abs, tag = 'smem constant byte address 0x4 - core index']
  #allocation1 [shape = 'u32[144,128]{1,0:T(1,128)}', space=vmem, size = 0x12000, scoped, tag = 'internal scratch']
  %s0 = inlined_call_operand.hbm [shape: f32[8,512], index: 0, kind: input, shape index: {}]
  %s1 = inlined_call_operand.hbm [shape: bf16[256,1024], index: 1, kind: input, shape index: {}]
  %s2 = inlined_call_operand.hbm [shape: f32[1,1024], index: 2, kind: input, shape index: {}]
  %s3 = inlined_call_operand.hbm [shape: bf16[1024,128], index: 3, kind: input, shape index: {}]
  %s4 = inlined_call_operand.hbm [shape: f32[1,128], index: 4, kind: input, shape index: {}]
  %s5 = inlined_call_operand.hbm [shape: bf16[256,512], index: 5, kind: input, shape index: {}]
  %s6 = inlined_call_operand.hbm [shape: f32[1,512], index: 6, kind: input, shape index: {}]
  %s7 = inlined_call_operand.hbm [shape: bf16[512,128], index: 7, kind: input, shape index: {}]
  %s8 = inlined_call_operand.hbm [shape: f32[1,128], index: 8, kind: input, shape index: {}]
  %s9 = inlined_call_operand.hbm [shape: f32[1,128], index: 9, kind: input, shape index: {}]
  %s10 = inlined_call_operand.vmem [shape: f32[1,128], index: 10, kind: input, shape index: {}]
  %s11 = inlined_call_operand.hbm [shape: bf16[128,512], index: 11, kind: input, shape index: {}]
  %s12 = inlined_call_operand.hbm [shape: f32[1,512], index: 12, kind: input, shape index: {}]
  %s13 = inlined_call_operand.hbm [shape: f32[1,512], index: 13, kind: input, shape index: {}]
  %s14 = inlined_call_operand.hbm [shape: f32[1,512], index: 14, kind: input, shape index: {}]
  %s15 = inlined_call_operand.hbm [shape: bf16[512,256], index: 15, kind: input, shape index: {}]
  %s16 = inlined_call_operand.vmem [shape: f32[1,256], index: 16, kind: input, shape index: {}]
  %s17 = inlined_call_operand.vmem [shape: f32[1,128], index: 17, kind: input, shape index: {}]
  %s18 = inlined_call_operand.vmem [shape: f32[1,128], index: 18, kind: input, shape index: {}]
  %s19 = inlined_call_operand.hbm [shape: bf16[128,1024], index: 19, kind: input, shape index: {}]
  %s20 = inlined_call_operand.vmem [shape: f32[1,1024], index: 20, kind: input, shape index: {}]
  %s21 = inlined_call_operand.vmem [shape: f32[1,1024], index: 21, kind: input, shape index: {}]
  %s22 = inlined_call_operand.vmem [shape: f32[1,1024], index: 22, kind: input, shape index: {}]
  %s23 = inlined_call_operand.hbm [shape: bf16[1024,256], index: 23, kind: input, shape index: {}]
  %s24 = inlined_call_operand.vmem [shape: f32[1,256], index: 24, kind: input, shape index: {}]
  %s25 = inlined_call_operand.hbm [shape: f32[8,512], index: 25, kind: output, shape index: {}]
  %s26 = sld [smem:[#allocation0]]
  $region178: #{tpu_custom_call.1} parent=0
    _
  %s28 = ssub.s32 1, %s26
  %s29 = scalar_select 0, %s28, %s26
  $region1: #{tpu_custom_call.1} parent=0
    #allocation2 [shape = 'u8[16384]{0}', space=vmem, size = 0x4000, scoped, tag = 'input window, operand 0, single buffered']
    #allocation3 [shape = 's32[1]{0}', space=sflag, size = 0x4, scoped, tag = 'scoped memory for tpu_custom_call.1']
    #allocation4 [shape = 's32[1]{0}', space=sflag, size = 0x4, scoped, tag = 'scoped memory for tpu_custom_call.1']
    #allocation5 [shape = 'u8[524288]{0}', space=vmem, size = 0x80000, scoped, tag = 'input window, operand 1, single buffered']
    #allocation6 [shape = 's32[1]{0}', space=sflag, size = 0x4, scoped, tag = 'scoped memory for tpu_custom_call.1']
    #allocation7 [shape = 'u8[4096]{0}', space=vmem, size = 0x1000, scoped, tag = 'input window, operand 2, single buffered']
    #allocation8 [shape = 'u8[262144]{0}', space=vmem, size = 0x40000, scoped, tag = 'input window, operand 3, single buffered']
    #allocation9 [shape = 's32[1]{0}', space=sflag, size = 0x4, scoped, tag = 'scoped memory for tpu_custom_call.1']
    #allocation10 [shape = 'u8[512]{0}', space=vmem, size = 0x400, scoped, tag = 'input window, operand 4, single buffered']
    #allocation11 [shape = 'u8[262144]{0}', space=vmem, size = 0x40000, scoped, tag = 'input window, operand 5, single buffered']
    #allocation12 [shape = 's32[1]{0}', space=sflag, size = 0x4, scoped, tag = 'scoped memory for tpu_custom_call.1']
    #allocation13 [shape = 'u8[2048]{0}', space=vmem, size = 0x800, scoped, tag = 'input window, operand 6, single buffered']
    #allocation14 [shape = 'u8[131072]{0}', space=vmem, size = 0x20000, scoped, tag = 'input window, operand 7, single buffered']
    #allocation15 [shape = 's32[1]{0}', space=sflag, size = 0x4, scoped, tag = 'scoped memory for tpu_custom_call.1']
    #allocation16 [shape = 'u8[512]{0}', space=vmem, size = 0x400, scoped, tag = 'input window, operand 8, single buffered']
    #allocation17 [shape = 'u8[512]{0}', space=vmem, size = 0x400, scoped, tag = 'input window, operand 9, single buffered']
    #allocation18 [shape = 's32[1]{0}', space=sflag, size = 0x4, scoped, tag = 'scoped memory for tpu_custom_call.1']
    #allocation19 [shape = 'u8[131072]{0}', space=vmem, size = 0x20000, scoped, tag = 'input window, operand 11, single buffered']
    #allocation20 [shape = 'u8[2048]{0}', space=vmem, size = 0x800, scoped, tag = 'input window, operand 12, single buffered']
    #allocation21 [shape = 's32[1]{0}', space=sflag, size = 0x4, scoped, tag = 'scoped memory for tpu_custom_call.1']
    #allocation22 [shape = 'u8[2048]{0}', space=vmem, size = 0x800, scoped, tag = 'input window, operand 13, single buffered']
    #allocation23 [shape = 'u8[2048]{0}', space=vmem, size = 0x800, scoped, tag = 'input window, operand 14, single buffered']
    #allocation24 [shape = 's32[1]{0}', space=sflag, size = 0x4, scoped, tag = 'scoped memory for tpu_custom_call.1']
    #allocation25 [shape = 'u8[262144]{0}', space=vmem, size = 0x40000, scoped, tag = 'input window, operand 15, single buffered']
    #allocation26 [shape = 'u8[262144]{0}', space=vmem, size = 0x40000, scoped, tag = 'input window, operand 19, single buffered']
    #allocation27 [shape = 's32[1]{0}', space=sflag, size = 0x4, scoped, tag = 'scoped memory for tpu_custom_call.1']
    #allocation28 [shape = 'u8[524288]{0}', space=vmem, size = 0x80000, scoped, tag = 'input window, operand 23, single buffered']
    #allocation29 [shape = 'u8[16384]{0}', space=vmem, size = 0x4000, scoped, tag = 'output window, operand 0, single buffered']
    %30 = vsyncpa [#allocation3], 0
    %31 = vsyncpa [#allocation6], 0
    %32 = vsyncpa [#allocation9], 0
    %33 = vsyncpa [#allocation12], 0
    %34 = vsyncpa [#allocation15], 0
    %35 = vsyncpa [#allocation18], 0
    %36 = vsyncpa [#allocation21], 0
    %37 = vsyncpa [#allocation24], 0
    %38 = vsyncpa [#allocation27], 0
    %39 = vsyncpa [#allocation4], 0
    // Predicated region
    $region2: #{tpu_custom_call.1} parent=1 // pred_check
      _
    $region3: #{tpu_custom_call.1} parent=1 // pred_check_branch
      %41 = sbr.rel (0) target = $region5
    $region4: #{tpu_custom_call.1} parent=1 // pred_region
      %s43 = ssub.s32 512, 512
      %44 = vsyncadd [#allocation3], %s43
      %s46 = sshll.u32 [#allocation2], 4
      %s47 = int_to_ptr.vmem [resolvable:$true] %s46
      %49 = dma.hbm_to_vmem [thread:$0]  %s0, 512, %s47, [#allocation3]
    $region5: #{tpu_custom_call.1} parent=1 // pred_fallthru
      _
    // Predicated region
    $region6: #{tpu_custom_call.1} parent=1 // pred_check
      _
    $region7: #{tpu_custom_call.1} parent=1 // pred_check_branch
      %51 = sbr.rel (0) target = $region9
    $region8: #{tpu_custom_call.1} parent=1 // pred_region
      %s53 = ssub.s32 16384, 16384
      %54 = vsyncadd [#allocation6], %s53
      %s55 = sshll.u32 [#allocation5], 4
      %s56 = int_to_ptr.vmem [resolvable:$true] %s55
      %61 = dma.hbm_to_vmem [thread:$0]  %s1, 16384, %s56, [#allocation6], 512, 512, 32
    $region9: #{tpu_custom_call.1} parent=1 // pred_fallthru
      _
    // Predicated region
    $region10: #{tpu_custom_call.1} parent=1 // pred_check
      _
    $region11: #{tpu_custom_call.1} parent=1 // pred_check_branch
      %63 = sbr.rel (0) target = $region13
    $region12: #{tpu_custom_call.1} parent=1 // pred_region
      %s65 = ssub.s32 128, 128
      %66 = vsyncadd [#allocation6], %s65
      %s68 = sshll.u32 [#allocation7], 4
      %s69 = int_to_ptr.vmem [resolvable:$true] %s68
      %71 = dma.hbm_to_vmem [thread:$0]  %s2, 128, %s69, [#allocation6]
    $region13: #{tpu_custom_call.1} parent=1 // pred_fallthru
      _
    // Predicated region
    $region14: #{tpu_custom_call.1} parent=1 // pred_check
      _
    $region15: #{tpu_custom_call.1} parent=1 // pred_check_branch
      %73 = sbr.rel (0) target = $region17
    $region16: #{tpu_custom_call.1} parent=1 // pred_region
      %s75 = ssub.s32 8192, 8192
      %76 = vsyncadd [#allocation9], %s75
      %s77 = sshll.u32 [#allocation8], 4
      %s78 = int_to_ptr.vmem [resolvable:$true] %s77
      %83 = dma.hbm_to_vmem [thread:$0]  %s3, 8192, %s78, [#allocation9], 64, 64, 4
    $region17: #{tpu_custom_call.1} parent=1 // pred_fallthru
      _
    // Predicated region
    $region18: #{tpu_custom_call.1} parent=1 // pred_check
      _
    $region19: #{tpu_custom_call.1} parent=1 // pred_check_branch
      %85 = sbr.rel (0) target = $region21
    $region20: #{tpu_custom_call.1} parent=1 // pred_region
      %s87 = ssub.s32 16, 16
      %88 = vsyncadd [#allocation9], %s87
      %s90 = sshll.u32 [#allocation10], 4
      %s91 = int_to_ptr.vmem [resolvable:$true] %s90
      %93 = dma.hbm_to_vmem [thread:$0]  %s4, 16, %s91, [#allocation9]
    $region21: #{tpu_custom_call.1} parent=1 // pred_fallthru
      _
    // Predicated region
    $region22: #{tpu_custom_call.1} parent=1 // pred_check
      _
    $region23: #{tpu_custom_call.1} parent=1 // pred_check_branch
      %95 = sbr.rel (0) target = $region25
    $region24: #{tpu_custom_call.1} parent=1 // pred_region
      %s97 = ssub.s32 8192, 8192
      %98 = vsyncadd [#allocation12], %s97
      %s99 = sshll.u32 [#allocation11], 4
      %s100 = int_to_ptr.vmem [resolvable:$true] %s99
      %105 = dma.hbm_to_vmem [thread:$0]  %s5, 8192, %s100, [#allocation12], 256, 256, 16
    $region25: #{tpu_custom_call.1} parent=1 // pred_fallthru
      _
    // Predicated region
    $region26: #{tpu_custom_call.1} parent=1 // pred_check
      _
    $region27: #{tpu_custom_call.1} parent=1 // pred_check_branch
      %107 = sbr.rel (0) target = $region29
    $region28: #{tpu_custom_call.1} parent=1 // pred_region
      %s109 = ssub.s32 64, 64
      %110 = vsyncadd [#allocation12], %s109
      %s112 = sshll.u32 [#allocation13], 4
      %s113 = int_to_ptr.vmem [resolvable:$true] %s112
      %115 = dma.hbm_to_vmem [thread:$0]  %s6, 64, %s113, [#allocation12]
    $region29: #{tpu_custom_call.1} parent=1 // pred_fallthru
      _
    // Predicated region
    $region30: #{tpu_custom_call.1} parent=1 // pred_check
      _
    $region31: #{tpu_custom_call.1} parent=1 // pred_check_branch
      %117 = sbr.rel (0) target = $region33
    $region32: #{tpu_custom_call.1} parent=1 // pred_region
      %s119 = ssub.s32 4096, 4096
      %120 = vsyncadd [#allocation15], %s119
      %s121 = sshll.u32 [#allocation14], 4
      %s122 = int_to_ptr.vmem [resolvable:$true] %s121
      %127 = dma.hbm_to_vmem [thread:$0]  %s7, 4096, %s122, [#allocation15], 64, 64, 4
    $region33: #{tpu_custom_call.1} parent=1 // pred_fallthru
      _
    // Predicated region
    $region34: #{tpu_custom_call.1} parent=1 // pred_check
      _
    $region35: #{tpu_custom_call.1} parent=1 // pred_check_branch
      %129 = sbr.rel (0) target = $region37
    $region36: #{tpu_custom_call.1} parent=1 // pred_region
      %s131 = ssub.s32 16, 16
      %132 = vsyncadd [#allocation15], %s131
      %s134 = sshll.u32 [#allocation16], 4
      %s135 = int_to_ptr.vmem [resolvable:$true] %s134
      %137 = dma.hbm_to_vmem [thread:$0]  %s8, 16, %s135, [#allocation15]
    $region37: #{tpu_custom_call.1} parent=1 // pred_fallthru
      _
    // Predicated region
    $region38: #{tpu_custom_call.1} parent=1 // pred_check
      _
    $region39: #{tpu_custom_call.1} parent=1 // pred_check_branch
      %139 = sbr.rel (0) target = $region41
    $region40: #{tpu_custom_call.1} parent=1 // pred_region
      %s141 = ssub.s32 16, 16
      %142 = vsyncadd [#allocation18], %s141
      %s144 = sshll.u32 [#allocation17], 4
      %s145 = int_to_ptr.vmem [resolvable:$true] %s144
      %147 = dma.hbm_to_vmem [thread:$0]  %s9, 16, %s145, [#allocation18]
    $region41: #{tpu_custom_call.1} parent=1 // pred_fallthru
      _
    // Predicated region
    $region42: #{tpu_custom_call.1} parent=1 // pred_check
      _
    $region43: #{tpu_custom_call.1} parent=1 // pred_check_branch
      %149 = sbr.rel (0) target = $region45
    $region44: #{tpu_custom_call.1} parent=1 // pred_region
      _
    $region45: #{tpu_custom_call.1} parent=1 // pred_fallthru
      _
    // Predicated region
    $region46: #{tpu_custom_call.1} parent=1 // pred_check
      _
    $region47: #{tpu_custom_call.1} parent=1 // pred_check_branch
      %151 = sbr.rel (0) target = $region49
    $region48: #{tpu_custom_call.1} parent=1 // pred_region
      %s153 = ssub.s32 4096, 4096
      %154 = vsyncadd [#allocation18], %s153
      %s155 = sshll.u32 [#allocation19], 4
      %s156 = int_to_ptr.vmem [resolvable:$true] %s155
      %161 = dma.hbm_to_vmem [thread:$0]  %s11, 4096, %s156, [#allocation18], 256, 256, 16
    $region49: #{tpu_custom_call.1} parent=1 // pred_fallthru
      _
    // Predicated region
    $region50: #{tpu_custom_call.1} parent=1 // pred_check
      _
    $region51: #{tpu_custom_call.1} parent=1 // pred_check_branch
      %163 = sbr.rel (0) target = $region53
    $region52: #{tpu_custom_call.1} parent=1 // pred_region
      %s165 = ssub.s32 64, 64
      %166 = vsyncadd [#allocation21], %s165
      %s168 = sshll.u32 [#allocation20], 4
      %s169 = int_to_ptr.vmem [resolvable:$true] %s168
      %171 = dma.hbm_to_vmem [thread:$0]  %s12, 64, %s169, [#allocation21]
    $region53: #{tpu_custom_call.1} parent=1 // pred_fallthru
      _
    // Predicated region
    $region54: #{tpu_custom_call.1} parent=1 // pred_check
      _
    $region55: #{tpu_custom_call.1} parent=1 // pred_check_branch
      %173 = sbr.rel (0) target = $region57
    $region56: #{tpu_custom_call.1} parent=1 // pred_region
      %s175 = ssub.s32 64, 64
      %176 = vsyncadd [#allocation21], %s175
      %s178 = sshll.u32 [#allocation22], 4
      %s179 = int_to_ptr.vmem [resolvable:$true] %s178
      %181 = dma.hbm_to_vmem [thread:$0]  %s13, 64, %s179, [#allocation21]
    $region57: #{tpu_custom_call.1} parent=1 // pred_fallthru
      _
    // Predicated region
    $region58: #{tpu_custom_call.1} parent=1 // pred_check
      _
    $region59: #{tpu_custom_call.1} parent=1 // pred_check_branch
      %183 = sbr.rel (0) target = $region61
    $region60: #{tpu_custom_call.1} parent=1 // pred_region
      %s185 = ssub.s32 64, 64
      %186 = vsyncadd [#allocation24], %s185
      %s188 = sshll.u32 [#allocation23], 4
      %s189 = int_to_ptr.vmem [resolvable:$true] %s188
      %191 = dma.hbm_to_vmem [thread:$0]  %s14, 64, %s189, [#allocation24]
    $region61: #{tpu_custom_call.1} parent=1 // pred_fallthru
      _
    // Predicated region
    $region62: #{tpu_custom_call.1} parent=1 // pred_check
      _
    $region63: #{tpu_custom_call.1} parent=1 // pred_check_branch
      %193 = sbr.rel (0) target = $region65
    $region64: #{tpu_custom_call.1} parent=1 // pred_region
      %s195 = ssub.s32 8192, 8192
      %196 = vsyncadd [#allocation24], %s195
      %s197 = sshll.u32 [#allocation25], 4
      %s198 = int_to_ptr.vmem [resolvable:$true] %s197
      %203 = dma.hbm_to_vmem [thread:$0]  %s15, 8192, %s198, [#allocation24], 128, 128, 8
    $region65: #{tpu_custom_call.1} parent=1 // pred_fallthru
      _
    // Predicated region
    $region66: #{tpu_custom_call.1} parent=1 // pred_check
      _
    $region67: #{tpu_custom_call.1} parent=1 // pred_check_branch
      %205 = sbr.rel (0) target = $region69
    $region68: #{tpu_custom_call.1} parent=1 // pred_region
      _
    $region69: #{tpu_custom_call.1} parent=1 // pred_fallthru
      _
    // Predicated region
    $region70: #{tpu_custom_call.1} parent=1 // pred_check
      _
    $region71: #{tpu_custom_call.1} parent=1 // pred_check_branch
      %207 = sbr.rel (0) target = $region73
    $region72: #{tpu_custom_call.1} parent=1 // pred_region
      _
    $region73: #{tpu_custom_call.1} parent=1 // pred_fallthru
      _
    // Predicated region
    $region74: #{tpu_custom_call.1} parent=1 // pred_check
      _
    $region75: #{tpu_custom_call.1} parent=1 // pred_check_branch
      %209 = sbr.rel (0) target = $region77
    $region76: #{tpu_custom_call.1} parent=1 // pred_region
      _
    $region77: #{tpu_custom_call.1} parent=1 // pred_fallthru
      _
    // Predicated region
    $region78: #{tpu_custom_call.1} parent=1 // pred_check
      _
    $region79: #{tpu_custom_call.1} parent=1 // pred_check_branch
      %211 = sbr.rel (0) target = $region81
    $region80: #{tpu_custom_call.1} parent=1 // pred_region
      %s213 = ssub.s32 8192, 8192
      %214 = vsyncadd [#allocation27], %s213
      %s215 = sshll.u32 [#allocation26], 4
      %s216 = int_to_ptr.vmem [resolvable:$true] %s215
      %221 = dma.hbm_to_vmem [thread:$0]  %s19, 8192, %s216, [#allocation27], 512, 512, 32
    $region81: #{tpu_custom_call.1} parent=1 // pred_fallthru
      _
    // Predicated region
    $region82: #{tpu_custom_call.1} parent=1 // pred_check
      _
    $region83: #{tpu_custom_call.1} parent=1 // pred_check_branch
      %223 = sbr.rel (0) target = $region85
    $region84: #{tpu_custom_call.1} parent=1 // pred_region
      _
    $region85: #{tpu_custom_call.1} parent=1 // pred_fallthru
      _
    // Predicated region
    $region86: #{tpu_custom_call.1} parent=1 // pred_check
      _
    $region87: #{tpu_custom_call.1} parent=1 // pred_check_branch
      %225 = sbr.rel (0) target = $region89
    $region88: #{tpu_custom_call.1} parent=1 // pred_region
      _
    $region89: #{tpu_custom_call.1} parent=1 // pred_fallthru
      _
    // Predicated region
    $region90: #{tpu_custom_call.1} parent=1 // pred_check
      _
    $region91: #{tpu_custom_call.1} parent=1 // pred_check_branch
      %227 = sbr.rel (0) target = $region93
    $region92: #{tpu_custom_call.1} parent=1 // pred_region
      _
    $region93: #{tpu_custom_call.1} parent=1 // pred_fallthru
      _
    // Predicated region
    $region94: #{tpu_custom_call.1} parent=1 // pred_check
      _
    $region95: #{tpu_custom_call.1} parent=1 // pred_check_branch
      %229 = sbr.rel (0) target = $region97
    $region96: #{tpu_custom_call.1} parent=1 // pred_region
      %s231 = ssub.s32 16384, 16384
      %232 = vsyncadd [#allocation27], %s231
      %s233 = sshll.u32 [#allocation28], 4
      %s234 = int_to_ptr.vmem [resolvable:$true] %s233
      %239 = dma.hbm_to_vmem [thread:$0]  %s23, 16384, %s234, [#allocation27], 128, 128, 8
    $region97: #{tpu_custom_call.1} parent=1 // pred_fallthru
      _
    // Predicated region
    $region98: #{tpu_custom_call.1} parent=1 // pred_check
      _
    $region99: #{tpu_custom_call.1} parent=1 // pred_check_branch
      %241 = sbr.rel (0) target = $region101
    $region100: #{tpu_custom_call.1} parent=1 // pred_region
      _
    $region101: #{tpu_custom_call.1} parent=1 // pred_fallthru
      _
    // Predicated region
    $region102: #{tpu_custom_call.1} parent=1 // pred_check
      _
    $region103: #{tpu_custom_call.1} parent=1 // pred_check_branch
      %243 = sbr.rel (0) target = $region105
    $region104: #{tpu_custom_call.1} parent=1 // pred_region
      %244 = dma.done [#allocation3], 512
    $region105: #{tpu_custom_call.1} parent=1 // pred_fallthru
      _
    // Predicated region
    $region106: #{tpu_custom_call.1} parent=1 // pred_check
      _
    $region107: #{tpu_custom_call.1} parent=1 // pred_check_branch
      %246 = sbr.rel (0) target = $region109
    $region108: #{tpu_custom_call.1} parent=1 // pred_region
      %247 = dma.done [#allocation6], 16384
    $region109: #{tpu_custom_call.1} parent=1 // pred_fallthru
      _
    // Predicated region
    $region110: #{tpu_custom_call.1} parent=1 // pred_check
      _
    $region111: #{tpu_custom_call.1} parent=1 // pred_check_branch
      %249 = sbr.rel (0) target = $region113
    $region112: #{tpu_custom_call.1} parent=1 // pred_region
      %250 = dma.done [#allocation6], 128
    $region113: #{tpu_custom_call.1} parent=1 // pred_fallthru
      _
    // Predicated region
    $region114: #{tpu_custom_call.1} parent=1 // pred_check
      _
    $region115: #{tpu_custom_call.1} parent=1 // pred_check_branch
      %252 = sbr.rel (0) target = $region117
    $region116: #{tpu_custom_call.1} parent=1 // pred_region
      %253 = dma.done [#allocation9], 8192
    $region117: #{tpu_custom_call.1} parent=1 // pred_fallthru
      _
    // Predicated region
    $region118: #{tpu_custom_call.1} parent=1 // pred_check
      _
    $region119: #{tpu_custom_call.1} parent=1 // pred_check_branch
      %255 = sbr.rel (0) target = $region121
    $region120: #{tpu_custom_call.1} parent=1 // pred_region
      %256 = dma.done [#allocation9], 16
    $region121: #{tpu_custom_call.1} parent=1 // pred_fallthru
      _
    // Predicated region
    $region122: #{tpu_custom_call.1} parent=1 // pred_check
      _
    $region123: #{tpu_custom_call.1} parent=1 // pred_check_branch
      %258 = sbr.rel (0) target = $region125
    $region124: #{tpu_custom_call.1} parent=1 // pred_region
      %259 = dma.done [#allocation12], 8192
    $region125: #{tpu_custom_call.1} parent=1 // pred_fallthru
      _
    // Predicated region
    $region126: #{tpu_custom_call.1} parent=1 // pred_check
      _
    $region127: #{tpu_custom_call.1} parent=1 // pred_check_branch
      %261 = sbr.rel (0) target = $region129
    $region128: #{tpu_custom_call.1} parent=1 // pred_region
      %262 = dma.done [#allocation12], 64
    $region129: #{tpu_custom_call.1} parent=1 // pred_fallthru
      _
    // Predicated region
    $region130: #{tpu_custom_call.1} parent=1 // pred_check
      _
    $region131: #{tpu_custom_call.1} parent=1 // pred_check_branch
      %264 = sbr.rel (0) target = $region133
    $region132: #{tpu_custom_call.1} parent=1 // pred_region
      %265 = dma.done [#allocation15], 4096
    $region133: #{tpu_custom_call.1} parent=1 // pred_fallthru
      _
    // Predicated region
    $region134: #{tpu_custom_call.1} parent=1 // pred_check
      _
    $region135: #{tpu_custom_call.1} parent=1 // pred_check_branch
      %267 = sbr.rel (0) target = $region137
    $region136: #{tpu_custom_call.1} parent=1 // pred_region
      %268 = dma.done [#allocation15], 16
    $region137: #{tpu_custom_call.1} parent=1 // pred_fallthru
      _
    // Predicated region
    $region138: #{tpu_custom_call.1} parent=1 // pred_check
      _
    $region139: #{tpu_custom_call.1} parent=1 // pred_check_branch
      %270 = sbr.rel (0) target = $region141
    $region140: #{tpu_custom_call.1} parent=1 // pred_region
      %271 = dma.done [#allocation18], 16
    $region141: #{tpu_custom_call.1} parent=1 // pred_fallthru
      _
    // Predicated region
    $region142: #{tpu_custom_call.1} parent=1 // pred_check
      _
    $region143: #{tpu_custom_call.1} parent=1 // pred_check_branch
      %273 = sbr.rel (0) target = $region145
    $region144: #{tpu_custom_call.1} parent=1 // pred_region
      %274 = dma.done [#allocation18], 4096
    $region145: #{tpu_custom_call.1} parent=1 // pred_fallthru
      _
    // Predicated region
    $region146: #{tpu_custom_call.1} parent=1 // pred_check
      _
    $region147: #{tpu_custom_call.1} parent=1 // pred_check_branch
      %276 = sbr.rel (0) target = $region149
    $region148: #{tpu_custom_call.1} parent=1 // pred_region
      %277 = dma.done [#allocation21], 64
    $region149: #{tpu_custom_call.1} parent=1 // pred_fallthru
      _
    // Predicated region
    $region150: #{tpu_custom_call.1} parent=1 // pred_check
      _
    $region151: #{tpu_custom_call.1} parent=1 // pred_check_branch
      %279 = sbr.rel (0) target = $region153
    $region152: #{tpu_custom_call.1} parent=1 // pred_region
      %280 = dma.done [#allocation21], 64
    $region153: #{tpu_custom_call.1} parent=1 // pred_fallthru
      _
    // Predicated region
    $region154: #{tpu_custom_call.1} parent=1 // pred_check
      _
    $region155: #{tpu_custom_call.1} parent=1 // pred_check_branch
      %282 = sbr.rel (0) target = $region157
    $region156: #{tpu_custom_call.1} parent=1 // pred_region
      %283 = dma.done [#allocation24], 64
    $region157: #{tpu_custom_call.1} parent=1 // pred_fallthru
      _
    // Predicated region
    $region158: #{tpu_custom_call.1} parent=1 // pred_check
      _
    $region159: #{tpu_custom_call.1} parent=1 // pred_check_branch
      %285 = sbr.rel (0) target = $region161
    $region160: #{tpu_custom_call.1} parent=1 // pred_region
      %286 = dma.done [#allocation24], 8192
    $region161: #{tpu_custom_call.1} parent=1 // pred_fallthru
      _
    // Predicated region
    $region162: #{tpu_custom_call.1} parent=1 // pred_check
      _
    $region163: #{tpu_custom_call.1} parent=1 // pred_check_branch
      %288 = sbr.rel (0) target = $region165
    $region164: #{tpu_custom_call.1} parent=1 // pred_region
      %289 = dma.done [#allocation27], 8192
    $region165: #{tpu_custom_call.1} parent=1 // pred_fallthru
      _
    // Predicated region
    $region166: #{tpu_custom_call.1} parent=1 // pred_check
      _
    $region167: #{tpu_custom_call.1} parent=1 // pred_check_branch
      %291 = sbr.rel (0) target = $region169
    $region168: #{tpu_custom_call.1} parent=1 // pred_region
      %292 = dma.done [#allocation27], 16384
    $region169: #{tpu_custom_call.1} parent=1 // pred_fallthru
      _
    %v294 = vld [vmem:[#allocation2] sm:$0xff]
    %v295 = vld [vmem:[#allocation2 + $0x8] sm:$0xff]
    %v296 = vld [vmem:[#allocation2 + $0x10] sm:$0xff]
    %v297 = vld [vmem:[#allocation2 + $0x18] sm:$0xff]
    %v298 = vld [vmem:[#allocation5] sm:$0xff]
    %v299 = vld [vmem:[#allocation5 + $0x8] sm:$0xff]
    %v300 = vld [vmem:[#allocation5 + $0x10] sm:$0xff]
    %v301 = vld [vmem:[#allocation5 + $0x18] sm:$0xff]
    %v302 = vld [vmem:[#allocation5 + $0x20] sm:$0xff]
    %v303 = vld [vmem:[#allocation5 + $0x28] sm:$0xff]
    %v304 = vld [vmem:[#allocation5 + $0x30] sm:$0xff]
    %v305 = vld [vmem:[#allocation5 + $0x38] sm:$0xff]
    %v306 = vld [vmem:[#allocation5 + $0x40] sm:$0xff]
    %v307 = vld [vmem:[#allocation5 + $0x48] sm:$0xff]
    %v308 = vld [vmem:[#allocation5 + $0x50] sm:$0xff]
    %v309 = vld [vmem:[#allocation5 + $0x58] sm:$0xff]
    %v310 = vld [vmem:[#allocation5 + $0x60] sm:$0xff]
    %v311 = vld [vmem:[#allocation5 + $0x68] sm:$0xff]
    %v312 = vld [vmem:[#allocation5 + $0x70] sm:$0xff]
    %v313 = vld [vmem:[#allocation5 + $0x78] sm:$0xff]
    %v314 = vld [vmem:[#allocation5 + $0x80] sm:$0xff]
    %v315 = vld [vmem:[#allocation5 + $0x88] sm:$0xff]
    %v316 = vld [vmem:[#allocation5 + $0x90] sm:$0xff]
    %v317 = vld [vmem:[#allocation5 + $0x98] sm:$0xff]
    %v318 = vld [vmem:[#allocation5 + $0xa0] sm:$0xff]
    %v319 = vld [vmem:[#allocation5 + $0xa8] sm:$0xff]
    %v320 = vld [vmem:[#allocation5 + $0xb0] sm:$0xff]
    %v321 = vld [vmem:[#allocation5 + $0xb8] sm:$0xff]
    %v322 = vld [vmem:[#allocation5 + $0xc0] sm:$0xff]
    %v323 = vld [vmem:[#allocation5 + $0xc8] sm:$0xff]
    %v324 = vld [vmem:[#allocation5 + $0xd0] sm:$0xff]
    %v325 = vld [vmem:[#allocation5 + $0xd8] sm:$0xff]
    %v326 = vld [vmem:[#allocation5 + $0xe0] sm:$0xff]
    %v327 = vld [vmem:[#allocation5 + $0xe8] sm:$0xff]
    %v328 = vld [vmem:[#allocation5 + $0xf0] sm:$0xff]
    %v329 = vld [vmem:[#allocation5 + $0xf8] sm:$0xff]
    %v330 = vld [vmem:[#allocation5 + $0x100] sm:$0xff]
    %v331 = vld [vmem:[#allocation5 + $0x108] sm:$0xff]
    %v332 = vld [vmem:[#allocation5 + $0x110] sm:$0xff]
    %v333 = vld [vmem:[#allocation5 + $0x118] sm:$0xff]
    %v334 = vld [vmem:[#allocation5 + $0x120] sm:$0xff]
    %v335 = vld [vmem:[#allocation5 + $0x128] sm:$0xff]
    %v336 = vld [vmem:[#allocation5 + $0x130] sm:$0xff]
    %v337 = vld [vmem:[#allocation5 + $0x138] sm:$0xff]
    %v338 = vld [vmem:[#allocation5 + $0x140] sm:$0xff]
    %v339 = vld [vmem:[#allocation5 + $0x148] sm:$0xff]
    %v340 = vld [vmem:[#allocation5 + $0x150] sm:$0xff]
    %v341 = vld [vmem:[#allocation5 + $0x158] sm:$0xff]
    %v342 = vld [vmem:[#allocation5 + $0x160] sm:$0xff]
    %v343 = vld [vmem:[#allocation5 + $0x168] sm:$0xff]
    %v344 = vld [vmem:[#allocation5 + $0x170] sm:$0xff]
    %v345 = vld [vmem:[#allocation5 + $0x178] sm:$0xff]
    %v346 = vld [vmem:[#allocation5 + $0x180] sm:$0xff]
    %v347 = vld [vmem:[#allocation5 + $0x188] sm:$0xff]
    %v348 = vld [vmem:[#allocation5 + $0x190] sm:$0xff]
    %v349 = vld [vmem:[#allocation5 + $0x198] sm:$0xff]
    %v350 = vld [vmem:[#allocation5 + $0x1a0] sm:$0xff]
    %v351 = vld [vmem:[#allocation5 + $0x1a8] sm:$0xff]
    %v352 = vld [vmem:[#allocation5 + $0x1b0] sm:$0xff]
    %v353 = vld [vmem:[#allocation5 + $0x1b8] sm:$0xff]
    %v354 = vld [vmem:[#allocation5 + $0x1c0] sm:$0xff]
    %v355 = vld [vmem:[#allocation5 + $0x1c8] sm:$0xff]
    %v356 = vld [vmem:[#allocation5 + $0x1d0] sm:$0xff]
    %v357 = vld [vmem:[#allocation5 + $0x1d8] sm:$0xff]
    %v358 = vld [vmem:[#allocation5 + $0x1e0] sm:$0xff]
    %v359 = vld [vmem:[#allocation5 + $0x1e8] sm:$0xff]
    %v360 = vld [vmem:[#allocation5 + $0x1f0] sm:$0xff]
    %v361 = vld [vmem:[#allocation5 + $0x1f8] sm:$0xff]
    %v362 = vld [vmem:[#allocation5 + $0x200] sm:$0xff]
    %v363 = vld [vmem:[#allocation5 + $0x208] sm:$0xff]
    %v364 = vld [vmem:[#allocation5 + $0x210] sm:$0xff]
    %v365 = vld [vmem:[#allocation5 + $0x218] sm:$0xff]
    %v366 = vld [vmem:[#allocation5 + $0x220] sm:$0xff]
    %v367 = vld [vmem:[#allocation5 + $0x228] sm:$0xff]
    %v368 = vld [vmem:[#allocation5 + $0x230] sm:$0xff]
    %v369 = vld [vmem:[#allocation5 + $0x238] sm:$0xff]
    %v370 = vld [vmem:[#allocation5 + $0x240] sm:$0xff]
    %v371 = vld [vmem:[#allocation5 + $0x248] sm:$0xff]
    %v372 = vld [vmem:[#allocation5 + $0x250] sm:$0xff]
    %v373 = vld [vmem:[#allocation5 + $0x258] sm:$0xff]
    %v374 = vld [vmem:[#allocation5 + $0x260] sm:$0xff]
    %v375 = vld [vmem:[#allocation5 + $0x268] sm:$0xff]
    %v376 = vld [vmem:[#allocation5 + $0x270] sm:$0xff]
    %v377 = vld [vmem:[#allocation5 + $0x278] sm:$0xff]
    %v378 = vld [vmem:[#allocation5 + $0x280] sm:$0xff]
    %v379 = vld [vmem:[#allocation5 + $0x288] sm:$0xff]
    %v380 = vld [vmem:[#allocation5 + $0x290] sm:$0xff]
    %v381 = vld [vmem:[#allocation5 + $0x298] sm:$0xff]
    %v382 = vld [vmem:[#allocation5 + $0x2a0] sm:$0xff]
    %v383 = vld [vmem:[#allocation5 + $0x2a8] sm:$0xff]
    %v384 = vld [vmem:[#allocation5 + $0x2b0] sm:$0xff]
    %v385 = vld [vmem:[#allocation5 + $0x2b8] sm:$0xff]
    %v386 = vld [vmem:[#allocation5 + $0x2c0] sm:$0xff]
    %v387 = vld [vmem:[#allocation5 + $0x2c8] sm:$0xff]
    %v388 = vld [vmem:[#allocation5 + $0x2d0] sm:$0xff]
    %v389 = vld [vmem:[#allocation5 + $0x2d8] sm:$0xff]
    %v390 = vld [vmem:[#allocation5 + $0x2e0] sm:$0xff]
    %v391 = vld [vmem:[#allocation5 + $0x2e8] sm:$0xff]
    %v392 = vld [vmem:[#allocation5 + $0x2f0] sm:$0xff]
    %v393 = vld [vmem:[#allocation5 + $0x2f8] sm:$0xff]
    %v394 = vld [vmem:[#allocation5 + $0x300] sm:$0xff]
    %v395 = vld [vmem:[#allocation5 + $0x308] sm:$0xff]
    %v396 = vld [vmem:[#allocation5 + $0x310] sm:$0xff]
    %v397 = vld [vmem:[#allocation5 + $0x318] sm:$0xff]
    %v398 = vld [vmem:[#allocation5 + $0x320] sm:$0xff]
    %v399 = vld [vmem:[#allocation5 + $0x328] sm:$0xff]
    %v400 = vld [vmem:[#allocation5 + $0x330] sm:$0xff]
    %v401 = vld [vmem:[#allocation5 + $0x338] sm:$0xff]
    %v402 = vld [vmem:[#allocation5 + $0x340] sm:$0xff]
    %v403 = vld [vmem:[#allocation5 + $0x348] sm:$0xff]
    %v404 = vld [vmem:[#allocation5 + $0x350] sm:$0xff]
    %v405 = vld [vmem:[#allocation5 + $0x358] sm:$0xff]
    %v406 = vld [vmem:[#allocation5 + $0x360] sm:$0xff]
    %v407 = vld [vmem:[#allocation5 + $0x368] sm:$0xff]
    %v408 = vld [vmem:[#allocation5 + $0x370] sm:$0xff]
    %v409 = vld [vmem:[#allocation5 + $0x378] sm:$0xff]
    %v410 = vld [vmem:[#allocation5 + $0x380] sm:$0xff]
    %v411 = vld [vmem:[#allocation5 + $0x388] sm:$0xff]
    %v412 = vld [vmem:[#allocation5 + $0x390] sm:$0xff]
    %v413 = vld [vmem:[#allocation5 + $0x398] sm:$0xff]
    %v414 = vld [vmem:[#allocation5 + $0x3a0] sm:$0xff]
    %v415 = vld [vmem:[#allocation5 + $0x3a8] sm:$0xff]
    %v416 = vld [vmem:[#allocation5 + $0x3b0] sm:$0xff]
    %v417 = vld [vmem:[#allocation5 + $0x3b8] sm:$0xff]
    %v418 = vld [vmem:[#allocation5 + $0x3c0] sm:$0xff]
    %v419 = vld [vmem:[#allocation5 + $0x3c8] sm:$0xff]
    %v420 = vld [vmem:[#allocation5 + $0x3d0] sm:$0xff]
    %v421 = vld [vmem:[#allocation5 + $0x3d8] sm:$0xff]
    %v422 = vld [vmem:[#allocation5 + $0x3e0] sm:$0xff]
    %v423 = vld [vmem:[#allocation5 + $0x3e8] sm:$0xff]
    %v424 = vld [vmem:[#allocation5 + $0x3f0] sm:$0xff]
    %v425 = vld [vmem:[#allocation5 + $0x3f8] sm:$0xff]
    %v426 = vpack.c.bf16 %v296, %v294
    %v427 = vpack.c.bf16 %v297, %v295
    %v428 = vld [vmem:[#allocation7] sm:$0xff]
    %v430 = vlaneseq
    %v431 = vshrl.u32 %v430, 7
    %v432 = vsub.s32 0, %v431
    %v433 = vrot.slane %v428, %v432
    %v434 = vlaneseq
    %v435 = vshrl.u32 %v434, 7
    %v436 = vsub.s32 1, %v435
    %v437 = vrot.slane %v428, %v436
    %v438 = vlaneseq
    %v439 = vshrl.u32 %v438, 7
    %v440 = vsub.s32 2, %v439
    %v441 = vrot.slane %v428, %v440
    %v442 = vlaneseq
    %v443 = vshrl.u32 %v442, 7
    %v444 = vsub.s32 3, %v443
    %v445 = vrot.slane %v428, %v444
    %v446 = vlaneseq
    %v447 = vshrl.u32 %v446, 7
    %v448 = vsub.s32 4, %v447
    %v449 = vrot.slane %v428, %v448
    %v450 = vlaneseq
    %v451 = vshrl.u32 %v450, 7
    %v452 = vsub.s32 5, %v451
    %v453 = vrot.slane %v428, %v452
    %v454 = vlaneseq
    %v455 = vshrl.u32 %v454, 7
    %v456 = vsub.s32 6, %v455
    %v457 = vrot.slane %v428, %v456
    %v458 = vlaneseq
    %v459 = vshrl.u32 %v458, 7
    %v460 = vsub.s32 7, %v459
    %v461 = vrot.slane %v428, %v460
    %v598 = vunpack.c.l.b16 %v298
    %v599 = vunpack.c.h.b16 %v298
    %v600 = vunpack.c.l.b16 %v299
    %v601 = vunpack.c.h.b16 %v299
    %v602 = vunpack.c.l.b16 %v300
    %v603 = vunpack.c.h.b16 %v300
    %v604 = vunpack.c.l.b16 %v301
    %v605 = vunpack.c.h.b16 %v301
    %v606 = vunpack.c.l.b16 %v302
    %v607 = vunpack.c.h.b16 %v302
    %v608 = vunpack.c.l.b16 %v303
    %v609 = vunpack.c.h.b16 %v303
    %v610 = vunpack.c.l.b16 %v304
    %v611 = vunpack.c.h.b16 %v304
    %v612 = vunpack.c.l.b16 %v305
    %v613 = vunpack.c.h.b16 %v305
    %v614 = vunpack.c.l.b16 %v306
    %v615 = vunpack.c.h.b16 %v306
    %v616 = vunpack.c.l.b16 %v307
    %v617 = vunpack.c.h.b16 %v307
    %v618 = vunpack.c.l.b16 %v308
    %v619 = vunpack.c.h.b16 %v308
    %v620 = vunpack.c.l.b16 %v309
    %v621 = vunpack.c.h.b16 %v309
    %v622 = vunpack.c.l.b16 %v310
    %v623 = vunpack.c.h.b16 %v310
    %v624 = vunpack.c.l.b16 %v311
    %v625 = vunpack.c.h.b16 %v311
    %v626 = vunpack.c.l.b16 %v312
    %v627 = vunpack.c.h.b16 %v312
    %v628 = vunpack.c.l.b16 %v313
    %v629 = vunpack.c.h.b16 %v313
    %v630 = vunpack.c.l.b16 %v314
    %v631 = vunpack.c.h.b16 %v314
    %v632 = vunpack.c.l.b16 %v315
    %v633 = vunpack.c.h.b16 %v315
    %v634 = vunpack.c.l.b16 %v316
    %v635 = vunpack.c.h.b16 %v316
    %v636 = vunpack.c.l.b16 %v317
    %v637 = vunpack.c.h.b16 %v317
    %v638 = vunpack.c.l.b16 %v318
    %v639 = vunpack.c.h.b16 %v318
    %v640 = vunpack.c.l.b16 %v319
    %v641 = vunpack.c.h.b16 %v319
    %v642 = vunpack.c.l.b16 %v320
    %v643 = vunpack.c.h.b16 %v320
    %v644 = vunpack.c.l.b16 %v321
    %v645 = vunpack.c.h.b16 %v321
    %v646 = vunpack.c.l.b16 %v322
    %v647 = vunpack.c.h.b16 %v322
    %v648 = vunpack.c.l.b16 %v323
    %v649 = vunpack.c.h.b16 %v323
    %v650 = vunpack.c.l.b16 %v324
    %v651 = vunpack.c.h.b16 %v324
    %v652 = vunpack.c.l.b16 %v325
    %v653 = vunpack.c.h.b16 %v325
    %v654 = vunpack.c.l.b16 %v326
    %v655 = vunpack.c.h.b16 %v326
    %v656 = vunpack.c.l.b16 %v327
    %v657 = vunpack.c.h.b16 %v327
    %v658 = vunpack.c.l.b16 %v328
    %v659 = vunpack.c.h.b16 %v328
    %v660 = vunpack.c.l.b16 %v329
    %v661 = vunpack.c.h.b16 %v329
    %v662 = vunpack.c.l.b16 %v330
    %v663 = vunpack.c.h.b16 %v330
    %v664 = vunpack.c.l.b16 %v331
    %v665 = vunpack.c.h.b16 %v331
    %v666 = vunpack.c.l.b16 %v332
    %v667 = vunpack.c.h.b16 %v332
    %v668 = vunpack.c.l.b16 %v333
    %v669 = vunpack.c.h.b16 %v333
    %v670 = vunpack.c.l.b16 %v334
    %v671 = vunpack.c.h.b16 %v334
    %v672 = vunpack.c.l.b16 %v335
    %v673 = vunpack.c.h.b16 %v335
    %v674 = vunpack.c.l.b16 %v336
    %v675 = vunpack.c.h.b16 %v336
    %v676 = vunpack.c.l.b16 %v337
    %v677 = vunpack.c.h.b16 %v337
    %v678 = vunpack.c.l.b16 %v338
    %v679 = vunpack.c.h.b16 %v338
    %v680 = vunpack.c.l.b16 %v339
    %v681 = vunpack.c.h.b16 %v339
    %v682 = vunpack.c.l.b16 %v340
    %v683 = vunpack.c.h.b16 %v340
    %v684 = vunpack.c.l.b16 %v341
    %v685 = vunpack.c.h.b16 %v341
    %v686 = vunpack.c.l.b16 %v342
    %v687 = vunpack.c.h.b16 %v342
    %v688 = vunpack.c.l.b16 %v343
    %v689 = vunpack.c.h.b16 %v343
    %v690 = vunpack.c.l.b16 %v344
    %v691 = vunpack.c.h.b16 %v344
    %v692 = vunpack.c.l.b16 %v345
    %v693 = vunpack.c.h.b16 %v345
    %v694 = vunpack.c.l.b16 %v346
    %v695 = vunpack.c.h.b16 %v346
    %v696 = vunpack.c.l.b16 %v347
    %v697 = vunpack.c.h.b16 %v347
    %v698 = vunpack.c.l.b16 %v348
    %v699 = vunpack.c.h.b16 %v348
    %v700 = vunpack.c.l.b16 %v349
    %v701 = vunpack.c.h.b16 %v349
    %v702 = vunpack.c.l.b16 %v350
    %v703 = vunpack.c.h.b16 %v350
    %v704 = vunpack.c.l.b16 %v351
    %v705 = vunpack.c.h.b16 %v351
    %v706 = vunpack.c.l.b16 %v352
    %v707 = vunpack.c.h.b16 %v352
    %v708 = vunpack.c.l.b16 %v353
    %v709 = vunpack.c.h.b16 %v353
    %v710 = vunpack.c.l.b16 %v354
    %v711 = vunpack.c.h.b16 %v354
    %v712 = vunpack.c.l.b16 %v355
    %v713 = vunpack.c.h.b16 %v355
    %v714 = vunpack.c.l.b16 %v356
    %v715 = vunpack.c.h.b16 %v356
    %v716 = vunpack.c.l.b16 %v357
    %v717 = vunpack.c.h.b16 %v357
    %v718 = vunpack.c.l.b16 %v358
    %v719 = vunpack.c.h.b16 %v358
    %v720 = vunpack.c.l.b16 %v359
    %v721 = vunpack.c.h.b16 %v359
    %v722 = vunpack.c.l.b16 %v360
    %v723 = vunpack.c.h.b16 %v360
    %v724 = vunpack.c.l.b16 %v361
    %v725 = vunpack.c.h.b16 %v361
    %v726 = vunpack.c.l.b16 %v362
    %v727 = vunpack.c.h.b16 %v362
    %v728 = vunpack.c.l.b16 %v363
    %v729 = vunpack.c.h.b16 %v363
    %v730 = vunpack.c.l.b16 %v364
    %v731 = vunpack.c.h.b16 %v364
    %v732 = vunpack.c.l.b16 %v365
    %v733 = vunpack.c.h.b16 %v365
    %v734 = vunpack.c.l.b16 %v366
    %v735 = vunpack.c.h.b16 %v366
    %v736 = vunpack.c.l.b16 %v367
    %v737 = vunpack.c.h.b16 %v367
    %v738 = vunpack.c.l.b16 %v368
    %v739 = vunpack.c.h.b16 %v368
    %v740 = vunpack.c.l.b16 %v369
    %v741 = vunpack.c.h.b16 %v369
    %v742 = vunpack.c.l.b16 %v370
    %v743 = vunpack.c.h.b16 %v370
    %v744 = vunpack.c.l.b16 %v371
    %v745 = vunpack.c.h.b16 %v371
    %v746 = vunpack.c.l.b16 %v372
    %v747 = vunpack.c.h.b16 %v372
    %v748 = vunpack.c.l.b16 %v373
    %v749 = vunpack.c.h.b16 %v373
    %v750 = vunpack.c.l.b16 %v374
    %v751 = vunpack.c.h.b16 %v374
    %v752 = vunpack.c.l.b16 %v375
    %v753 = vunpack.c.h.b16 %v375
    %v754 = vunpack.c.l.b16 %v376
    %v755 = vunpack.c.h.b16 %v376
    %v756 = vunpack.c.l.b16 %v377
    %v757 = vunpack.c.h.b16 %v377
    %v758 = vunpack.c.l.b16 %v378
    %v759 = vunpack.c.h.b16 %v378
    %v760 = vunpack.c.l.b16 %v379
    %v761 = vunpack.c.h.b16 %v379
    %v762 = vunpack.c.l.b16 %v380
    %v763 = vunpack.c.h.b16 %v380
    %v764 = vunpack.c.l.b16 %v381
    %v765 = vunpack.c.h.b16 %v381
    %v766 = vunpack.c.l.b16 %v382
    %v767 = vunpack.c.h.b16 %v382
    %v768 = vunpack.c.l.b16 %v383
    %v769 = vunpack.c.h.b16 %v383
    %v770 = vunpack.c.l.b16 %v384
    %v771 = vunpack.c.h.b16 %v384
    %v772 = vunpack.c.l.b16 %v385
    %v773 = vunpack.c.h.b16 %v385
    %v774 = vunpack.c.l.b16 %v386
    %v775 = vunpack.c.h.b16 %v386
    %v776 = vunpack.c.l.b16 %v387
    %v777 = vunpack.c.h.b16 %v387
    %v778 = vunpack.c.l.b16 %v388
    %v779 = vunpack.c.h.b16 %v388
    %v780 = vunpack.c.l.b16 %v389
    %v781 = vunpack.c.h.b16 %v389
    %v782 = vunpack.c.l.b16 %v390
    %v783 = vunpack.c.h.b16 %v390
    %v784 = vunpack.c.l.b16 %v391
    %v785 = vunpack.c.h.b16 %v391
    %v786 = vunpack.c.l.b16 %v392
    %v787 = vunpack.c.h.b16 %v392
    %v788 = vunpack.c.l.b16 %v393
    %v789 = vunpack.c.h.b16 %v393
    %v790 = vunpack.c.l.b16 %v394
    %v791 = vunpack.c.h.b16 %v394
    %v792 = vunpack.c.l.b16 %v395
    %v793 = vunpack.c.h.b16 %v395
    %v794 = vunpack.c.l.b16 %v396
    %v795 = vunpack.c.h.b16 %v396
    %v796 = vunpack.c.l.b16 %v397
    %v797 = vunpack.c.h.b16 %v397
    %v798 = vunpack.c.l.b16 %v398
    %v799 = vunpack.c.h.b16 %v398
    %v800 = vunpack.c.l.b16 %v399
    %v801 = vunpack.c.h.b16 %v399
    %v802 = vunpack.c.l.b16 %v400
    %v803 = vunpack.c.h.b16 %v400
    %v804 = vunpack.c.l.b16 %v401
    %v805 = vunpack.c.h.b16 %v401
    %v806 = vunpack.c.l.b16 %v402
    %v807 = vunpack.c.h.b16 %v402
    %v808 = vunpack.c.l.b16 %v403
    %v809 = vunpack.c.h.b16 %v403
    %v810 = vunpack.c.l.b16 %v404
    %v811 = vunpack.c.h.b16 %v404
    %v812 = vunpack.c.l.b16 %v405
    %v813 = vunpack.c.h.b16 %v405
    %v814 = vunpack.c.l.b16 %v406
    %v815 = vunpack.c.h.b16 %v406
    %v816 = vunpack.c.l.b16 %v407
    %v817 = vunpack.c.h.b16 %v407
    %v818 = vunpack.c.l.b16 %v408
    %v819 = vunpack.c.h.b16 %v408
    %v820 = vunpack.c.l.b16 %v409
    %v821 = vunpack.c.h.b16 %v409
    %v822 = vunpack.c.l.b16 %v410
    %v823 = vunpack.c.h.b16 %v410
    %v824 = vunpack.c.l.b16 %v411
    %v825 = vunpack.c.h.b16 %v411
    %v826 = vunpack.c.l.b16 %v412
    %v827 = vunpack.c.h.b16 %v412
    %v828 = vunpack.c.l.b16 %v413
    %v829 = vunpack.c.h.b16 %v413
    %v830 = vunpack.c.l.b16 %v414
    %v831 = vunpack.c.h.b16 %v414
    %v832 = vunpack.c.l.b16 %v415
    %v833 = vunpack.c.h.b16 %v415
    %v834 = vunpack.c.l.b16 %v416
    %v835 = vunpack.c.h.b16 %v416
    %v836 = vunpack.c.l.b16 %v417
    %v837 = vunpack.c.h.b16 %v417
    %v838 = vunpack.c.l.b16 %v418
    %v839 = vunpack.c.h.b16 %v418
    %v840 = vunpack.c.l.b16 %v419
    %v841 = vunpack.c.h.b16 %v419
    %v842 = vunpack.c.l.b16 %v420
    %v843 = vunpack.c.h.b16 %v420
    %v844 = vunpack.c.l.b16 %v421
    %v845 = vunpack.c.h.b16 %v421
    %v846 = vunpack.c.l.b16 %v422
    %v847 = vunpack.c.h.b16 %v422
    %v848 = vunpack.c.l.b16 %v423
    %v849 = vunpack.c.h.b16 %v423
    %v850 = vunpack.c.l.b16 %v424
    %v851 = vunpack.c.h.b16 %v424
    %v852 = vunpack.c.l.b16 %v425
    %v853 = vunpack.c.h.b16 %v425
    %v854 = vpack.c.b16 %v606, %v598
    %v855 = vpack.c.b16 %v607, %v599
    %v856 = vpack.c.b16 %v608, %v600
    %v857 = vpack.c.b16 %v609, %v601
    %v858 = vpack.c.b16 %v610, %v602
    %v859 = vpack.c.b16 %v611, %v603
    %v860 = vpack.c.b16 %v612, %v604
    %v861 = vpack.c.b16 %v613, %v605
    %v862 = vpack.c.b16 %v622, %v614
    %v863 = vpack.c.b16 %v623, %v615
    %v864 = vpack.c.b16 %v624, %v616
    %v865 = vpack.c.b16 %v625, %v617
    %v866 = vpack.c.b16 %v626, %v618
    %v867 = vpack.c.b16 %v627, %v619
    %v868 = vpack.c.b16 %v628, %v620
    %v869 = vpack.c.b16 %v629, %v621
    %v870 = vpack.c.b16 %v638, %v630
    %v871 = vpack.c.b16 %v639, %v631
    %v872 = vpack.c.b16 %v640, %v632
    %v873 = vpack.c.b16 %v641, %v633
    %v874 = vpack.c.b16 %v642, %v634
    %v875 = vpack.c.b16 %v643, %v635
    %v876 = vpack.c.b16 %v644, %v636
    %v877 = vpack.c.b16 %v645, %v637
    %v878 = vpack.c.b16 %v654, %v646
    %v879 = vpack.c.b16 %v655, %v647
    %v880 = vpack.c.b16 %v656, %v648
    %v881 = vpack.c.b16 %v657, %v649
    %v882 = vpack.c.b16 %v658, %v650
    %v883 = vpack.c.b16 %v659, %v651
    %v884 = vpack.c.b16 %v660, %v652
    %v885 = vpack.c.b16 %v661, %v653
    %v886 = vpack.c.b16 %v670, %v662
    %v887 = vpack.c.b16 %v671, %v663
    %v888 = vpack.c.b16 %v672, %v664
    %v889 = vpack.c.b16 %v673, %v665
    %v890 = vpack.c.b16 %v674, %v666
    %v891 = vpack.c.b16 %v675, %v667
    %v892 = vpack.c.b16 %v676, %v668
    %v893 = vpack.c.b16 %v677, %v669
    %v894 = vpack.c.b16 %v686, %v678
    %v895 = vpack.c.b16 %v687, %v679
    %v896 = vpack.c.b16 %v688, %v680
    %v897 = vpack.c.b16 %v689, %v681
    %v898 = vpack.c.b16 %v690, %v682
    %v899 = vpack.c.b16 %v691, %v683
    %v900 = vpack.c.b16 %v692, %v684
    %v901 = vpack.c.b16 %v693, %v685
    %v902 = vpack.c.b16 %v702, %v694
    %v903 = vpack.c.b16 %v703, %v695
    %v904 = vpack.c.b16 %v704, %v696
    %v905 = vpack.c.b16 %v705, %v697
    %v906 = vpack.c.b16 %v706, %v698
    %v907 = vpack.c.b16 %v707, %v699
    %v908 = vpack.c.b16 %v708, %v700
    %v909 = vpack.c.b16 %v709, %v701
    %v910 = vpack.c.b16 %v718, %v710
    %v911 = vpack.c.b16 %v719, %v711
    %v912 = vpack.c.b16 %v720, %v712
    %v913 = vpack.c.b16 %v721, %v713
    %v914 = vpack.c.b16 %v722, %v714
    %v915 = vpack.c.b16 %v723, %v715
    %v916 = vpack.c.b16 %v724, %v716
    %v917 = vpack.c.b16 %v725, %v717
    %v918 = vpack.c.b16 %v734, %v726
    %v919 = vpack.c.b16 %v735, %v727
    %v920 = vpack.c.b16 %v736, %v728
    %v921 = vpack.c.b16 %v737, %v729
    %v922 = vpack.c.b16 %v738, %v730
    %v923 = vpack.c.b16 %v739, %v731
    %v924 = vpack.c.b16 %v740, %v732
    %v925 = vpack.c.b16 %v741, %v733
    %v926 = vpack.c.b16 %v750, %v742
    %v927 = vpack.c.b16 %v751, %v743
    %v928 = vpack.c.b16 %v752, %v744
    %v929 = vpack.c.b16 %v753, %v745
    %v930 = vpack.c.b16 %v754, %v746
    %v931 = vpack.c.b16 %v755, %v747
    %v932 = vpack.c.b16 %v756, %v748
    %v933 = vpack.c.b16 %v757, %v749
    %v934 = vpack.c.b16 %v766, %v758
    %v935 = vpack.c.b16 %v767, %v759
    %v936 = vpack.c.b16 %v768, %v760
    %v937 = vpack.c.b16 %v769, %v761
    %v938 = vpack.c.b16 %v770, %v762
    %v939 = vpack.c.b16 %v771, %v763
    %v940 = vpack.c.b16 %v772, %v764
    %v941 = vpack.c.b16 %v773, %v765
    %v942 = vpack.c.b16 %v782, %v774
    %v943 = vpack.c.b16 %v783, %v775
    %v944 = vpack.c.b16 %v784, %v776
    %v945 = vpack.c.b16 %v785, %v777
    %v946 = vpack.c.b16 %v786, %v778
    %v947 = vpack.c.b16 %v787, %v779
    %v948 = vpack.c.b16 %v788, %v780
    %v949 = vpack.c.b16 %v789, %v781
    %v950 = vpack.c.b16 %v798, %v790
    %v951 = vpack.c.b16 %v799, %v791
    %v952 = vpack.c.b16 %v800, %v792
    %v953 = vpack.c.b16 %v801, %v793
    %v954 = vpack.c.b16 %v802, %v794
    %v955 = vpack.c.b16 %v803, %v795
    %v956 = vpack.c.b16 %v804, %v796
    %v957 = vpack.c.b16 %v805, %v797
    %v958 = vpack.c.b16 %v814, %v806
    %v959 = vpack.c.b16 %v815, %v807
    %v960 = vpack.c.b16 %v816, %v808
    %v961 = vpack.c.b16 %v817, %v809
    %v962 = vpack.c.b16 %v818, %v810
    %v963 = vpack.c.b16 %v819, %v811
    %v964 = vpack.c.b16 %v820, %v812
    %v965 = vpack.c.b16 %v821, %v813
    %v966 = vpack.c.b16 %v830, %v822
    %v967 = vpack.c.b16 %v831, %v823
    %v968 = vpack.c.b16 %v832, %v824
    %v969 = vpack.c.b16 %v833, %v825
    %v970 = vpack.c.b16 %v834, %v826
    %v971 = vpack.c.b16 %v835, %v827
    %v972 = vpack.c.b16 %v836, %v828
    %v973 = vpack.c.b16 %v837, %v829
    %v974 = vpack.c.b16 %v846, %v838
    %v975 = vpack.c.b16 %v847, %v839
    %v976 = vpack.c.b16 %v848, %v840
    %v977 = vpack.c.b16 %v849, %v841
    %v978 = vpack.c.b16 %v850, %v842
    %v979 = vpack.c.b16 %v851, %v843
    %v980 = vpack.c.b16 %v852, %v844
    %v981 = vpack.c.b16 %v853, %v845
    %1110 = vmatprep.subr.bf16.mxu0 %v911
    %1111 = vmatpush1.bf16.msra.mxu0 %v910
    %1112 = vmatprep.subr.bf16.mxu0 %v903
    %1113 = vmatpush1.bf16.msra.mxu0 %v902
    %1114 = vmatprep.subr.bf16.mxu0 %v895
    %1115 = vmatpush1.bf16.msra.mxu0 %v894
    %1116 = vmatprep.subr.bf16.mxu0 %v887
    %1117 = vmatpush1.bf16.msra.mxu0 %v886
    %1118 = vmatprep.subr.bf16.mxu0 %v879
    %1119 = vmatpush1.bf16.msra.mxu0 %v878
    %1120 = vmatprep.subr.bf16.mxu0 %v871
    %1121 = vmatpush1.bf16.msra.mxu0 %v870
    %1122 = vmatprep.subr.bf16.mxu0 %v863
    %1123 = vmatpush1.bf16.msra.mxu0 %v862
    %1124 = vmatprep.subr.bf16.mxu0 %v855
    %1125 = vmatpush1.bf16.msra.mxu0 %v854
    %1126 = vmatprep.subr.bf16.mxu0 %v975
    %1127 = vmatpush2.bf16.msra.mxu0 %v974
    %1128 = vmatprep.subr.bf16.mxu0 %v967
    %1129 = vmatpush2.bf16.msra.mxu0 %v966
    %1130 = vmatprep.subr.bf16.mxu0 %v959
    %1131 = vmatpush2.bf16.msra.mxu0 %v958
    %1132 = vmatprep.subr.bf16.mxu0 %v951
    %1133 = vmatpush2.bf16.msra.mxu0 %v950
    %1134 = vmatprep.subr.bf16.mxu0 %v943
    %1135 = vmatpush2.bf16.msra.mxu0 %v942
    %1136 = vmatprep.subr.bf16.mxu0 %v935
    %1137 = vmatpush2.bf16.msra.mxu0 %v934
    %1138 = vmatprep.subr.bf16.mxu0 %v927
    %1139 = vmatpush2.bf16.msra.mxu0 %v926
    %1140 = vmatprep.subr.bf16.mxu0 %v919
    %1141 = vmatpush2.bf16.msra.mxu0 %v918
    %1142 = vmatprep.mubr.bf16.mxu0 %v427
    %1143 = vmatmul.mubr.bf16.gmra.mxu0 %v426
    %v1144 = vpop.f32.mrf.mxu0
    %v1145 = vadd.f32 %v433, %v1144
    %v1146 = vpop.f32.mrf.mxu0
    %v1147 = vadd.f32 %v437, %v1146
    %v1148 = vpop.f32.mrf.mxu0
    %v1149 = vadd.f32 %v433, %v1148
    %v1150 = vpop.f32.mrf.mxu0
    %v1151 = vadd.f32 %v437, %v1150
    %1152 = vdwg.mxu0
    %1153 = vmatprep.subr.bf16.mxu0 %v913
    %1154 = vmatpush1.bf16.msra.mxu0 %v912
    %1155 = vmatprep.subr.bf16.mxu0 %v905
    %1156 = vmatpush1.bf16.msra.mxu0 %v904
    %1157 = vmatprep.subr.bf16.mxu0 %v897
    %1158 = vmatpush1.bf16.msra.mxu0 %v896
    %1159 = vmatprep.subr.bf16.mxu0 %v889
    %1160 = vmatpush1.bf16.msra.mxu0 %v888
    %1161 = vmatprep.subr.bf16.mxu0 %v881
    %1162 = vmatpush1.bf16.msra.mxu0 %v880
    %1163 = vmatprep.subr.bf16.mxu0 %v873
    %1164 = vmatpush1.bf16.msra.mxu0 %v872
    %1165 = vmatprep.subr.bf16.mxu0 %v865
    %1166 = vmatpush1.bf16.msra.mxu0 %v864
    %1167 = vmatprep.subr.bf16.mxu0 %v857
    %1168 = vmatpush1.bf16.msra.mxu0 %v856
    %1169 = vmatprep.subr.bf16.mxu0 %v977
    %1170 = vmatpush2.bf16.msra.mxu0 %v976
    %1171 = vmatprep.subr.bf16.mxu0 %v969
    %1172 = vmatpush2.bf16.msra.mxu0 %v968
    %1173 = vmatprep.subr.bf16.mxu0 %v961
    %1174 = vmatpush2.bf16.msra.mxu0 %v960
    %1175 = vmatprep.subr.bf16.mxu0 %v953
    %1176 = vmatpush2.bf16.msra.mxu0 %v952
    %1177 = vmatprep.subr.bf16.mxu0 %v945
    %1178 = vmatpush2.bf16.msra.mxu0 %v944
    %1179 = vmatprep.subr.bf16.mxu0 %v937
    %1180 = vmatpush2.bf16.msra.mxu0 %v936
    %1181 = vmatprep.subr.bf16.mxu0 %v929
    %1182 = vmatpush2.bf16.msra.mxu0 %v928
    %1183 = vmatprep.subr.bf16.mxu0 %v921
    %1184 = vmatpush2.bf16.msra.mxu0 %v920
    %1185 = vmatprep.mubr.bf16.mxu0 %v427
    %1186 = vmatmul.mubr.bf16.gmra.mxu0 %v426
    %v1187 = vpop.f32.mrf.mxu0
    %v1188 = vadd.f32 %v441, %v1187
    %v1189 = vpop.f32.mrf.mxu0
    %v1190 = vadd.f32 %v445, %v1189
    %v1191 = vpop.f32.mrf.mxu0
    %v1192 = vadd.f32 %v441, %v1191
    %v1193 = vpop.f32.mrf.mxu0
    %v1194 = vadd.f32 %v445, %v1193
    %1195 = vdwg.mxu0
    %1196 = vmatprep.subr.bf16.mxu0 %v915
    %1197 = vmatpush1.bf16.msra.mxu0 %v914
    %1198 = vmatprep.subr.bf16.mxu0 %v907
    %1199 = vmatpush1.bf16.msra.mxu0 %v906
    %1200 = vmatprep.subr.bf16.mxu0 %v899
    %1201 = vmatpush1.bf16.msra.mxu0 %v898
    %1202 = vmatprep.subr.bf16.mxu0 %v891
    %1203 = vmatpush1.bf16.msra.mxu0 %v890
    %1204 = vmatprep.subr.bf16.mxu0 %v883
    %1205 = vmatpush1.bf16.msra.mxu0 %v882
    %1206 = vmatprep.subr.bf16.mxu0 %v875
    %1207 = vmatpush1.bf16.msra.mxu0 %v874
    %1208 = vmatprep.subr.bf16.mxu0 %v867
    %1209 = vmatpush1.bf16.msra.mxu0 %v866
    %1210 = vmatprep.subr.bf16.mxu0 %v859
    %1211 = vmatpush1.bf16.msra.mxu0 %v858
    %1212 = vmatprep.subr.bf16.mxu0 %v979
    %1213 = vmatpush2.bf16.msra.mxu0 %v978
    %1214 = vmatprep.subr.bf16.mxu0 %v971
    %1215 = vmatpush2.bf16.msra.mxu0 %v970
    %1216 = vmatprep.subr.bf16.mxu0 %v963
    %1217 = vmatpush2.bf16.msra.mxu0 %v962
    %1218 = vmatprep.subr.bf16.mxu0 %v955
    %1219 = vmatpush2.bf16.msra.mxu0 %v954
    %1220 = vmatprep.subr.bf16.mxu0 %v947
    %1221 = vmatpush2.bf16.msra.mxu0 %v946
    %1222 = vmatprep.subr.bf16.mxu0 %v939
    %1223 = vmatpush2.bf16.msra.mxu0 %v938
    %1224 = vmatprep.subr.bf16.mxu0 %v931
    %1225 = vmatpush2.bf16.msra.mxu0 %v930
    %1226 = vmatprep.subr.bf16.mxu0 %v923
    %1227 = vmatpush2.bf16.msra.mxu0 %v922
    %1228 = vmatprep.mubr.bf16.mxu0 %v427
    %1229 = vmatmul.mubr.bf16.gmra.mxu0 %v426
    %v1230 = vpop.f32.mrf.mxu0
    %v1231 = vadd.f32 %v449, %v1230
    %v1232 = vpop.f32.mrf.mxu0
    %v1233 = vadd.f32 %v453, %v1232
    %v1234 = vpop.f32.mrf.mxu0
    %v1235 = vadd.f32 %v449, %v1234
    %v1236 = vpop.f32.mrf.mxu0
    %v1237 = vadd.f32 %v453, %v1236
    %1238 = vdwg.mxu0
    %1239 = vmatprep.subr.bf16.mxu0 %v917
    %1240 = vmatpush1.bf16.msra.mxu0 %v916
    %1241 = vmatprep.subr.bf16.mxu0 %v909
    %1242 = vmatpush1.bf16.msra.mxu0 %v908
    %1243 = vmatprep.subr.bf16.mxu0 %v901
    %1244 = vmatpush1.bf16.msra.mxu0 %v900
    %1245 = vmatprep.subr.bf16.mxu0 %v893
    %1246 = vmatpush1.bf16.msra.mxu0 %v892
    %1247 = vmatprep.subr.bf16.mxu0 %v885
    %1248 = vmatpush1.bf16.msra.mxu0 %v884
    %1249 = vmatprep.subr.bf16.mxu0 %v877
    %1250 = vmatpush1.bf16.msra.mxu0 %v876
    %1251 = vmatprep.subr.bf16.mxu0 %v869
    %1252 = vmatpush1.bf16.msra.mxu0 %v868
    %1253 = vmatprep.subr.bf16.mxu0 %v861
    %1254 = vmatpush1.bf16.msra.mxu0 %v860
    %1255 = vmatprep.subr.bf16.mxu0 %v981
    %1256 = vmatpush2.bf16.msra.mxu0 %v980
    %1257 = vmatprep.subr.bf16.mxu0 %v973
    %1258 = vmatpush2.bf16.msra.mxu0 %v972
    %1259 = vmatprep.subr.bf16.mxu0 %v965
    %1260 = vmatpush2.bf16.msra.mxu0 %v964
    %1261 = vmatprep.subr.bf16.mxu0 %v957
    %1262 = vmatpush2.bf16.msra.mxu0 %v956
    %1263 = vmatprep.subr.bf16.mxu0 %v949
    %1264 = vmatpush2.bf16.msra.mxu0 %v948
    %1265 = vmatprep.subr.bf16.mxu0 %v941
    %1266 = vmatpush2.bf16.msra.mxu0 %v940
    %1267 = vmatprep.subr.bf16.mxu0 %v933
    %1268 = vmatpush2.bf16.msra.mxu0 %v932
    %1269 = vmatprep.subr.bf16.mxu0 %v925
    %1270 = vmatpush2.bf16.msra.mxu0 %v924
    %1271 = vmatprep.mubr.bf16.mxu0 %v427
    %1272 = vmatmul.mubr.bf16.gmra.mxu0 %v426
    %v1273 = vpop.f32.mrf.mxu0
    %v1274 = vadd.f32 %v457, %v1273
    %v1275 = vpop.f32.mrf.mxu0
    %v1276 = vadd.f32 %v461, %v1275
    %v1277 = vpop.f32.mrf.mxu0
    %v1278 = vadd.f32 %v457, %v1277
    %v1279 = vpop.f32.mrf.mxu0
    %v1280 = vadd.f32 %v461, %v1279
    %1281 = vdwg.mxu0
    %v1282 = vmax.f32 %v1145, 0.0
    %v1283 = vmax.f32 %v1147, 0.0
    %v1284 = vmax.f32 %v1188, 0.0
    %v1285 = vmax.f32 %v1190, 0.0
    %v1286 = vmax.f32 %v1231, 0.0
    %v1287 = vmax.f32 %v1233, 0.0
    %v1288 = vmax.f32 %v1274, 0.0
    %v1289 = vmax.f32 %v1276, 0.0
    %v1290 = vmax.f32 %v1149, 0.0
    %v1291 = vmax.f32 %v1151, 0.0
    %v1292 = vmax.f32 %v1192, 0.0
    %v1293 = vmax.f32 %v1194, 0.0
    %v1294 = vmax.f32 %v1235, 0.0
    %v1295 = vmax.f32 %v1237, 0.0
    %v1296 = vmax.f32 %v1278, 0.0
    %v1297 = vmax.f32 %v1280, 0.0
    %v1298 = vld [vmem:[#allocation8] sm:$0xf]
    %v1299 = vld [vmem:[#allocation8 + $0x4] sm:$0xf]
    %v1300 = vld [vmem:[#allocation8 + $0x8] sm:$0xf]
    %v1301 = vld [vmem:[#allocation8 + $0xc] sm:$0xf]
    %v1302 = vld [vmem:[#allocation8 + $0x10] sm:$0xf]
    %v1303 = vld [vmem:[#allocation8 + $0x14] sm:$0xf]
    %v1304 = vld [vmem:[#allocation8 + $0x18] sm:$0xf]
    %v1305 = vld [vmem:[#allocation8 + $0x1c] sm:$0xf]
    %v1306 = vld [vmem:[#allocation8 + $0x20] sm:$0xf]
    %v1307 = vld [vmem:[#allocation8 + $0x24] sm:$0xf]
    %v1308 = vld [vmem:[#allocation8 + $0x28] sm:$0xf]
    %v1309 = vld [vmem:[#allocation8 + $0x2c] sm:$0xf]
    %v1310 = vld [vmem:[#allocation8 + $0x30] sm:$0xf]
    %v1311 = vld [vmem:[#allocation8 + $0x34] sm:$0xf]
    %v1312 = vld [vmem:[#allocation8 + $0x38] sm:$0xf]
    %v1313 = vld [vmem:[#allocation8 + $0x3c] sm:$0xf]
    %v1314 = vld [vmem:[#allocation8 + $0x40] sm:$0xf]
    %v1315 = vld [vmem:[#allocation8 + $0x44] sm:$0xf]
    %v1316 = vld [vmem:[#allocation8 + $0x48] sm:$0xf]
    %v1317 = vld [vmem:[#allocation8 + $0x4c] sm:$0xf]
    %v1318 = vld [vmem:[#allocation8 + $0x50] sm:$0xf]
    %v1319 = vld [vmem:[#allocation8 + $0x54] sm:$0xf]
    %v1320 = vld [vmem:[#allocation8 + $0x58] sm:$0xf]
    %v1321 = vld [vmem:[#allocation8 + $0x5c] sm:$0xf]
    %v1322 = vld [vmem:[#allocation8 + $0x60] sm:$0xf]
    %v1323 = vld [vmem:[#allocation8 + $0x64] sm:$0xf]
    %v1324 = vld [vmem:[#allocation8 + $0x68] sm:$0xf]
    %v1325 = vld [vmem:[#allocation8 + $0x6c] sm:$0xf]
    %v1326 = vld [vmem:[#allocation8 + $0x70] sm:$0xf]
    %v1327 = vld [vmem:[#allocation8 + $0x74] sm:$0xf]
    %v1328 = vld [vmem:[#allocation8 + $0x78] sm:$0xf]
    %v1329 = vld [vmem:[#allocation8 + $0x7c] sm:$0xf]
    %v1330 = vld [vmem:[#allocation8 + $0x80] sm:$0xf]
    %v1331 = vld [vmem:[#allocation8 + $0x84] sm:$0xf]
    %v1332 = vld [vmem:[#allocation8 + $0x88] sm:$0xf]
    %v1333 = vld [vmem:[#allocation8 + $0x8c] sm:$0xf]
    %v1334 = vld [vmem:[#allocation8 + $0x90] sm:$0xf]
    %v1335 = vld [vmem:[#allocation8 + $0x94] sm:$0xf]
    %v1336 = vld [vmem:[#allocation8 + $0x98] sm:$0xf]
    %v1337 = vld [vmem:[#allocation8 + $0x9c] sm:$0xf]
    %v1338 = vld [vmem:[#allocation8 + $0xa0] sm:$0xf]
    %v1339 = vld [vmem:[#allocation8 + $0xa4] sm:$0xf]
    %v1340 = vld [vmem:[#allocation8 + $0xa8] sm:$0xf]
    %v1341 = vld [vmem:[#allocation8 + $0xac] sm:$0xf]
    %v1342 = vld [vmem:[#allocation8 + $0xb0] sm:$0xf]
    %v1343 = vld [vmem:[#allocation8 + $0xb4] sm:$0xf]
    %v1344 = vld [vmem:[#allocation8 + $0xb8] sm:$0xf]
    %v1345 = vld [vmem:[#allocation8 + $0xbc] sm:$0xf]
    %v1346 = vld [vmem:[#allocation8 + $0xc0] sm:$0xf]
    %v1347 = vld [vmem:[#allocation8 + $0xc4] sm:$0xf]
    %v1348 = vld [vmem:[#allocation8 + $0xc8] sm:$0xf]
    %v1349 = vld [vmem:[#allocation8 + $0xcc] sm:$0xf]
    %v1350 = vld [vmem:[#allocation8 + $0xd0] sm:$0xf]
    %v1351 = vld [vmem:[#allocation8 + $0xd4] sm:$0xf]
    %v1352 = vld [vmem:[#allocation8 + $0xd8] sm:$0xf]
    %v1353 = vld [vmem:[#allocation8 + $0xdc] sm:$0xf]
    %v1354 = vld [vmem:[#allocation8 + $0xe0] sm:$0xf]
    %v1355 = vld [vmem:[#allocation8 + $0xe4] sm:$0xf]
    %v1356 = vld [vmem:[#allocation8 + $0xe8] sm:$0xf]
    %v1357 = vld [vmem:[#allocation8 + $0xec] sm:$0xf]
    %v1358 = vld [vmem:[#allocation8 + $0xf0] sm:$0xf]
    %v1359 = vld [vmem:[#allocation8 + $0xf4] sm:$0xf]
    %v1360 = vld [vmem:[#allocation8 + $0xf8] sm:$0xf]
    %v1361 = vld [vmem:[#allocation8 + $0xfc] sm:$0xf]
    %v1362 = vld [vmem:[#allocation8 + $0x100] sm:$0xf]
    %v1363 = vld [vmem:[#allocation8 + $0x104] sm:$0xf]
    %v1364 = vld [vmem:[#allocation8 + $0x108] sm:$0xf]
    %v1365 = vld [vmem:[#allocation8 + $0x10c] sm:$0xf]
    %v1366 = vld [vmem:[#allocation8 + $0x110] sm:$0xf]
    %v1367 = vld [vmem:[#allocation8 + $0x114] sm:$0xf]
    %v1368 = vld [vmem:[#allocation8 + $0x118] sm:$0xf]
    %v1369 = vld [vmem:[#allocation8 + $0x11c] sm:$0xf]
    %v1370 = vld [vmem:[#allocation8 + $0x120] sm:$0xf]
    %v1371 = vld [vmem:[#allocation8 + $0x124] sm:$0xf]
    %v1372 = vld [vmem:[#allocation8 + $0x128] sm:$0xf]
    %v1373 = vld [vmem:[#allocation8 + $0x12c] sm:$0xf]
    %v1374 = vld [vmem:[#allocation8 + $0x130] sm:$0xf]
    %v1375 = vld [vmem:[#allocation8 + $0x134] sm:$0xf]
    %v1376 = vld [vmem:[#allocation8 + $0x138] sm:$0xf]
    %v1377 = vld [vmem:[#allocation8 + $0x13c] sm:$0xf]
    %v1378 = vld [vmem:[#allocation8 + $0x140] sm:$0xf]
    %v1379 = vld [vmem:[#allocation8 + $0x144] sm:$0xf]
    %v1380 = vld [vmem:[#allocation8 + $0x148] sm:$0xf]
    %v1381 = vld [vmem:[#allocation8 + $0x14c] sm:$0xf]
    %v1382 = vld [vmem:[#allocation8 + $0x150] sm:$0xf]
    %v1383 = vld [vmem:[#allocation8 + $0x154] sm:$0xf]
    %v1384 = vld [vmem:[#allocation8 + $0x158] sm:$0xf]
    %v1385 = vld [vmem:[#allocation8 + $0x15c] sm:$0xf]
    %v1386 = vld [vmem:[#allocation8 + $0x160] sm:$0xf]
    %v1387 = vld [vmem:[#allocation8 + $0x164] sm:$0xf]
    %v1388 = vld [vmem:[#allocation8 + $0x168] sm:$0xf]
    %v1389 = vld [vmem:[#allocation8 + $0x16c] sm:$0xf]
    %v1390 = vld [vmem:[#allocation8 + $0x170] sm:$0xf]
    %v1391 = vld [vmem:[#allocation8 + $0x174] sm:$0xf]
    %v1392 = vld [vmem:[#allocation8 + $0x178] sm:$0xf]
    %v1393 = vld [vmem:[#allocation8 + $0x17c] sm:$0xf]
    %v1394 = vld [vmem:[#allocation8 + $0x180] sm:$0xf]
    %v1395 = vld [vmem:[#allocation8 + $0x184] sm:$0xf]
    %v1396 = vld [vmem:[#allocation8 + $0x188] sm:$0xf]
    %v1397 = vld [vmem:[#allocation8 + $0x18c] sm:$0xf]
    %v1398 = vld [vmem:[#allocation8 + $0x190] sm:$0xf]
    %v1399 = vld [vmem:[#allocation8 + $0x194] sm:$0xf]
    %v1400 = vld [vmem:[#allocation8 + $0x198] sm:$0xf]
    %v1401 = vld [vmem:[#allocation8 + $0x19c] sm:$0xf]
    %v1402 = vld [vmem:[#allocation8 + $0x1a0] sm:$0xf]
    %v1403 = vld [vmem:[#allocation8 + $0x1a4] sm:$0xf]
    %v1404 = vld [vmem:[#allocation8 + $0x1a8] sm:$0xf]
    %v1405 = vld [vmem:[#allocation8 + $0x1ac] sm:$0xf]
    %v1406 = vld [vmem:[#allocation8 + $0x1b0] sm:$0xf]
    %v1407 = vld [vmem:[#allocation8 + $0x1b4] sm:$0xf]
    %v1408 = vld [vmem:[#allocation8 + $0x1b8] sm:$0xf]
    %v1409 = vld [vmem:[#allocation8 + $0x1bc] sm:$0xf]
    %v1410 = vld [vmem:[#allocation8 + $0x1c0] sm:$0xf]
    %v1411 = vld [vmem:[#allocation8 + $0x1c4] sm:$0xf]
    %v1412 = vld [vmem:[#allocation8 + $0x1c8] sm:$0xf]
    %v1413 = vld [vmem:[#allocation8 + $0x1cc] sm:$0xf]
    %v1414 = vld [vmem:[#allocation8 + $0x1d0] sm:$0xf]
    %v1415 = vld [vmem:[#allocation8 + $0x1d4] sm:$0xf]
    %v1416 = vld [vmem:[#allocation8 + $0x1d8] sm:$0xf]
    %v1417 = vld [vmem:[#allocation8 + $0x1dc] sm:$0xf]
    %v1418 = vld [vmem:[#allocation8 + $0x1e0] sm:$0xf]
    %v1419 = vld [vmem:[#allocation8 + $0x1e4] sm:$0xf]
    %v1420 = vld [vmem:[#allocation8 + $0x1e8] sm:$0xf]
    %v1421 = vld [vmem:[#allocation8 + $0x1ec] sm:$0xf]
    %v1422 = vld [vmem:[#allocation8 + $0x1f0] sm:$0xf]
    %v1423 = vld [vmem:[#allocation8 + $0x1f4] sm:$0xf]
    %v1424 = vld [vmem:[#allocation8 + $0x1f8] sm:$0xf]
    %v1425 = vld [vmem:[#allocation8 + $0x1fc] sm:$0xf]
    %v1426 = vpack.c.bf16 %v1290, %v1282
    %v1427 = vpack.c.bf16 %v1291, %v1283
    %v1428 = vpack.c.bf16 %v1292, %v1284
    %v1429 = vpack.c.bf16 %v1293, %v1285
    %v1430 = vpack.c.bf16 %v1294, %v1286
    %v1431 = vpack.c.bf16 %v1295, %v1287
    %v1432 = vpack.c.bf16 %v1296, %v1288
    %v1433 = vpack.c.bf16 %v1297, %v1289
    %v1434 = vld [vmem:[#allocation10] sm:$0x1]
    %v1436 = vlaneseq
    %v1437 = vshrl.u32 %v1436, 7
    %v1438 = vsub.s32 0, %v1437
    %v1439 = vrot.slane %v1434, %v1438
    %v1569 = vunpack.c.l.b16 %v1298
    %v1570 = vunpack.c.l.b16 %v1299
    %v1571 = vunpack.c.l.b16 %v1300
    %v1572 = vunpack.c.l.b16 %v1301
    %v1573 = vunpack.c.l.b16 %v1302
    %v1574 = vunpack.c.l.b16 %v1303
    %v1575 = vunpack.c.l.b16 %v1304
    %v1576 = vunpack.c.l.b16 %v1305
    %v1577 = vunpack.c.l.b16 %v1306
    %v1578 = vunpack.c.l.b16 %v1307
    %v1579 = vunpack.c.l.b16 %v1308
    %v1580 = vunpack.c.l.b16 %v1309
    %v1581 = vunpack.c.l.b16 %v1310
    %v1582 = vunpack.c.l.b16 %v1311
    %v1583 = vunpack.c.l.b16 %v1312
    %v1584 = vunpack.c.l.b16 %v1313
    %v1585 = vunpack.c.l.b16 %v1314
    %v1586 = vunpack.c.l.b16 %v1315
    %v1587 = vunpack.c.l.b16 %v1316
    %v1588 = vunpack.c.l.b16 %v1317
    %v1589 = vunpack.c.l.b16 %v1318
    %v1590 = vunpack.c.l.b16 %v1319
    %v1591 = vunpack.c.l.b16 %v1320
    %v1592 = vunpack.c.l.b16 %v1321
    %v1593 = vunpack.c.l.b16 %v1322
    %v1594 = vunpack.c.l.b16 %v1323
    %v1595 = vunpack.c.l.b16 %v1324
    %v1596 = vunpack.c.l.b16 %v1325
    %v1597 = vunpack.c.l.b16 %v1326
    %v1598 = vunpack.c.l.b16 %v1327
    %v1599 = vunpack.c.l.b16 %v1328
    %v1600 = vunpack.c.l.b16 %v1329
    %v1601 = vunpack.c.l.b16 %v1330
    %v1602 = vunpack.c.l.b16 %v1331
    %v1603 = vunpack.c.l.b16 %v1332
    %v1604 = vunpack.c.l.b16 %v1333
    %v1605 = vunpack.c.l.b16 %v1334
    %v1606 = vunpack.c.l.b16 %v1335
    %v1607 = vunpack.c.l.b16 %v1336
    %v1608 = vunpack.c.l.b16 %v1337
    %v1609 = vunpack.c.l.b16 %v1338
    %v1610 = vunpack.c.l.b16 %v1339
    %v1611 = vunpack.c.l.b16 %v1340
    %v1612 = vunpack.c.l.b16 %v1341
    %v1613 = vunpack.c.l.b16 %v1342
    %v1614 = vunpack.c.l.b16 %v1343
    %v1615 = vunpack.c.l.b16 %v1344
    %v1616 = vunpack.c.l.b16 %v1345
    %v1617 = vunpack.c.l.b16 %v1346
    %v1618 = vunpack.c.l.b16 %v1347
    %v1619 = vunpack.c.l.b16 %v1348
    %v1620 = vunpack.c.l.b16 %v1349
    %v1621 = vunpack.c.l.b16 %v1350
    %v1622 = vunpack.c.l.b16 %v1351
    %v1623 = vunpack.c.l.b16 %v1352
    %v1624 = vunpack.c.l.b16 %v1353
    %v1625 = vunpack.c.l.b16 %v1354
    %v1626 = vunpack.c.l.b16 %v1355
    %v1627 = vunpack.c.l.b16 %v1356
    %v1628 = vunpack.c.l.b16 %v1357
    %v1629 = vunpack.c.l.b16 %v1358
    %v1630 = vunpack.c.l.b16 %v1359
    %v1631 = vunpack.c.l.b16 %v1360
    %v1632 = vunpack.c.l.b16 %v1361
    %v1633 = vunpack.c.l.b16 %v1362
    %v1634 = vunpack.c.l.b16 %v1363
    %v1635 = vunpack.c.l.b16 %v1364
    %v1636 = vunpack.c.l.b16 %v1365
    %v1637 = vunpack.c.l.b16 %v1366
    %v1638 = vunpack.c.l.b16 %v1367
    %v1639 = vunpack.c.l.b16 %v1368
    %v1640 = vunpack.c.l.b16 %v1369
    %v1641 = vunpack.c.l.b16 %v1370
    %v1642 = vunpack.c.l.b16 %v1371
    %v1643 = vunpack.c.l.b16 %v1372
    %v1644 = vunpack.c.l.b16 %v1373
    %v1645 = vunpack.c.l.b16 %v1374
    %v1646 = vunpack.c.l.b16 %v1375
    %v1647 = vunpack.c.l.b16 %v1376
    %v1648 = vunpack.c.l.b16 %v1377
    %v1649 = vunpack.c.l.b16 %v1378
    %v1650 = vunpack.c.l.b16 %v1379
    %v1651 = vunpack.c.l.b16 %v1380
    %v1652 = vunpack.c.l.b16 %v1381
    %v1653 = vunpack.c.l.b16 %v1382
    %v1654 = vunpack.c.l.b16 %v1383
    %v1655 = vunpack.c.l.b16 %v1384
    %v1656 = vunpack.c.l.b16 %v1385
    %v1657 = vunpack.c.l.b16 %v1386
    %v1658 = vunpack.c.l.b16 %v1387
    %v1659 = vunpack.c.l.b16 %v1388
    %v1660 = vunpack.c.l.b16 %v1389
    %v1661 = vunpack.c.l.b16 %v1390
    %v1662 = vunpack.c.l.b16 %v1391
    %v1663 = vunpack.c.l.b16 %v1392
    %v1664 = vunpack.c.l.b16 %v1393
    %v1665 = vunpack.c.l.b16 %v1394
    %v1666 = vunpack.c.l.b16 %v1395
    %v1667 = vunpack.c.l.b16 %v1396
    %v1668 = vunpack.c.l.b16 %v1397
    %v1669 = vunpack.c.l.b16 %v1398
    %v1670 = vunpack.c.l.b16 %v1399
    %v1671 = vunpack.c.l.b16 %v1400
    %v1672 = vunpack.c.l.b16 %v1401
    %v1673 = vunpack.c.l.b16 %v1402
    %v1674 = vunpack.c.l.b16 %v1403
    %v1675 = vunpack.c.l.b16 %v1404
    %v1676 = vunpack.c.l.b16 %v1405
    %v1677 = vunpack.c.l.b16 %v1406
    %v1678 = vunpack.c.l.b16 %v1407
    %v1679 = vunpack.c.l.b16 %v1408
    %v1680 = vunpack.c.l.b16 %v1409
    %v1681 = vunpack.c.l.b16 %v1410
    %v1682 = vunpack.c.l.b16 %v1411
    %v1683 = vunpack.c.l.b16 %v1412
    %v1684 = vunpack.c.l.b16 %v1413
    %v1685 = vunpack.c.l.b16 %v1414
    %v1686 = vunpack.c.l.b16 %v1415
    %v1687 = vunpack.c.l.b16 %v1416
    %v1688 = vunpack.c.l.b16 %v1417
    %v1689 = vunpack.c.l.b16 %v1418
    %v1690 = vunpack.c.l.b16 %v1419
    %v1691 = vunpack.c.l.b16 %v1420
    %v1692 = vunpack.c.l.b16 %v1421
    %v1693 = vunpack.c.l.b16 %v1422
    %v1694 = vunpack.c.l.b16 %v1423
    %v1695 = vunpack.c.l.b16 %v1424
    %v1696 = vunpack.c.l.b16 %v1425
    %v1697 = vpack.c.b16 %v1570, %v1569
    %v1698 = vpack.c.b16 %v1572, %v1571
    %v1699 = vpack.c.b16 %v1574, %v1573
    %v1700 = vpack.c.b16 %v1576, %v1575
    %v1701 = vpack.c.b16 %v1578, %v1577
    %v1702 = vpack.c.b16 %v1580, %v1579
    %v1703 = vpack.c.b16 %v1582, %v1581
    %v1704 = vpack.c.b16 %v1584, %v1583
    %v1705 = vpack.c.b16 %v1586, %v1585
    %v1706 = vpack.c.b16 %v1588, %v1587
    %v1707 = vpack.c.b16 %v1590, %v1589
    %v1708 = vpack.c.b16 %v1592, %v1591
    %v1709 = vpack.c.b16 %v1594, %v1593
    %v1710 = vpack.c.b16 %v1596, %v1595
    %v1711 = vpack.c.b16 %v1598, %v1597
    %v1712 = vpack.c.b16 %v1600, %v1599
    %v1713 = vpack.c.b16 %v1602, %v1601
    %v1714 = vpack.c.b16 %v1604, %v1603
    %v1715 = vpack.c.b16 %v1606, %v1605
    %v1716 = vpack.c.b16 %v1608, %v1607
    %v1717 = vpack.c.b16 %v1610, %v1609
    %v1718 = vpack.c.b16 %v1612, %v1611
    %v1719 = vpack.c.b16 %v1614, %v1613
    %v1720 = vpack.c.b16 %v1616, %v1615
    %v1721 = vpack.c.b16 %v1618, %v1617
    %v1722 = vpack.c.b16 %v1620, %v1619
    %v1723 = vpack.c.b16 %v1622, %v1621
    %v1724 = vpack.c.b16 %v1624, %v1623
    %v1725 = vpack.c.b16 %v1626, %v1625
    %v1726 = vpack.c.b16 %v1628, %v1627
    %v1727 = vpack.c.b16 %v1630, %v1629
    %v1728 = vpack.c.b16 %v1632, %v1631
    %v1729 = vpack.c.b16 %v1634, %v1633
    %v1730 = vpack.c.b16 %v1636, %v1635
    %v1731 = vpack.c.b16 %v1638, %v1637
    %v1732 = vpack.c.b16 %v1640, %v1639
    %v1733 = vpack.c.b16 %v1642, %v1641
    %v1734 = vpack.c.b16 %v1644, %v1643
    %v1735 = vpack.c.b16 %v1646, %v1645
    %v1736 = vpack.c.b16 %v1648, %v1647
    %v1737 = vpack.c.b16 %v1650, %v1649
    %v1738 = vpack.c.b16 %v1652, %v1651
    %v1739 = vpack.c.b16 %v1654, %v1653
    %v1740 = vpack.c.b16 %v1656, %v1655
    %v1741 = vpack.c.b16 %v1658, %v1657
    %v1742 = vpack.c.b16 %v1660, %v1659
    %v1743 = vpack.c.b16 %v1662, %v1661
    %v1744 = vpack.c.b16 %v1664, %v1663
    %v1745 = vpack.c.b16 %v1666, %v1665
    %v1746 = vpack.c.b16 %v1668, %v1667
    %v1747 = vpack.c.b16 %v1670, %v1669
    %v1748 = vpack.c.b16 %v1672, %v1671
    %v1749 = vpack.c.b16 %v1674, %v1673
    %v1750 = vpack.c.b16 %v1676, %v1675
    %v1751 = vpack.c.b16 %v1678, %v1677
    %v1752 = vpack.c.b16 %v1680, %v1679
    %v1753 = vpack.c.b16 %v1682, %v1681
    %v1754 = vpack.c.b16 %v1684, %v1683
    %v1755 = vpack.c.b16 %v1686, %v1685
    %v1756 = vpack.c.b16 %v1688, %v1687
    %v1757 = vpack.c.b16 %v1690, %v1689
    %v1758 = vpack.c.b16 %v1692, %v1691
    %v1759 = vpack.c.b16 %v1694, %v1693
    %v1760 = vpack.c.b16 %v1696, %v1695
    %1825 = vmatprep.subr.bf16.mxu0 0
    %1826 = vmatpush1.bf16.msra.mxu0 %v1704
    %1827 = vmatprep.subr.bf16.mxu0 0
    %1828 = vmatpush1.bf16.msra.mxu0 %v1703
    %1829 = vmatprep.subr.bf16.mxu0 0
    %1830 = vmatpush1.bf16.msra.mxu0 %v1702
    %1831 = vmatprep.subr.bf16.mxu0 0
    %1832 = vmatpush1.bf16.msra.mxu0 %v1701
    %1833 = vmatprep.subr.bf16.mxu0 0
    %1834 = vmatpush1.bf16.msra.mxu0 %v1700
    %1835 = vmatprep.subr.bf16.mxu0 0
    %1836 = vmatpush1.bf16.msra.mxu0 %v1699
    %1837 = vmatprep.subr.bf16.mxu0 0
    %1838 = vmatpush1.bf16.msra.mxu0 %v1698
    %1839 = vmatprep.subr.bf16.mxu0 0
    %1840 = vmatpush1.bf16.msra.mxu0 %v1697
    %1841 = vmatprep.subr.bf16.mxu0 0
    %1842 = vmatpush2.bf16.msra.mxu0 %v1712
    %1843 = vmatprep.subr.bf16.mxu0 0
    %1844 = vmatpush2.bf16.msra.mxu0 %v1711
    %1845 = vmatprep.subr.bf16.mxu0 0
    %1846 = vmatpush2.bf16.msra.mxu0 %v1710
    %1847 = vmatprep.subr.bf16.mxu0 0
    %1848 = vmatpush2.bf16.msra.mxu0 %v1709
    %1849 = vmatprep.subr.bf16.mxu0 0
    %1850 = vmatpush2.bf16.msra.mxu0 %v1708
    %1851 = vmatprep.subr.bf16.mxu0 0
    %1852 = vmatpush2.bf16.msra.mxu0 %v1707
    %1853 = vmatprep.subr.bf16.mxu0 0
    %1854 = vmatpush2.bf16.msra.mxu0 %v1706
    %1855 = vmatprep.subr.bf16.mxu0 0
    %1856 = vmatpush2.bf16.msra.mxu0 %v1705
    %1857 = vmatprep.mubr.bf16.mxu0 %v1427
    %1858 = vmatmul.mubr.bf16.gmra.mxu0 %v1426
    %v1859 = vpop.f32.mrf.mxu0
    %v1860 = vadd.f32 %v1439, %v1859
    %v1861 = vpop.f32.mrf.mxu0
    %v1862 = vpop.f32.mrf.mxu0
    %v1863 = vadd.f32 %v1439, %v1862
    %v1864 = vpop.f32.mrf.mxu0
    %1865 = vdwg.mxu0
    %1866 = vmatprep.subr.bf16.mxu0 0
    %1867 = vmatpush1.bf16.msra.mxu0 %v1720
    %1868 = vmatprep.subr.bf16.mxu0 0
    %1869 = vmatpush1.bf16.msra.mxu0 %v1719
    %1870 = vmatprep.subr.bf16.mxu0 0
    %1871 = vmatpush1.bf16.msra.mxu0 %v1718
    %1872 = vmatprep.subr.bf16.mxu0 0
    %1873 = vmatpush1.bf16.msra.mxu0 %v1717
    %1874 = vmatprep.subr.bf16.mxu0 0
    %1875 = vmatpush1.bf16.msra.mxu0 %v1716
    %1876 = vmatprep.subr.bf16.mxu0 0
    %1877 = vmatpush1.bf16.msra.mxu0 %v1715
    %1878 = vmatprep.subr.bf16.mxu0 0
    %1879 = vmatpush1.bf16.msra.mxu0 %v1714
    %1880 = vmatprep.subr.bf16.mxu0 0
    %1881 = vmatpush1.bf16.msra.mxu0 %v1713
    %1882 = vmatprep.subr.bf16.mxu0 0
    %1883 = vmatpush2.bf16.msra.mxu0 %v1728
    %1884 = vmatprep.subr.bf16.mxu0 0
    %1885 = vmatpush2.bf16.msra.mxu0 %v1727
    %1886 = vmatprep.subr.bf16.mxu0 0
    %1887 = vmatpush2.bf16.msra.mxu0 %v1726
    %1888 = vmatprep.subr.bf16.mxu0 0
    %1889 = vmatpush2.bf16.msra.mxu0 %v1725
    %1890 = vmatprep.subr.bf16.mxu0 0
    %1891 = vmatpush2.bf16.msra.mxu0 %v1724
    %1892 = vmatprep.subr.bf16.mxu0 0
    %1893 = vmatpush2.bf16.msra.mxu0 %v1723
    %1894 = vmatprep.subr.bf16.mxu0 0
    %1895 = vmatpush2.bf16.msra.mxu0 %v1722
    %1896 = vmatprep.subr.bf16.mxu0 0
    %1897 = vmatpush2.bf16.msra.mxu0 %v1721
    %1898 = vmatprep.mubr.bf16.mxu0 %v1429
    %1899 = vmatmul.mubr.bf16.gmra.mxu0 %v1428
    %v1900 = vpop.f32.mrf.mxu0
    %v1901 = vadd.f32 %v1860, %v1900
    %v1902 = vpop.f32.mrf.mxu0
    %v1903 = vpop.f32.mrf.mxu0
    %v1904 = vadd.f32 %v1863, %v1903
    %v1905 = vpop.f32.mrf.mxu0
    %1906 = vdwg.mxu0
    %1907 = vmatprep.subr.bf16.mxu0 0
    %1908 = vmatpush1.bf16.msra.mxu0 %v1736
    %1909 = vmatprep.subr.bf16.mxu0 0
    %1910 = vmatpush1.bf16.msra.mxu0 %v1735
    %1911 = vmatprep.subr.bf16.mxu0 0
    %1912 = vmatpush1.bf16.msra.mxu0 %v1734
    %1913 = vmatprep.subr.bf16.mxu0 0
    %1914 = vmatpush1.bf16.msra.mxu0 %v1733
    %1915 = vmatprep.subr.bf16.mxu0 0
    %1916 = vmatpush1.bf16.msra.mxu0 %v1732
    %1917 = vmatprep.subr.bf16.mxu0 0
    %1918 = vmatpush1.bf16.msra.mxu0 %v1731
    %1919 = vmatprep.subr.bf16.mxu0 0
    %1920 = vmatpush1.bf16.msra.mxu0 %v1730
    %1921 = vmatprep.subr.bf16.mxu0 0
    %1922 = vmatpush1.bf16.msra.mxu0 %v1729
    %1923 = vmatprep.subr.bf16.mxu0 0
    %1924 = vmatpush2.bf16.msra.mxu0 %v1744
    %1925 = vmatprep.subr.bf16.mxu0 0
    %1926 = vmatpush2.bf16.msra.mxu0 %v1743
    %1927 = vmatprep.subr.bf16.mxu0 0
    %1928 = vmatpush2.bf16.msra.mxu0 %v1742
    %1929 = vmatprep.subr.bf16.mxu0 0
    %1930 = vmatpush2.bf16.msra.mxu0 %v1741
    %1931 = vmatprep.subr.bf16.mxu0 0
    %1932 = vmatpush2.bf16.msra.mxu0 %v1740
    %1933 = vmatprep.subr.bf16.mxu0 0
    %1934 = vmatpush2.bf16.msra.mxu0 %v1739
    %1935 = vmatprep.subr.bf16.mxu0 0
    %1936 = vmatpush2.bf16.msra.mxu0 %v1738
    %1937 = vmatprep.subr.bf16.mxu0 0
    %1938 = vmatpush2.bf16.msra.mxu0 %v1737
    %1939 = vmatprep.mubr.bf16.mxu0 %v1431
    %1940 = vmatmul.mubr.bf16.gmra.mxu0 %v1430
    %v1941 = vpop.f32.mrf.mxu0
    %v1942 = vadd.f32 %v1901, %v1941
    %v1943 = vpop.f32.mrf.mxu0
    %v1944 = vpop.f32.mrf.mxu0
    %v1945 = vadd.f32 %v1904, %v1944
    %v1946 = vpop.f32.mrf.mxu0
    %1947 = vdwg.mxu0
    %1948 = vmatprep.subr.bf16.mxu0 0
    %1949 = vmatpush1.bf16.msra.mxu0 %v1752
    %1950 = vmatprep.subr.bf16.mxu0 0
    %1951 = vmatpush1.bf16.msra.mxu0 %v1751
    %1952 = vmatprep.subr.bf16.mxu0 0
    %1953 = vmatpush1.bf16.msra.mxu0 %v1750
    %1954 = vmatprep.subr.bf16.mxu0 0
    %1955 = vmatpush1.bf16.msra.mxu0 %v1749
    %1956 = vmatprep.subr.bf16.mxu0 0
    %1957 = vmatpush1.bf16.msra.mxu0 %v1748
    %1958 = vmatprep.subr.bf16.mxu0 0
    %1959 = vmatpush1.bf16.msra.mxu0 %v1747
    %1960 = vmatprep.subr.bf16.mxu0 0
    %1961 = vmatpush1.bf16.msra.mxu0 %v1746
    %1962 = vmatprep.subr.bf16.mxu0 0
    %1963 = vmatpush1.bf16.msra.mxu0 %v1745
    %1964 = vmatprep.subr.bf16.mxu0 0
    %1965 = vmatpush2.bf16.msra.mxu0 %v1760
    %1966 = vmatprep.subr.bf16.mxu0 0
    %1967 = vmatpush2.bf16.msra.mxu0 %v1759
    %1968 = vmatprep.subr.bf16.mxu0 0
    %1969 = vmatpush2.bf16.msra.mxu0 %v1758
    %1970 = vmatprep.subr.bf16.mxu0 0
    %1971 = vmatpush2.bf16.msra.mxu0 %v1757
    %1972 = vmatprep.subr.bf16.mxu0 0
    %1973 = vmatpush2.bf16.msra.mxu0 %v1756
    %1974 = vmatprep.subr.bf16.mxu0 0
    %1975 = vmatpush2.bf16.msra.mxu0 %v1755
    %1976 = vmatprep.subr.bf16.mxu0 0
    %1977 = vmatpush2.bf16.msra.mxu0 %v1754
    %1978 = vmatprep.subr.bf16.mxu0 0
    %1979 = vmatpush2.bf16.msra.mxu0 %v1753
    %1980 = vmatprep.mubr.bf16.mxu0 %v1433
    %1981 = vmatmul.mubr.bf16.gmra.mxu0 %v1432
    %v1982 = vpop.f32.mrf.mxu0
    %v1983 = vadd.f32 %v1942, %v1982
    %v1984 = vpop.f32.mrf.mxu0
    %v1985 = vpop.f32.mrf.mxu0
    %v1986 = vadd.f32 %v1945, %v1985
    %v1987 = vpop.f32.mrf.mxu0
    %1988 = vdwg.mxu0
    %v1989 = vmax.f32 %v1983, 0.0
    %v1990 = vmax.f32 %v1986, 0.0
    %v1991 = vld [vmem:[#allocation11] sm:$0xff]
    %v1992 = vld [vmem:[#allocation11 + $0x8] sm:$0xff]
    %v1993 = vld [vmem:[#allocation11 + $0x10] sm:$0xff]
    %v1994 = vld [vmem:[#allocation11 + $0x18] sm:$0xff]
    %v1995 = vld [vmem:[#allocation11 + $0x20] sm:$0xff]
    %v1996 = vld [vmem:[#allocation11 + $0x28] sm:$0xff]
    %v1997 = vld [vmem:[#allocation11 + $0x30] sm:$0xff]
    %v1998 = vld [vmem:[#allocation11 + $0x38] sm:$0xff]
    %v1999 = vld [vmem:[#allocation11 + $0x40] sm:$0xff]
    %v2000 = vld [vmem:[#allocation11 + $0x48] sm:$0xff]
    %v2001 = vld [vmem:[#allocation11 + $0x50] sm:$0xff]
    %v2002 = vld [vmem:[#allocation11 + $0x58] sm:$0xff]
    %v2003 = vld [vmem:[#allocation11 + $0x60] sm:$0xff]
    %v2004 = vld [vmem:[#allocation11 + $0x68] sm:$0xff]
    %v2005 = vld [vmem:[#allocation11 + $0x70] sm:$0xff]
    %v2006 = vld [vmem:[#allocation11 + $0x78] sm:$0xff]
    %v2007 = vld [vmem:[#allocation11 + $0x80] sm:$0xff]
    %v2008 = vld [vmem:[#allocation11 + $0x88] sm:$0xff]
    %v2009 = vld [vmem:[#allocation11 + $0x90] sm:$0xff]
    %v2010 = vld [vmem:[#allocation11 + $0x98] sm:$0xff]
    %v2011 = vld [vmem:[#allocation11 + $0xa0] sm:$0xff]
    %v2012 = vld [vmem:[#allocation11 + $0xa8] sm:$0xff]
    %v2013 = vld [vmem:[#allocation11 + $0xb0] sm:$0xff]
    %v2014 = vld [vmem:[#allocation11 + $0xb8] sm:$0xff]
    %v2015 = vld [vmem:[#allocation11 + $0xc0] sm:$0xff]
    %v2016 = vld [vmem:[#allocation11 + $0xc8] sm:$0xff]
    %v2017 = vld [vmem:[#allocation11 + $0xd0] sm:$0xff]
    %v2018 = vld [vmem:[#allocation11 + $0xd8] sm:$0xff]
    %v2019 = vld [vmem:[#allocation11 + $0xe0] sm:$0xff]
    %v2020 = vld [vmem:[#allocation11 + $0xe8] sm:$0xff]
    %v2021 = vld [vmem:[#allocation11 + $0xf0] sm:$0xff]
    %v2022 = vld [vmem:[#allocation11 + $0xf8] sm:$0xff]
    %v2023 = vld [vmem:[#allocation11 + $0x100] sm:$0xff]
    %v2024 = vld [vmem:[#allocation11 + $0x108] sm:$0xff]
    %v2025 = vld [vmem:[#allocation11 + $0x110] sm:$0xff]
    %v2026 = vld [vmem:[#allocation11 + $0x118] sm:$0xff]
    %v2027 = vld [vmem:[#allocation11 + $0x120] sm:$0xff]
    %v2028 = vld [vmem:[#allocation11 + $0x128] sm:$0xff]
    %v2029 = vld [vmem:[#allocation11 + $0x130] sm:$0xff]
    %v2030 = vld [vmem:[#allocation11 + $0x138] sm:$0xff]
    %v2031 = vld [vmem:[#allocation11 + $0x140] sm:$0xff]
    %v2032 = vld [vmem:[#allocation11 + $0x148] sm:$0xff]
    %v2033 = vld [vmem:[#allocation11 + $0x150] sm:$0xff]
    %v2034 = vld [vmem:[#allocation11 + $0x158] sm:$0xff]
    %v2035 = vld [vmem:[#allocation11 + $0x160] sm:$0xff]
    %v2036 = vld [vmem:[#allocation11 + $0x168] sm:$0xff]
    %v2037 = vld [vmem:[#allocation11 + $0x170] sm:$0xff]
    %v2038 = vld [vmem:[#allocation11 + $0x178] sm:$0xff]
    %v2039 = vld [vmem:[#allocation11 + $0x180] sm:$0xff]
    %v2040 = vld [vmem:[#allocation11 + $0x188] sm:$0xff]
    %v2041 = vld [vmem:[#allocation11 + $0x190] sm:$0xff]
    %v2042 = vld [vmem:[#allocation11 + $0x198] sm:$0xff]
    %v2043 = vld [vmem:[#allocation11 + $0x1a0] sm:$0xff]
    %v2044 = vld [vmem:[#allocation11 + $0x1a8] sm:$0xff]
    %v2045 = vld [vmem:[#allocation11 + $0x1b0] sm:$0xff]
    %v2046 = vld [vmem:[#allocation11 + $0x1b8] sm:$0xff]
    %v2047 = vld [vmem:[#allocation11 + $0x1c0] sm:$0xff]
    %v2048 = vld [vmem:[#allocation11 + $0x1c8] sm:$0xff]
    %v2049 = vld [vmem:[#allocation11 + $0x1d0] sm:$0xff]
    %v2050 = vld [vmem:[#allocation11 + $0x1d8] sm:$0xff]
    %v2051 = vld [vmem:[#allocation11 + $0x1e0] sm:$0xff]
    %v2052 = vld [vmem:[#allocation11 + $0x1e8] sm:$0xff]
    %v2053 = vld [vmem:[#allocation11 + $0x1f0] sm:$0xff]
    %v2054 = vld [vmem:[#allocation11 + $0x1f8] sm:$0xff]
    %v2055 = vpack.c.bf16 %v1989, %v1989
    %v2056 = vpack.c.bf16 %v1990, %v1990
    %v2057 = vld [vmem:[#allocation13] sm:$0xf]
    %v2059 = vlaneseq
    %v2060 = vshrl.u32 %v2059, 7
    %v2061 = vsub.s32 0, %v2060
    %v2062 = vrot.slane %v2057, %v2061
    %v2063 = vlaneseq
    %v2064 = vshrl.u32 %v2063, 7
    %v2065 = vsub.s32 1, %v2064
    %v2066 = vrot.slane %v2057, %v2065
    %v2067 = vlaneseq
    %v2068 = vshrl.u32 %v2067, 7
    %v2069 = vsub.s32 2, %v2068
    %v2070 = vrot.slane %v2057, %v2069
    %v2071 = vlaneseq
    %v2072 = vshrl.u32 %v2071, 7
    %v2073 = vsub.s32 3, %v2072
    %v2074 = vrot.slane %v2057, %v2073
    %v2143 = vunpack.c.l.b16 %v1991
    %v2144 = vunpack.c.h.b16 %v1991
    %v2145 = vunpack.c.l.b16 %v1992
    %v2146 = vunpack.c.h.b16 %v1992
    %v2147 = vunpack.c.l.b16 %v1993
    %v2148 = vunpack.c.h.b16 %v1993
    %v2149 = vunpack.c.l.b16 %v1994
    %v2150 = vunpack.c.h.b16 %v1994
    %v2151 = vunpack.c.l.b16 %v1995
    %v2152 = vunpack.c.h.b16 %v1995
    %v2153 = vunpack.c.l.b16 %v1996
    %v2154 = vunpack.c.h.b16 %v1996
    %v2155 = vunpack.c.l.b16 %v1997
    %v2156 = vunpack.c.h.b16 %v1997
    %v2157 = vunpack.c.l.b16 %v1998
    %v2158 = vunpack.c.h.b16 %v1998
    %v2159 = vunpack.c.l.b16 %v1999
    %v2160 = vunpack.c.h.b16 %v1999
    %v2161 = vunpack.c.l.b16 %v2000
    %v2162 = vunpack.c.h.b16 %v2000
    %v2163 = vunpack.c.l.b16 %v2001
    %v2164 = vunpack.c.h.b16 %v2001
    %v2165 = vunpack.c.l.b16 %v2002
    %v2166 = vunpack.c.h.b16 %v2002
    %v2167 = vunpack.c.l.b16 %v2003
    %v2168 = vunpack.c.h.b16 %v2003
    %v2169 = vunpack.c.l.b16 %v2004
    %v2170 = vunpack.c.h.b16 %v2004
    %v2171 = vunpack.c.l.b16 %v2005
    %v2172 = vunpack.c.h.b16 %v2005
    %v2173 = vunpack.c.l.b16 %v2006
    %v2174 = vunpack.c.h.b16 %v2006
    %v2175 = vunpack.c.l.b16 %v2007
    %v2176 = vunpack.c.h.b16 %v2007
    %v2177 = vunpack.c.l.b16 %v2008
    %v2178 = vunpack.c.h.b16 %v2008
    %v2179 = vunpack.c.l.b16 %v2009
    %v2180 = vunpack.c.h.b16 %v2009
    %v2181 = vunpack.c.l.b16 %v2010
    %v2182 = vunpack.c.h.b16 %v2010
    %v2183 = vunpack.c.l.b16 %v2011
    %v2184 = vunpack.c.h.b16 %v2011
    %v2185 = vunpack.c.l.b16 %v2012
    %v2186 = vunpack.c.h.b16 %v2012
    %v2187 = vunpack.c.l.b16 %v2013
    %v2188 = vunpack.c.h.b16 %v2013
    %v2189 = vunpack.c.l.b16 %v2014
    %v2190 = vunpack.c.h.b16 %v2014
    %v2191 = vunpack.c.l.b16 %v2015
    %v2192 = vunpack.c.h.b16 %v2015
    %v2193 = vunpack.c.l.b16 %v2016
    %v2194 = vunpack.c.h.b16 %v2016
    %v2195 = vunpack.c.l.b16 %v2017
    %v2196 = vunpack.c.h.b16 %v2017
    %v2197 = vunpack.c.l.b16 %v2018
    %v2198 = vunpack.c.h.b16 %v2018
    %v2199 = vunpack.c.l.b16 %v2019
    %v2200 = vunpack.c.h.b16 %v2019
    %v2201 = vunpack.c.l.b16 %v2020
    %v2202 = vunpack.c.h.b16 %v2020
    %v2203 = vunpack.c.l.b16 %v2021
    %v2204 = vunpack.c.h.b16 %v2021
    %v2205 = vunpack.c.l.b16 %v2022
    %v2206 = vunpack.c.h.b16 %v2022
    %v2207 = vunpack.c.l.b16 %v2023
    %v2208 = vunpack.c.h.b16 %v2023
    %v2209 = vunpack.c.l.b16 %v2024
    %v2210 = vunpack.c.h.b16 %v2024
    %v2211 = vunpack.c.l.b16 %v2025
    %v2212 = vunpack.c.h.b16 %v2025
    %v2213 = vunpack.c.l.b16 %v2026
    %v2214 = vunpack.c.h.b16 %v2026
    %v2215 = vunpack.c.l.b16 %v2027
    %v2216 = vunpack.c.h.b16 %v2027
    %v2217 = vunpack.c.l.b16 %v2028
    %v2218 = vunpack.c.h.b16 %v2028
    %v2219 = vunpack.c.l.b16 %v2029
    %v2220 = vunpack.c.h.b16 %v2029
    %v2221 = vunpack.c.l.b16 %v2030
    %v2222 = vunpack.c.h.b16 %v2030
    %v2223 = vunpack.c.l.b16 %v2031
    %v2224 = vunpack.c.h.b16 %v2031
    %v2225 = vunpack.c.l.b16 %v2032
    %v2226 = vunpack.c.h.b16 %v2032
    %v2227 = vunpack.c.l.b16 %v2033
    %v2228 = vunpack.c.h.b16 %v2033
    %v2229 = vunpack.c.l.b16 %v2034
    %v2230 = vunpack.c.h.b16 %v2034
    %v2231 = vunpack.c.l.b16 %v2035
    %v2232 = vunpack.c.h.b16 %v2035
    %v2233 = vunpack.c.l.b16 %v2036
    %v2234 = vunpack.c.h.b16 %v2036
    %v2235 = vunpack.c.l.b16 %v2037
    %v2236 = vunpack.c.h.b16 %v2037
    %v2237 = vunpack.c.l.b16 %v2038
    %v2238 = vunpack.c.h.b16 %v2038
    %v2239 = vunpack.c.l.b16 %v2039
    %v2240 = vunpack.c.h.b16 %v2039
    %v2241 = vunpack.c.l.b16 %v2040
    %v2242 = vunpack.c.h.b16 %v2040
    %v2243 = vunpack.c.l.b16 %v2041
    %v2244 = vunpack.c.h.b16 %v2041
    %v2245 = vunpack.c.l.b16 %v2042
    %v2246 = vunpack.c.h.b16 %v2042
    %v2247 = vunpack.c.l.b16 %v2043
    %v2248 = vunpack.c.h.b16 %v2043
    %v2249 = vunpack.c.l.b16 %v2044
    %v2250 = vunpack.c.h.b16 %v2044
    %v2251 = vunpack.c.l.b16 %v2045
    %v2252 = vunpack.c.h.b16 %v2045
    %v2253 = vunpack.c.l.b16 %v2046
    %v2254 = vunpack.c.h.b16 %v2046
    %v2255 = vunpack.c.l.b16 %v2047
    %v2256 = vunpack.c.h.b16 %v2047
    %v2257 = vunpack.c.l.b16 %v2048
    %v2258 = vunpack.c.h.b16 %v2048
    %v2259 = vunpack.c.l.b16 %v2049
    %v2260 = vunpack.c.h.b16 %v2049
    %v2261 = vunpack.c.l.b16 %v2050
    %v2262 = vunpack.c.h.b16 %v2050
    %v2263 = vunpack.c.l.b16 %v2051
    %v2264 = vunpack.c.h.b16 %v2051
    %v2265 = vunpack.c.l.b16 %v2052
    %v2266 = vunpack.c.h.b16 %v2052
    %v2267 = vunpack.c.l.b16 %v2053
    %v2268 = vunpack.c.h.b16 %v2053
    %v2269 = vunpack.c.l.b16 %v2054
    %v2270 = vunpack.c.h.b16 %v2054
    %v2271 = vpack.c.b16 %v2147, %v2143
    %v2272 = vpack.c.b16 %v2148, %v2144
    %v2273 = vpack.c.b16 %v2149, %v2145
    %v2274 = vpack.c.b16 %v2150, %v2146
    %v2275 = vpack.c.b16 %v2155, %v2151
    %v2276 = vpack.c.b16 %v2156, %v2152
    %v2277 = vpack.c.b16 %v2157, %v2153
    %v2278 = vpack.c.b16 %v2158, %v2154
    %v2279 = vpack.c.b16 %v2163, %v2159
    %v2280 = vpack.c.b16 %v2164, %v2160
    %v2281 = vpack.c.b16 %v2165, %v2161
    %v2282 = vpack.c.b16 %v2166, %v2162
    %v2283 = vpack.c.b16 %v2171, %v2167
    %v2284 = vpack.c.b16 %v2172, %v2168
    %v2285 = vpack.c.b16 %v2173, %v2169
    %v2286 = vpack.c.b16 %v2174, %v2170
    %v2287 = vpack.c.b16 %v2179, %v2175
    %v2288 = vpack.c.b16 %v2180, %v2176
    %v2289 = vpack.c.b16 %v2181, %v2177
    %v2290 = vpack.c.b16 %v2182, %v2178
    %v2291 = vpack.c.b16 %v2187, %v2183
    %v2292 = vpack.c.b16 %v2188, %v2184
    %v2293 = vpack.c.b16 %v2189, %v2185
    %v2294 = vpack.c.b16 %v2190, %v2186
    %v2295 = vpack.c.b16 %v2195, %v2191
    %v2296 = vpack.c.b16 %v2196, %v2192
    %v2297 = vpack.c.b16 %v2197, %v2193
    %v2298 = vpack.c.b16 %v2198, %v2194
    %v2299 = vpack.c.b16 %v2203, %v2199
    %v2300 = vpack.c.b16 %v2204, %v2200
    %v2301 = vpack.c.b16 %v2205, %v2201
    %v2302 = vpack.c.b16 %v2206, %v2202
    %v2303 = vpack.c.b16 %v2211, %v2207
    %v2304 = vpack.c.b16 %v2212, %v2208
    %v2305 = vpack.c.b16 %v2213, %v2209
    %v2306 = vpack.c.b16 %v2214, %v2210
    %v2307 = vpack.c.b16 %v2219, %v2215
    %v2308 = vpack.c.b16 %v2220, %v2216
    %v2309 = vpack.c.b16 %v2221, %v2217
    %v2310 = vpack.c.b16 %v2222, %v2218
    %v2311 = vpack.c.b16 %v2227, %v2223
    %v2312 = vpack.c.b16 %v2228, %v2224
    %v2313 = vpack.c.b16 %v2229, %v2225
    %v2314 = vpack.c.b16 %v2230, %v2226
    %v2315 = vpack.c.b16 %v2235, %v2231
    %v2316 = vpack.c.b16 %v2236, %v2232
    %v2317 = vpack.c.b16 %v2237, %v2233
    %v2318 = vpack.c.b16 %v2238, %v2234
    %v2319 = vpack.c.b16 %v2243, %v2239
    %v2320 = vpack.c.b16 %v2244, %v2240
    %v2321 = vpack.c.b16 %v2245, %v2241
    %v2322 = vpack.c.b16 %v2246, %v2242
    %v2323 = vpack.c.b16 %v2251, %v2247
    %v2324 = vpack.c.b16 %v2252, %v2248
    %v2325 = vpack.c.b16 %v2253, %v2249
    %v2326 = vpack.c.b16 %v2254, %v2250
    %v2327 = vpack.c.b16 %v2259, %v2255
    %v2328 = vpack.c.b16 %v2260, %v2256
    %v2329 = vpack.c.b16 %v2261, %v2257
    %v2330 = vpack.c.b16 %v2262, %v2258
    %v2331 = vpack.c.b16 %v2267, %v2263
    %v2332 = vpack.c.b16 %v2268, %v2264
    %v2333 = vpack.c.b16 %v2269, %v2265
    %v2334 = vpack.c.b16 %v2270, %v2266
    %2399 = vmatprep.subr.bf16.mxu0 %v2300
    %2400 = vmatpush1.bf16.msra.mxu0 %v2299
    %2401 = vmatprep.subr.bf16.mxu0 %v2296
    %2402 = vmatpush1.bf16.msra.mxu0 %v2295
    %2403 = vmatprep.subr.bf16.mxu0 %v2292
    %2404 = vmatpush1.bf16.msra.mxu0 %v2291
    %2405 = vmatprep.subr.bf16.mxu0 %v2288
    %2406 = vmatpush1.bf16.msra.mxu0 %v2287
    %2407 = vmatprep.subr.bf16.mxu0 %v2284
    %2408 = vmatpush1.bf16.msra.mxu0 %v2283
    %2409 = vmatprep.subr.bf16.mxu0 %v2280
    %2410 = vmatpush1.bf16.msra.mxu0 %v2279
    %2411 = vmatprep.subr.bf16.mxu0 %v2276
    %2412 = vmatpush1.bf16.msra.mxu0 %v2275
    %2413 = vmatprep.subr.bf16.mxu0 %v2272
    %2414 = vmatpush1.bf16.msra.mxu0 %v2271
    %2415 = vmatprep.subr.bf16.mxu0 %v2332
    %2416 = vmatpush2.bf16.msra.mxu0 %v2331
    %2417 = vmatprep.subr.bf16.mxu0 %v2328
    %2418 = vmatpush2.bf16.msra.mxu0 %v2327
    %2419 = vmatprep.subr.bf16.mxu0 %v2324
    %2420 = vmatpush2.bf16.msra.mxu0 %v2323
    %2421 = vmatprep.subr.bf16.mxu0 %v2320
    %2422 = vmatpush2.bf16.msra.mxu0 %v2319
    %2423 = vmatprep.subr.bf16.mxu0 %v2316
    %2424 = vmatpush2.bf16.msra.mxu0 %v2315
    %2425 = vmatprep.subr.bf16.mxu0 %v2312
    %2426 = vmatpush2.bf16.msra.mxu0 %v2311
    %2427 = vmatprep.subr.bf16.mxu0 %v2308
    %2428 = vmatpush2.bf16.msra.mxu0 %v2307
    %2429 = vmatprep.subr.bf16.mxu0 %v2304
    %2430 = vmatpush2.bf16.msra.mxu0 %v2303
    %2431 = vmatprep.mubr.bf16.mxu0 %v2056
    %2432 = vmatmul.mubr.bf16.gmra.mxu0 %v2055
    %v2433 = vpop.f32.mrf.mxu0
    %v2434 = vadd.f32 %v2062, %v2433
    %v2435 = vpop.f32.mrf.mxu0
    %v2436 = vadd.f32 %v2066, %v2435
    %v2437 = vpop.f32.mrf.mxu0
    %v2438 = vpop.f32.mrf.mxu0
    %2439 = vdwg.mxu0
    %2440 = vmatprep.subr.bf16.mxu0 %v2302
    %2441 = vmatpush1.bf16.msra.mxu0 %v2301
    %2442 = vmatprep.subr.bf16.mxu0 %v2298
    %2443 = vmatpush1.bf16.msra.mxu0 %v2297
    %2444 = vmatprep.subr.bf16.mxu0 %v2294
    %2445 = vmatpush1.bf16.msra.mxu0 %v2293
    %2446 = vmatprep.subr.bf16.mxu0 %v2290
    %2447 = vmatpush1.bf16.msra.mxu0 %v2289
    %2448 = vmatprep.subr.bf16.mxu0 %v2286
    %2449 = vmatpush1.bf16.msra.mxu0 %v2285
    %2450 = vmatprep.subr.bf16.mxu0 %v2282
    %2451 = vmatpush1.bf16.msra.mxu0 %v2281
    %2452 = vmatprep.subr.bf16.mxu0 %v2278
    %2453 = vmatpush1.bf16.msra.mxu0 %v2277
    %2454 = vmatprep.subr.bf16.mxu0 %v2274
    %2455 = vmatpush1.bf16.msra.mxu0 %v2273
    %2456 = vmatprep.subr.bf16.mxu0 %v2334
    %2457 = vmatpush2.bf16.msra.mxu0 %v2333
    %2458 = vmatprep.subr.bf16.mxu0 %v2330
    %2459 = vmatpush2.bf16.msra.mxu0 %v2329
    %2460 = vmatprep.subr.bf16.mxu0 %v2326
    %2461 = vmatpush2.bf16.msra.mxu0 %v2325
    %2462 = vmatprep.subr.bf16.mxu0 %v2322
    %2463 = vmatpush2.bf16.msra.mxu0 %v2321
    %2464 = vmatprep.subr.bf16.mxu0 %v2318
    %2465 = vmatpush2.bf16.msra.mxu0 %v2317
    %2466 = vmatprep.subr.bf16.mxu0 %v2314
    %2467 = vmatpush2.bf16.msra.mxu0 %v2313
    %2468 = vmatprep.subr.bf16.mxu0 %v2310
    %2469 = vmatpush2.bf16.msra.mxu0 %v2309
    %2470 = vmatprep.subr.bf16.mxu0 %v2306
    %2471 = vmatpush2.bf16.msra.mxu0 %v2305
    %2472 = vmatprep.mubr.bf16.mxu0 %v2056
    %2473 = vmatmul.mubr.bf16.gmra.mxu0 %v2055
    %v2474 = vpop.f32.mrf.mxu0
    %v2475 = vadd.f32 %v2070, %v2474
    %v2476 = vpop.f32.mrf.mxu0
    %v2477 = vadd.f32 %v2074, %v2476
    %v2478 = vpop.f32.mrf.mxu0
    %v2479 = vpop.f32.mrf.mxu0
    %2480 = vdwg.mxu0
    %v2481 = vmax.f32 %v2434, 0.0
    %v2482 = vmax.f32 %v2436, 0.0
    %v2483 = vmax.f32 %v2475, 0.0
    %v2484 = vmax.f32 %v2477, 0.0
    %v2485 = vld [vmem:[#allocation14] sm:$0xf]
    %v2486 = vld [vmem:[#allocation14 + $0x4] sm:$0xf]
    %v2487 = vld [vmem:[#allocation14 + $0x8] sm:$0xf]
    %v2488 = vld [vmem:[#allocation14 + $0xc] sm:$0xf]
    %v2489 = vld [vmem:[#allocation14 + $0x10] sm:$0xf]
    %v2490 = vld [vmem:[#allocation14 + $0x14] sm:$0xf]
    %v2491 = vld [vmem:[#allocation14 + $0x18] sm:$0xf]
    %v2492 = vld [vmem:[#allocation14 + $0x1c] sm:$0xf]
    %v2493 = vld [vmem:[#allocation14 + $0x20] sm:$0xf]
    %v2494 = vld [vmem:[#allocation14 + $0x24] sm:$0xf]
    %v2495 = vld [vmem:[#allocation14 + $0x28] sm:$0xf]
    %v2496 = vld [vmem:[#allocation14 + $0x2c] sm:$0xf]
    %v2497 = vld [vmem:[#allocation14 + $0x30] sm:$0xf]
    %v2498 = vld [vmem:[#allocation14 + $0x34] sm:$0xf]
    %v2499 = vld [vmem:[#allocation14 + $0x38] sm:$0xf]
    %v2500 = vld [vmem:[#allocation14 + $0x3c] sm:$0xf]
    %v2501 = vld [vmem:[#allocation14 + $0x40] sm:$0xf]
    %v2502 = vld [vmem:[#allocation14 + $0x44] sm:$0xf]
    %v2503 = vld [vmem:[#allocation14 + $0x48] sm:$0xf]
    %v2504 = vld [vmem:[#allocation14 + $0x4c] sm:$0xf]
    %v2505 = vld [vmem:[#allocation14 + $0x50] sm:$0xf]
    %v2506 = vld [vmem:[#allocation14 + $0x54] sm:$0xf]
    %v2507 = vld [vmem:[#allocation14 + $0x58] sm:$0xf]
    %v2508 = vld [vmem:[#allocation14 + $0x5c] sm:$0xf]
    %v2509 = vld [vmem:[#allocation14 + $0x60] sm:$0xf]
    %v2510 = vld [vmem:[#allocation14 + $0x64] sm:$0xf]
    %v2511 = vld [vmem:[#allocation14 + $0x68] sm:$0xf]
    %v2512 = vld [vmem:[#allocation14 + $0x6c] sm:$0xf]
    %v2513 = vld [vmem:[#allocation14 + $0x70] sm:$0xf]
    %v2514 = vld [vmem:[#allocation14 + $0x74] sm:$0xf]
    %v2515 = vld [vmem:[#allocation14 + $0x78] sm:$0xf]
    %v2516 = vld [vmem:[#allocation14 + $0x7c] sm:$0xf]
    %v2517 = vld [vmem:[#allocation14 + $0x80] sm:$0xf]
    %v2518 = vld [vmem:[#allocation14 + $0x84] sm:$0xf]
    %v2519 = vld [vmem:[#allocation14 + $0x88] sm:$0xf]
    %v2520 = vld [vmem:[#allocation14 + $0x8c] sm:$0xf]
    %v2521 = vld [vmem:[#allocation14 + $0x90] sm:$0xf]
    %v2522 = vld [vmem:[#allocation14 + $0x94] sm:$0xf]
    %v2523 = vld [vmem:[#allocation14 + $0x98] sm:$0xf]
    %v2524 = vld [vmem:[#allocation14 + $0x9c] sm:$0xf]
    %v2525 = vld [vmem:[#allocation14 + $0xa0] sm:$0xf]
    %v2526 = vld [vmem:[#allocation14 + $0xa4] sm:$0xf]
    %v2527 = vld [vmem:[#allocation14 + $0xa8] sm:$0xf]
    %v2528 = vld [vmem:[#allocation14 + $0xac] sm:$0xf]
    %v2529 = vld [vmem:[#allocation14 + $0xb0] sm:$0xf]
    %v2530 = vld [vmem:[#allocation14 + $0xb4] sm:$0xf]
    %v2531 = vld [vmem:[#allocation14 + $0xb8] sm:$0xf]
    %v2532 = vld [vmem:[#allocation14 + $0xbc] sm:$0xf]
    %v2533 = vld [vmem:[#allocation14 + $0xc0] sm:$0xf]
    %v2534 = vld [vmem:[#allocation14 + $0xc4] sm:$0xf]
    %v2535 = vld [vmem:[#allocation14 + $0xc8] sm:$0xf]
    %v2536 = vld [vmem:[#allocation14 + $0xcc] sm:$0xf]
    %v2537 = vld [vmem:[#allocation14 + $0xd0] sm:$0xf]
    %v2538 = vld [vmem:[#allocation14 + $0xd4] sm:$0xf]
    %v2539 = vld [vmem:[#allocation14 + $0xd8] sm:$0xf]
    %v2540 = vld [vmem:[#allocation14 + $0xdc] sm:$0xf]
    %v2541 = vld [vmem:[#allocation14 + $0xe0] sm:$0xf]
    %v2542 = vld [vmem:[#allocation14 + $0xe4] sm:$0xf]
    %v2543 = vld [vmem:[#allocation14 + $0xe8] sm:$0xf]
    %v2544 = vld [vmem:[#allocation14 + $0xec] sm:$0xf]
    %v2545 = vld [vmem:[#allocation14 + $0xf0] sm:$0xf]
    %v2546 = vld [vmem:[#allocation14 + $0xf4] sm:$0xf]
    %v2547 = vld [vmem:[#allocation14 + $0xf8] sm:$0xf]
    %v2548 = vld [vmem:[#allocation14 + $0xfc] sm:$0xf]
    %v2549 = vpack.c.bf16 %v2481, %v2481
    %v2550 = vpack.c.bf16 %v2482, %v2482
    %v2551 = vpack.c.bf16 %v2483, %v2483
    %v2552 = vpack.c.bf16 %v2484, %v2484
    %v2553 = vld [vmem:[#allocation16] sm:$0x1]
    %v2555 = vlaneseq
    %v2556 = vshrl.u32 %v2555, 7
    %v2557 = vsub.s32 0, %v2556
    %v2558 = vrot.slane %v2553, %v2557
    %v2624 = vunpack.c.l.b16 %v2485
    %v2625 = vunpack.c.l.b16 %v2486
    %v2626 = vunpack.c.l.b16 %v2487
    %v2627 = vunpack.c.l.b16 %v2488
    %v2628 = vunpack.c.l.b16 %v2489
    %v2629 = vunpack.c.l.b16 %v2490
    %v2630 = vunpack.c.l.b16 %v2491
    %v2631 = vunpack.c.l.b16 %v2492
    %v2632 = vunpack.c.l.b16 %v2493
    %v2633 = vunpack.c.l.b16 %v2494
    %v2634 = vunpack.c.l.b16 %v2495
    %v2635 = vunpack.c.l.b16 %v2496
    %v2636 = vunpack.c.l.b16 %v2497
    %v2637 = vunpack.c.l.b16 %v2498
    %v2638 = vunpack.c.l.b16 %v2499
    %v2639 = vunpack.c.l.b16 %v2500
    %v2640 = vunpack.c.l.b16 %v2501
    %v2641 = vunpack.c.l.b16 %v2502
    %v2642 = vunpack.c.l.b16 %v2503
    %v2643 = vunpack.c.l.b16 %v2504
    %v2644 = vunpack.c.l.b16 %v2505
    %v2645 = vunpack.c.l.b16 %v2506
    %v2646 = vunpack.c.l.b16 %v2507
    %v2647 = vunpack.c.l.b16 %v2508
    %v2648 = vunpack.c.l.b16 %v2509
    %v2649 = vunpack.c.l.b16 %v2510
    %v2650 = vunpack.c.l.b16 %v2511
    %v2651 = vunpack.c.l.b16 %v2512
    %v2652 = vunpack.c.l.b16 %v2513
    %v2653 = vunpack.c.l.b16 %v2514
    %v2654 = vunpack.c.l.b16 %v2515
    %v2655 = vunpack.c.l.b16 %v2516
    %v2656 = vunpack.c.l.b16 %v2517
    %v2657 = vunpack.c.l.b16 %v2518
    %v2658 = vunpack.c.l.b16 %v2519
    %v2659 = vunpack.c.l.b16 %v2520
    %v2660 = vunpack.c.l.b16 %v2521
    %v2661 = vunpack.c.l.b16 %v2522
    %v2662 = vunpack.c.l.b16 %v2523
    %v2663 = vunpack.c.l.b16 %v2524
    %v2664 = vunpack.c.l.b16 %v2525
    %v2665 = vunpack.c.l.b16 %v2526
    %v2666 = vunpack.c.l.b16 %v2527
    %v2667 = vunpack.c.l.b16 %v2528
    %v2668 = vunpack.c.l.b16 %v2529
    %v2669 = vunpack.c.l.b16 %v2530
    %v2670 = vunpack.c.l.b16 %v2531
    %v2671 = vunpack.c.l.b16 %v2532
    %v2672 = vunpack.c.l.b16 %v2533
    %v2673 = vunpack.c.l.b16 %v2534
    %v2674 = vunpack.c.l.b16 %v2535
    %v2675 = vunpack.c.l.b16 %v2536
    %v2676 = vunpack.c.l.b16 %v2537
    %v2677 = vunpack.c.l.b16 %v2538
    %v2678 = vunpack.c.l.b16 %v2539
    %v2679 = vunpack.c.l.b16 %v2540
    %v2680 = vunpack.c.l.b16 %v2541
    %v2681 = vunpack.c.l.b16 %v2542
    %v2682 = vunpack.c.l.b16 %v2543
    %v2683 = vunpack.c.l.b16 %v2544
    %v2684 = vunpack.c.l.b16 %v2545
    %v2685 = vunpack.c.l.b16 %v2546
    %v2686 = vunpack.c.l.b16 %v2547
    %v2687 = vunpack.c.l.b16 %v2548
    %v2688 = vpack.c.b16 %v2625, %v2624
    %v2689 = vpack.c.b16 %v2627, %v2626
    %v2690 = vpack.c.b16 %v2629, %v2628
    %v2691 = vpack.c.b16 %v2631, %v2630
    %v2692 = vpack.c.b16 %v2633, %v2632
    %v2693 = vpack.c.b16 %v2635, %v2634
    %v2694 = vpack.c.b16 %v2637, %v2636
    %v2695 = vpack.c.b16 %v2639, %v2638
    %v2696 = vpack.c.b16 %v2641, %v2640
    %v2697 = vpack.c.b16 %v2643, %v2642
    %v2698 = vpack.c.b16 %v2645, %v2644
    %v2699 = vpack.c.b16 %v2647, %v2646
    %v2700 = vpack.c.b16 %v2649, %v2648
    %v2701 = vpack.c.b16 %v2651, %v2650
    %v2702 = vpack.c.b16 %v2653, %v2652
    %v2703 = vpack.c.b16 %v2655, %v2654
    %v2704 = vpack.c.b16 %v2657, %v2656
    %v2705 = vpack.c.b16 %v2659, %v2658
    %v2706 = vpack.c.b16 %v2661, %v2660
    %v2707 = vpack.c.b16 %v2663, %v2662
    %v2708 = vpack.c.b16 %v2665, %v2664
    %v2709 = vpack.c.b16 %v2667, %v2666
    %v2710 = vpack.c.b16 %v2669, %v2668
    %v2711 = vpack.c.b16 %v2671, %v2670
    %v2712 = vpack.c.b16 %v2673, %v2672
    %v2713 = vpack.c.b16 %v2675, %v2674
    %v2714 = vpack.c.b16 %v2677, %v2676
    %v2715 = vpack.c.b16 %v2679, %v2678
    %v2716 = vpack.c.b16 %v2681, %v2680
    %v2717 = vpack.c.b16 %v2683, %v2682
    %v2718 = vpack.c.b16 %v2685, %v2684
    %v2719 = vpack.c.b16 %v2687, %v2686
    %2752 = vmatprep.subr.bf16.mxu0 0
    %2753 = vmatpush1.bf16.msra.mxu0 %v2695
    %2754 = vmatprep.subr.bf16.mxu0 0
    %2755 = vmatpush1.bf16.msra.mxu0 %v2694
    %2756 = vmatprep.subr.bf16.mxu0 0
    %2757 = vmatpush1.bf16.msra.mxu0 %v2693
    %2758 = vmatprep.subr.bf16.mxu0 0
    %2759 = vmatpush1.bf16.msra.mxu0 %v2692
    %2760 = vmatprep.subr.bf16.mxu0 0
    %2761 = vmatpush1.bf16.msra.mxu0 %v2691
    %2762 = vmatprep.subr.bf16.mxu0 0
    %2763 = vmatpush1.bf16.msra.mxu0 %v2690
    %2764 = vmatprep.subr.bf16.mxu0 0
    %2765 = vmatpush1.bf16.msra.mxu0 %v2689
    %2766 = vmatprep.subr.bf16.mxu0 0
    %2767 = vmatpush1.bf16.msra.mxu0 %v2688
    %2768 = vmatprep.subr.bf16.mxu0 0
    %2769 = vmatpush2.bf16.msra.mxu0 %v2703
    %2770 = vmatprep.subr.bf16.mxu0 0
    %2771 = vmatpush2.bf16.msra.mxu0 %v2702
    %2772 = vmatprep.subr.bf16.mxu0 0
    %2773 = vmatpush2.bf16.msra.mxu0 %v2701
    %2774 = vmatprep.subr.bf16.mxu0 0
    %2775 = vmatpush2.bf16.msra.mxu0 %v2700
    %2776 = vmatprep.subr.bf16.mxu0 0
    %2777 = vmatpush2.bf16.msra.mxu0 %v2699
    %2778 = vmatprep.subr.bf16.mxu0 0
    %2779 = vmatpush2.bf16.msra.mxu0 %v2698
    %2780 = vmatprep.subr.bf16.mxu0 0
    %2781 = vmatpush2.bf16.msra.mxu0 %v2697
    %2782 = vmatprep.subr.bf16.mxu0 0
    %2783 = vmatpush2.bf16.msra.mxu0 %v2696
    %2784 = vmatprep.mubr.bf16.mxu0 %v2550
    %2785 = vmatmul.mubr.bf16.gmra.mxu0 %v2549
    %v2786 = vpop.f32.mrf.mxu0
    %v2787 = vadd.f32 %v2558, %v2786
    %v2788 = vpop.f32.mrf.mxu0
    %v2789 = vpop.f32.mrf.mxu0
    %v2790 = vpop.f32.mrf.mxu0
    %2791 = vdwg.mxu0
    %2792 = vmatprep.subr.bf16.mxu0 0
    %2793 = vmatpush1.bf16.msra.mxu0 %v2711
    %2794 = vmatprep.subr.bf16.mxu0 0
    %2795 = vmatpush1.bf16.msra.mxu0 %v2710
    %2796 = vmatprep.subr.bf16.mxu0 0
    %2797 = vmatpush1.bf16.msra.mxu0 %v2709
    %2798 = vmatprep.subr.bf16.mxu0 0
    %2799 = vmatpush1.bf16.msra.mxu0 %v2708
    %2800 = vmatprep.subr.bf16.mxu0 0
    %2801 = vmatpush1.bf16.msra.mxu0 %v2707
    %2802 = vmatprep.subr.bf16.mxu0 0
    %2803 = vmatpush1.bf16.msra.mxu0 %v2706
    %2804 = vmatprep.subr.bf16.mxu0 0
    %2805 = vmatpush1.bf16.msra.mxu0 %v2705
    %2806 = vmatprep.subr.bf16.mxu0 0
    %2807 = vmatpush1.bf16.msra.mxu0 %v2704
    %2808 = vmatprep.subr.bf16.mxu0 0
    %2809 = vmatpush2.bf16.msra.mxu0 %v2719
    %2810 = vmatprep.subr.bf16.mxu0 0
    %2811 = vmatpush2.bf16.msra.mxu0 %v2718
    %2812 = vmatprep.subr.bf16.mxu0 0
    %2813 = vmatpush2.bf16.msra.mxu0 %v2717
    %2814 = vmatprep.subr.bf16.mxu0 0
    %2815 = vmatpush2.bf16.msra.mxu0 %v2716
    %2816 = vmatprep.subr.bf16.mxu0 0
    %2817 = vmatpush2.bf16.msra.mxu0 %v2715
    %2818 = vmatprep.subr.bf16.mxu0 0
    %2819 = vmatpush2.bf16.msra.mxu0 %v2714
    %2820 = vmatprep.subr.bf16.mxu0 0
    %2821 = vmatpush2.bf16.msra.mxu0 %v2713
    %2822 = vmatprep.subr.bf16.mxu0 0
    %2823 = vmatpush2.bf16.msra.mxu0 %v2712
    %2824 = vmatprep.mubr.bf16.mxu0 %v2552
    %2825 = vmatmul.mubr.bf16.gmra.mxu0 %v2551
    %v2826 = vpop.f32.mrf.mxu0
    %v2827 = vadd.f32 %v2787, %v2826
    %v2828 = vpop.f32.mrf.mxu0
    %v2829 = vpop.f32.mrf.mxu0
    %v2830 = vpop.f32.mrf.mxu0
    %2831 = vdwg.mxu0
    %v2832 = vld [vmem:[#allocation17] sm:$0x1]
    %v2833 = vld [vmem:[%s10] sm:$0x1]
    %v2834 = vrot.slane %v2827, 4
    %v2835 = vadd.f32 %v2827, %v2834
    %v2836 = vrot.slane %v2835, 2
    %v2837 = vadd.f32 %v2835, %v2836
    %v2838 = vrot.slane %v2837, 1
    %v2839 = vadd.f32 %v2837, %v2838
    %v2840 = vrcp.pop 8.0
    %v2841 = vmul.f32 %v2839, %v2840
    %v2842 = vsub.f32 %v2827, %v2841
    %v2843 = vmul.f32 %v2842, %v2842
    %v2844 = vrot.slane %v2843, 4
    %v2845 = vadd.f32 %v2843, %v2844
    %v2846 = vrot.slane %v2845, 2
    %v2847 = vadd.f32 %v2845, %v2846
    %v2848 = vrot.slane %v2847, 1
    %v2849 = vadd.f32 %v2847, %v2848
    %v2850 = vmul.f32 %v2849, %v2840
    %v2851 = vadd.f32 %v2850, 1e-05
    %v2852 = vrsqrt.pop %v2851
    %v2853 = vmul.f32 %v2842, %v2852
    %v2855 = vlaneseq
    %v2856 = vshrl.u32 %v2855, 7
    %v2857 = vsub.s32 0, %v2856
    %v2858 = vrot.slane %v2832, %v2857
    %v2860 = vmul.f32 %v2853, %v2858
    %v2862 = vlaneseq
    %v2863 = vshrl.u32 %v2862, 7
    %v2864 = vsub.s32 0, %v2863
    %v2865 = vrot.slane %v2833, %v2864
    %v2867 = vadd.f32 %v2860, %v2865
    %v2868 = vld [vmem:[#allocation19] sm:$0xff]
    %v2869 = vld [vmem:[#allocation19 + $0x8] sm:$0xff]
    %v2870 = vld [vmem:[#allocation19 + $0x10] sm:$0xff]
    %v2871 = vld [vmem:[#allocation19 + $0x18] sm:$0xff]
    %v2872 = vld [vmem:[#allocation19 + $0x20] sm:$0xff]
    %v2873 = vld [vmem:[#allocation19 + $0x28] sm:$0xff]
    %v2874 = vld [vmem:[#allocation19 + $0x30] sm:$0xff]
    %v2875 = vld [vmem:[#allocation19 + $0x38] sm:$0xff]
    %v2876 = vld [vmem:[#allocation19 + $0x40] sm:$0xff]
    %v2877 = vld [vmem:[#allocation19 + $0x48] sm:$0xff]
    %v2878 = vld [vmem:[#allocation19 + $0x50] sm:$0xff]
    %v2879 = vld [vmem:[#allocation19 + $0x58] sm:$0xff]
    %v2880 = vld [vmem:[#allocation19 + $0x60] sm:$0xff]
    %v2881 = vld [vmem:[#allocation19 + $0x68] sm:$0xff]
    %v2882 = vld [vmem:[#allocation19 + $0x70] sm:$0xff]
    %v2883 = vld [vmem:[#allocation19 + $0x78] sm:$0xff]
    %v2884 = vld [vmem:[#allocation19 + $0x80] sm:$0xff]
    %v2885 = vld [vmem:[#allocation19 + $0x88] sm:$0xff]
    %v2886 = vld [vmem:[#allocation19 + $0x90] sm:$0xff]
    %v2887 = vld [vmem:[#allocation19 + $0x98] sm:$0xff]
    %v2888 = vld [vmem:[#allocation19 + $0xa0] sm:$0xff]
    %v2889 = vld [vmem:[#allocation19 + $0xa8] sm:$0xff]
    %v2890 = vld [vmem:[#allocation19 + $0xb0] sm:$0xff]
    %v2891 = vld [vmem:[#allocation19 + $0xb8] sm:$0xff]
    %v2892 = vld [vmem:[#allocation19 + $0xc0] sm:$0xff]
    %v2893 = vld [vmem:[#allocation19 + $0xc8] sm:$0xff]
    %v2894 = vld [vmem:[#allocation19 + $0xd0] sm:$0xff]
    %v2895 = vld [vmem:[#allocation19 + $0xd8] sm:$0xff]
    %v2896 = vld [vmem:[#allocation19 + $0xe0] sm:$0xff]
    %v2897 = vld [vmem:[#allocation19 + $0xe8] sm:$0xff]
    %v2898 = vld [vmem:[#allocation19 + $0xf0] sm:$0xff]
    %v2899 = vld [vmem:[#allocation19 + $0xf8] sm:$0xff]
    %v2900 = vpack.c.bf16 %v2867, %v2867
    %v2901 = vld [vmem:[#allocation20] sm:$0xf]
    %v2903 = vlaneseq
    %v2904 = vshrl.u32 %v2903, 7
    %v2905 = vsub.s32 0, %v2904
    %v2906 = vrot.slane %v2901, %v2905
    %v2907 = vlaneseq
    %v2908 = vshrl.u32 %v2907, 7
    %v2909 = vsub.s32 1, %v2908
    %v2910 = vrot.slane %v2901, %v2909
    %v2911 = vlaneseq
    %v2912 = vshrl.u32 %v2911, 7
    %v2913 = vsub.s32 2, %v2912
    %v2914 = vrot.slane %v2901, %v2913
    %v2915 = vlaneseq
    %v2916 = vshrl.u32 %v2915, 7
    %v2917 = vsub.s32 3, %v2916
    %v2918 = vrot.slane %v2901, %v2917
    %v2955 = vunpack.c.l.b16 %v2868
    %v2956 = vunpack.c.h.b16 %v2868
    %v2957 = vunpack.c.l.b16 %v2869
    %v2958 = vunpack.c.h.b16 %v2869
    %v2959 = vunpack.c.l.b16 %v2870
    %v2960 = vunpack.c.h.b16 %v2870
    %v2961 = vunpack.c.l.b16 %v2871
    %v2962 = vunpack.c.h.b16 %v2871
    %v2963 = vunpack.c.l.b16 %v2872
    %v2964 = vunpack.c.h.b16 %v2872
    %v2965 = vunpack.c.l.b16 %v2873
    %v2966 = vunpack.c.h.b16 %v2873
    %v2967 = vunpack.c.l.b16 %v2874
    %v2968 = vunpack.c.h.b16 %v2874
    %v2969 = vunpack.c.l.b16 %v2875
    %v2970 = vunpack.c.h.b16 %v2875
    %v2971 = vunpack.c.l.b16 %v2876
    %v2972 = vunpack.c.h.b16 %v2876
    %v2973 = vunpack.c.l.b16 %v2877
    %v2974 = vunpack.c.h.b16 %v2877
    %v2975 = vunpack.c.l.b16 %v2878
    %v2976 = vunpack.c.h.b16 %v2878
    %v2977 = vunpack.c.l.b16 %v2879
    %v2978 = vunpack.c.h.b16 %v2879
    %v2979 = vunpack.c.l.b16 %v2880
    %v2980 = vunpack.c.h.b16 %v2880
    %v2981 = vunpack.c.l.b16 %v2881
    %v2982 = vunpack.c.h.b16 %v2881
    %v2983 = vunpack.c.l.b16 %v2882
    %v2984 = vunpack.c.h.b16 %v2882
    %v2985 = vunpack.c.l.b16 %v2883
    %v2986 = vunpack.c.h.b16 %v2883
    %v2987 = vunpack.c.l.b16 %v2884
    %v2988 = vunpack.c.h.b16 %v2884
    %v2989 = vunpack.c.l.b16 %v2885
    %v2990 = vunpack.c.h.b16 %v2885
    %v2991 = vunpack.c.l.b16 %v2886
    %v2992 = vunpack.c.h.b16 %v2886
    %v2993 = vunpack.c.l.b16 %v2887
    %v2994 = vunpack.c.h.b16 %v2887
    %v2995 = vunpack.c.l.b16 %v2888
    %v2996 = vunpack.c.h.b16 %v2888
    %v2997 = vunpack.c.l.b16 %v2889
    %v2998 = vunpack.c.h.b16 %v2889
    %v2999 = vunpack.c.l.b16 %v2890
    %v3000 = vunpack.c.h.b16 %v2890
    %v3001 = vunpack.c.l.b16 %v2891
    %v3002 = vunpack.c.h.b16 %v2891
    %v3003 = vunpack.c.l.b16 %v2892
    %v3004 = vunpack.c.h.b16 %v2892
    %v3005 = vunpack.c.l.b16 %v2893
    %v3006 = vunpack.c.h.b16 %v2893
    %v3007 = vunpack.c.l.b16 %v2894
    %v3008 = vunpack.c.h.b16 %v2894
    %v3009 = vunpack.c.l.b16 %v2895
    %v3010 = vunpack.c.h.b16 %v2895
    %v3011 = vunpack.c.l.b16 %v2896
    %v3012 = vunpack.c.h.b16 %v2896
    %v3013 = vunpack.c.l.b16 %v2897
    %v3014 = vunpack.c.h.b16 %v2897
    %v3015 = vunpack.c.l.b16 %v2898
    %v3016 = vunpack.c.h.b16 %v2898
    %v3017 = vunpack.c.l.b16 %v2899
    %v3018 = vunpack.c.h.b16 %v2899
    %v3019 = vpack.c.b16 %v2959, %v2955
    %v3020 = vpack.c.b16 %v2960, %v2956
    %v3021 = vpack.c.b16 %v2961, %v2957
    %v3022 = vpack.c.b16 %v2962, %v2958
    %v3023 = vpack.c.b16 %v2967, %v2963
    %v3024 = vpack.c.b16 %v2968, %v2964
    %v3025 = vpack.c.b16 %v2969, %v2965
    %v3026 = vpack.c.b16 %v2970, %v2966
    %v3027 = vpack.c.b16 %v2975, %v2971
    %v3028 = vpack.c.b16 %v2976, %v2972
    %v3029 = vpack.c.b16 %v2977, %v2973
    %v3030 = vpack.c.b16 %v2978, %v2974
    %v3031 = vpack.c.b16 %v2983, %v2979
    %v3032 = vpack.c.b16 %v2984, %v2980
    %v3033 = vpack.c.b16 %v2985, %v2981
    %v3034 = vpack.c.b16 %v2986, %v2982
    %v3035 = vpack.c.b16 %v2991, %v2987
    %v3036 = vpack.c.b16 %v2992, %v2988
    %v3037 = vpack.c.b16 %v2993, %v2989
    %v3038 = vpack.c.b16 %v2994, %v2990
    %v3039 = vpack.c.b16 %v2999, %v2995
    %v3040 = vpack.c.b16 %v3000, %v2996
    %v3041 = vpack.c.b16 %v3001, %v2997
    %v3042 = vpack.c.b16 %v3002, %v2998
    %v3043 = vpack.c.b16 %v3007, %v3003
    %v3044 = vpack.c.b16 %v3008, %v3004
    %v3045 = vpack.c.b16 %v3009, %v3005
    %v3046 = vpack.c.b16 %v3010, %v3006
    %v3047 = vpack.c.b16 %v3015, %v3011
    %v3048 = vpack.c.b16 %v3016, %v3012
    %v3049 = vpack.c.b16 %v3017, %v3013
    %v3050 = vpack.c.b16 %v3018, %v3014
    %3083 = vmatprep.subr.bf16.mxu0 %v3048
    %3084 = vmatpush1.bf16.msra.mxu0 %v3047
    %3085 = vmatprep.subr.bf16.mxu0 %v3044
    %3086 = vmatpush1.bf16.msra.mxu0 %v3043
    %3087 = vmatprep.subr.bf16.mxu0 %v3040
    %3088 = vmatpush1.bf16.msra.mxu0 %v3039
    %3089 = vmatprep.subr.bf16.mxu0 %v3036
    %3090 = vmatpush1.bf16.msra.mxu0 %v3035
    %3091 = vmatprep.subr.bf16.mxu0 %v3032
    %3092 = vmatpush1.bf16.msra.mxu0 %v3031
    %3093 = vmatprep.subr.bf16.mxu0 %v3028
    %3094 = vmatpush1.bf16.msra.mxu0 %v3027
    %3095 = vmatprep.subr.bf16.mxu0 %v3024
    %3096 = vmatpush1.bf16.msra.mxu0 %v3023
    %3097 = vmatprep.subr.bf16.mxu0 %v3020
    %3098 = vmatpush1.bf16.msra.mxu0 %v3019
    %3099 = vmatprep.subr.bf16.mxu0 0
    %3100 = vmatpush2.bf16.msra.mxu0 0
    %3101 = vmatprep.subr.bf16.mxu0 0
    %3102 = vmatpush2.bf16.msra.mxu0 0
    %3103 = vmatprep.subr.bf16.mxu0 0
    %3104 = vmatpush2.bf16.msra.mxu0 0
    %3105 = vmatprep.subr.bf16.mxu0 0
    %3106 = vmatpush2.bf16.msra.mxu0 0
    %3107 = vmatprep.subr.bf16.mxu0 0
    %3108 = vmatpush2.bf16.msra.mxu0 0
    %3109 = vmatprep.subr.bf16.mxu0 0
    %3110 = vmatpush2.bf16.msra.mxu0 0
    %3111 = vmatprep.subr.bf16.mxu0 0
    %3112 = vmatpush2.bf16.msra.mxu0 0
    %3113 = vmatprep.subr.bf16.mxu0 0
    %3114 = vmatpush2.bf16.msra.mxu0 0
    %3115 = vmatprep.mubr.bf16.mxu0 0
    %3116 = vmatmul.mubr.bf16.gmra.mxu0 %v2900
    %v3117 = vpop.f32.mrf.mxu0
    %v3118 = vadd.f32 %v2906, %v3117
    %v3119 = vpop.f32.mrf.mxu0
    %v3120 = vadd.f32 %v2910, %v3119
    %v3121 = vpop.f32.mrf.mxu0
    %v3122 = vpop.f32.mrf.mxu0
    %3123 = vdwg.mxu0
    %3124 = vmatprep.subr.bf16.mxu0 %v3050
    %3125 = vmatpush1.bf16.msra.mxu0 %v3049
    %3126 = vmatprep.subr.bf16.mxu0 %v3046
    %3127 = vmatpush1.bf16.msra.mxu0 %v3045
    %3128 = vmatprep.subr.bf16.mxu0 %v3042
    %3129 = vmatpush1.bf16.msra.mxu0 %v3041
    %3130 = vmatprep.subr.bf16.mxu0 %v3038
    %3131 = vmatpush1.bf16.msra.mxu0 %v3037
    %3132 = vmatprep.subr.bf16.mxu0 %v3034
    %3133 = vmatpush1.bf16.msra.mxu0 %v3033
    %3134 = vmatprep.subr.bf16.mxu0 %v3030
    %3135 = vmatpush1.bf16.msra.mxu0 %v3029
    %3136 = vmatprep.subr.bf16.mxu0 %v3026
    %3137 = vmatpush1.bf16.msra.mxu0 %v3025
    %3138 = vmatprep.subr.bf16.mxu0 %v3022
    %3139 = vmatpush1.bf16.msra.mxu0 %v3021
    %3140 = vmatprep.subr.bf16.mxu0 0
    %3141 = vmatpush2.bf16.msra.mxu0 0
    %3142 = vmatprep.subr.bf16.mxu0 0
    %3143 = vmatpush2.bf16.msra.mxu0 0
    %3144 = vmatprep.subr.bf16.mxu0 0
    %3145 = vmatpush2.bf16.msra.mxu0 0
    %3146 = vmatprep.subr.bf16.mxu0 0
    %3147 = vmatpush2.bf16.msra.mxu0 0
    %3148 = vmatprep.subr.bf16.mxu0 0
    %3149 = vmatpush2.bf16.msra.mxu0 0
    %3150 = vmatprep.subr.bf16.mxu0 0
    %3151 = vmatpush2.bf16.msra.mxu0 0
    %3152 = vmatprep.subr.bf16.mxu0 0
    %3153 = vmatpush2.bf16.msra.mxu0 0
    %3154 = vmatprep.subr.bf16.mxu0 0
    %3155 = vmatpush2.bf16.msra.mxu0 0
    %3156 = vmatprep.mubr.bf16.mxu0 0
    %3157 = vmatmul.mubr.bf16.gmra.mxu0 %v2900
    %v3158 = vpop.f32.mrf.mxu0
    %v3159 = vadd.f32 %v2914, %v3158
    %v3160 = vpop.f32.mrf.mxu0
    %v3161 = vadd.f32 %v2918, %v3160
    %v3162 = vpop.f32.mrf.mxu0
    %v3163 = vpop.f32.mrf.mxu0
    %3164 = vdwg.mxu0
    %v3165 = vld [vmem:[#allocation22] sm:$0xf]
    %v3166 = vld [vmem:[#allocation23] sm:$0xf]
    %v3167 = vrot.slane %v3118, 4
    %v3168 = vadd.f32 %v3118, %v3167
    %v3169 = vrot.slane %v3168, 2
    %v3170 = vadd.f32 %v3168, %v3169
    %v3171 = vrot.slane %v3170, 1
    %v3172 = vadd.f32 %v3170, %v3171
    %v3173 = vrot.slane %v3120, 4
    %v3174 = vadd.f32 %v3120, %v3173
    %v3175 = vrot.slane %v3174, 2
    %v3176 = vadd.f32 %v3174, %v3175
    %v3177 = vrot.slane %v3176, 1
    %v3178 = vadd.f32 %v3176, %v3177
    %v3179 = vrot.slane %v3159, 4
    %v3180 = vadd.f32 %v3159, %v3179
    %v3181 = vrot.slane %v3180, 2
    %v3182 = vadd.f32 %v3180, %v3181
    %v3183 = vrot.slane %v3182, 1
    %v3184 = vadd.f32 %v3182, %v3183
    %v3185 = vrot.slane %v3161, 4
    %v3186 = vadd.f32 %v3161, %v3185
    %v3187 = vrot.slane %v3186, 2
    %v3188 = vadd.f32 %v3186, %v3187
    %v3189 = vrot.slane %v3188, 1
    %v3190 = vadd.f32 %v3188, %v3189
    %v3191 = vmul.f32 %v3172, %v2840
    %v3192 = vmul.f32 %v3178, %v2840
    %v3193 = vmul.f32 %v3184, %v2840
    %v3194 = vmul.f32 %v3190, %v2840
    %v3195 = vsub.f32 %v3118, %v3191
    %v3196 = vsub.f32 %v3120, %v3192
    %v3197 = vsub.f32 %v3159, %v3193
    %v3198 = vsub.f32 %v3161, %v3194
    %v3199 = vmul.f32 %v3195, %v3195
    %v3200 = vmul.f32 %v3196, %v3196
    %v3201 = vmul.f32 %v3197, %v3197
    %v3202 = vmul.f32 %v3198, %v3198
    %v3203 = vrot.slane %v3199, 4
    %v3204 = vadd.f32 %v3199, %v3203
    %v3205 = vrot.slane %v3204, 2
    %v3206 = vadd.f32 %v3204, %v3205
    %v3207 = vrot.slane %v3206, 1
    %v3208 = vadd.f32 %v3206, %v3207
    %v3209 = vrot.slane %v3200, 4
    %v3210 = vadd.f32 %v3200, %v3209
    %v3211 = vrot.slane %v3210, 2
    %v3212 = vadd.f32 %v3210, %v3211
    %v3213 = vrot.slane %v3212, 1
    %v3214 = vadd.f32 %v3212, %v3213
    %v3215 = vrot.slane %v3201, 4
    %v3216 = vadd.f32 %v3201, %v3215
    %v3217 = vrot.slane %v3216, 2
    %v3218 = vadd.f32 %v3216, %v3217
    %v3219 = vrot.slane %v3218, 1
    %v3220 = vadd.f32 %v3218, %v3219
    %v3221 = vrot.slane %v3202, 4
    %v3222 = vadd.f32 %v3202, %v3221
    %v3223 = vrot.slane %v3222, 2
    %v3224 = vadd.f32 %v3222, %v3223
    %v3225 = vrot.slane %v3224, 1
    %v3226 = vadd.f32 %v3224, %v3225
    %v3227 = vmul.f32 %v3208, %v2840
    %v3228 = vmul.f32 %v3214, %v2840
    %v3229 = vmul.f32 %v3220, %v2840
    %v3230 = vmul.f32 %v3226, %v2840
    %v3231 = vadd.f32 %v3227, 1e-05
    %v3232 = vadd.f32 %v3228, 1e-05
    %v3233 = vadd.f32 %v3229, 1e-05
    %v3234 = vadd.f32 %v3230, 1e-05
    %v3235 = vrsqrt.pop %v3231
    %v3236 = vrsqrt.pop %v3232
    %v3237 = vrsqrt.pop %v3233
    %v3238 = vrsqrt.pop %v3234
    %v3239 = vmul.f32 %v3195, %v3235
    %v3240 = vmul.f32 %v3196, %v3236
    %v3241 = vmul.f32 %v3197, %v3237
    %v3242 = vmul.f32 %v3198, %v3238
    %v3244 = vlaneseq
    %v3245 = vshrl.u32 %v3244, 7
    %v3246 = vsub.s32 0, %v3245
    %v3247 = vrot.slane %v3165, %v3246
    %v3248 = vlaneseq
    %v3249 = vshrl.u32 %v3248, 7
    %v3250 = vsub.s32 1, %v3249
    %v3251 = vrot.slane %v3165, %v3250
    %v3252 = vlaneseq
    %v3253 = vshrl.u32 %v3252, 7
    %v3254 = vsub.s32 2, %v3253
    %v3255 = vrot.slane %v3165, %v3254
    %v3256 = vlaneseq
    %v3257 = vshrl.u32 %v3256, 7
    %v3258 = vsub.s32 3, %v3257
    %v3259 = vrot.slane %v3165, %v3258
    %v3264 = vmul.f32 %v3239, %v3247
    %v3265 = vmul.f32 %v3240, %v3251
    %v3266 = vmul.f32 %v3241, %v3255
    %v3267 = vmul.f32 %v3242, %v3259
    %v3269 = vlaneseq
    %v3270 = vshrl.u32 %v3269, 7
    %v3271 = vsub.s32 0, %v3270
    %v3272 = vrot.slane %v3166, %v3271
    %v3273 = vlaneseq
    %v3274 = vshrl.u32 %v3273, 7
    %v3275 = vsub.s32 1, %v3274
    %v3276 = vrot.slane %v3166, %v3275
    %v3277 = vlaneseq
    %v3278 = vshrl.u32 %v3277, 7
    %v3279 = vsub.s32 2, %v3278
    %v3280 = vrot.slane %v3166, %v3279
    %v3281 = vlaneseq
    %v3282 = vshrl.u32 %v3281, 7
    %v3283 = vsub.s32 3, %v3282
    %v3284 = vrot.slane %v3166, %v3283
    %v3289 = vadd.f32 %v3264, %v3272
    %v3290 = vadd.f32 %v3265, %v3276
    %v3291 = vadd.f32 %v3266, %v3280
    %v3292 = vadd.f32 %v3267, %v3284
    %v3293 = vmax.f32 %v3289, 0.0
    %v3294 = vmax.f32 %v3290, 0.0
    %v3295 = vmax.f32 %v3291, 0.0
    %v3296 = vmax.f32 %v3292, 0.0
    %v3297 = vld [vmem:[#allocation25] sm:$0xff]
    %v3298 = vld [vmem:[#allocation25 + $0x8] sm:$0xff]
    %v3299 = vld [vmem:[#allocation25 + $0x10] sm:$0xff]
    %v3300 = vld [vmem:[#allocation25 + $0x18] sm:$0xff]
    %v3301 = vld [vmem:[#allocation25 + $0x20] sm:$0xff]
    %v3302 = vld [vmem:[#allocation25 + $0x28] sm:$0xff]
    %v3303 = vld [vmem:[#allocation25 + $0x30] sm:$0xff]
    %v3304 = vld [vmem:[#allocation25 + $0x38] sm:$0xff]
    %v3305 = vld [vmem:[#allocation25 + $0x40] sm:$0xff]
    %v3306 = vld [vmem:[#allocation25 + $0x48] sm:$0xff]
    %v3307 = vld [vmem:[#allocation25 + $0x50] sm:$0xff]
    %v3308 = vld [vmem:[#allocation25 + $0x58] sm:$0xff]
    %v3309 = vld [vmem:[#allocation25 + $0x60] sm:$0xff]
    %v3310 = vld [vmem:[#allocation25 + $0x68] sm:$0xff]
    %v3311 = vld [vmem:[#allocation25 + $0x70] sm:$0xff]
    %v3312 = vld [vmem:[#allocation25 + $0x78] sm:$0xff]
    %v3313 = vld [vmem:[#allocation25 + $0x80] sm:$0xff]
    %v3314 = vld [vmem:[#allocation25 + $0x88] sm:$0xff]
    %v3315 = vld [vmem:[#allocation25 + $0x90] sm:$0xff]
    %v3316 = vld [vmem:[#allocation25 + $0x98] sm:$0xff]
    %v3317 = vld [vmem:[#allocation25 + $0xa0] sm:$0xff]
    %v3318 = vld [vmem:[#allocation25 + $0xa8] sm:$0xff]
    %v3319 = vld [vmem:[#allocation25 + $0xb0] sm:$0xff]
    %v3320 = vld [vmem:[#allocation25 + $0xb8] sm:$0xff]
    %v3321 = vld [vmem:[#allocation25 + $0xc0] sm:$0xff]
    %v3322 = vld [vmem:[#allocation25 + $0xc8] sm:$0xff]
    %v3323 = vld [vmem:[#allocation25 + $0xd0] sm:$0xff]
    %v3324 = vld [vmem:[#allocation25 + $0xd8] sm:$0xff]
    %v3325 = vld [vmem:[#allocation25 + $0xe0] sm:$0xff]
    %v3326 = vld [vmem:[#allocation25 + $0xe8] sm:$0xff]
    %v3327 = vld [vmem:[#allocation25 + $0xf0] sm:$0xff]
    %v3328 = vld [vmem:[#allocation25 + $0xf8] sm:$0xff]
    %v3329 = vld [vmem:[#allocation25 + $0x100] sm:$0xff]
    %v3330 = vld [vmem:[#allocation25 + $0x108] sm:$0xff]
    %v3331 = vld [vmem:[#allocation25 + $0x110] sm:$0xff]
    %v3332 = vld [vmem:[#allocation25 + $0x118] sm:$0xff]
    %v3333 = vld [vmem:[#allocation25 + $0x120] sm:$0xff]
    %v3334 = vld [vmem:[#allocation25 + $0x128] sm:$0xff]
    %v3335 = vld [vmem:[#allocation25 + $0x130] sm:$0xff]
    %v3336 = vld [vmem:[#allocation25 + $0x138] sm:$0xff]
    %v3337 = vld [vmem:[#allocation25 + $0x140] sm:$0xff]
    %v3338 = vld [vmem:[#allocation25 + $0x148] sm:$0xff]
    %v3339 = vld [vmem:[#allocation25 + $0x150] sm:$0xff]
    %v3340 = vld [vmem:[#allocation25 + $0x158] sm:$0xff]
    %v3341 = vld [vmem:[#allocation25 + $0x160] sm:$0xff]
    %v3342 = vld [vmem:[#allocation25 + $0x168] sm:$0xff]
    %v3343 = vld [vmem:[#allocation25 + $0x170] sm:$0xff]
    %v3344 = vld [vmem:[#allocation25 + $0x178] sm:$0xff]
    %v3345 = vld [vmem:[#allocation25 + $0x180] sm:$0xff]
    %v3346 = vld [vmem:[#allocation25 + $0x188] sm:$0xff]
    %v3347 = vld [vmem:[#allocation25 + $0x190] sm:$0xff]
    %v3348 = vld [vmem:[#allocation25 + $0x198] sm:$0xff]
    %v3349 = vld [vmem:[#allocation25 + $0x1a0] sm:$0xff]
    %v3350 = vld [vmem:[#allocation25 + $0x1a8] sm:$0xff]
    %v3351 = vld [vmem:[#allocation25 + $0x1b0] sm:$0xff]
    %v3352 = vld [vmem:[#allocation25 + $0x1b8] sm:$0xff]
    %v3353 = vld [vmem:[#allocation25 + $0x1c0] sm:$0xff]
    %v3354 = vld [vmem:[#allocation25 + $0x1c8] sm:$0xff]
    %v3355 = vld [vmem:[#allocation25 + $0x1d0] sm:$0xff]
    %v3356 = vld [vmem:[#allocation25 + $0x1d8] sm:$0xff]
    %v3357 = vld [vmem:[#allocation25 + $0x1e0] sm:$0xff]
    %v3358 = vld [vmem:[#allocation25 + $0x1e8] sm:$0xff]
    %v3359 = vld [vmem:[#allocation25 + $0x1f0] sm:$0xff]
    %v3360 = vld [vmem:[#allocation25 + $0x1f8] sm:$0xff]
    %v3361 = vpack.c.bf16 %v3293, %v3293
    %v3362 = vpack.c.bf16 %v3294, %v3294
    %v3363 = vpack.c.bf16 %v3295, %v3295
    %v3364 = vpack.c.bf16 %v3296, %v3296
    %v3365 = vld [vmem:[%s16] sm:$0x3]
    %v3367 = vlaneseq
    %v3368 = vshrl.u32 %v3367, 7
    %v3369 = vsub.s32 0, %v3368
    %v3370 = vrot.slane %v3365, %v3369
    %v3371 = vlaneseq
    %v3372 = vshrl.u32 %v3371, 7
    %v3373 = vsub.s32 1, %v3372
    %v3374 = vrot.slane %v3365, %v3373
    %v3441 = vunpack.c.l.b16 %v3297
    %v3442 = vunpack.c.h.b16 %v3297
    %v3443 = vunpack.c.l.b16 %v3298
    %v3444 = vunpack.c.h.b16 %v3298
    %v3445 = vunpack.c.l.b16 %v3299
    %v3446 = vunpack.c.h.b16 %v3299
    %v3447 = vunpack.c.l.b16 %v3300
    %v3448 = vunpack.c.h.b16 %v3300
    %v3449 = vunpack.c.l.b16 %v3301
    %v3450 = vunpack.c.h.b16 %v3301
    %v3451 = vunpack.c.l.b16 %v3302
    %v3452 = vunpack.c.h.b16 %v3302
    %v3453 = vunpack.c.l.b16 %v3303
    %v3454 = vunpack.c.h.b16 %v3303
    %v3455 = vunpack.c.l.b16 %v3304
    %v3456 = vunpack.c.h.b16 %v3304
    %v3457 = vunpack.c.l.b16 %v3305
    %v3458 = vunpack.c.h.b16 %v3305
    %v3459 = vunpack.c.l.b16 %v3306
    %v3460 = vunpack.c.h.b16 %v3306
    %v3461 = vunpack.c.l.b16 %v3307
    %v3462 = vunpack.c.h.b16 %v3307
    %v3463 = vunpack.c.l.b16 %v3308
    %v3464 = vunpack.c.h.b16 %v3308
    %v3465 = vunpack.c.l.b16 %v3309
    %v3466 = vunpack.c.h.b16 %v3309
    %v3467 = vunpack.c.l.b16 %v3310
    %v3468 = vunpack.c.h.b16 %v3310
    %v3469 = vunpack.c.l.b16 %v3311
    %v3470 = vunpack.c.h.b16 %v3311
    %v3471 = vunpack.c.l.b16 %v3312
    %v3472 = vunpack.c.h.b16 %v3312
    %v3473 = vunpack.c.l.b16 %v3313
    %v3474 = vunpack.c.h.b16 %v3313
    %v3475 = vunpack.c.l.b16 %v3314
    %v3476 = vunpack.c.h.b16 %v3314
    %v3477 = vunpack.c.l.b16 %v3315
    %v3478 = vunpack.c.h.b16 %v3315
    %v3479 = vunpack.c.l.b16 %v3316
    %v3480 = vunpack.c.h.b16 %v3316
    %v3481 = vunpack.c.l.b16 %v3317
    %v3482 = vunpack.c.h.b16 %v3317
    %v3483 = vunpack.c.l.b16 %v3318
    %v3484 = vunpack.c.h.b16 %v3318
    %v3485 = vunpack.c.l.b16 %v3319
    %v3486 = vunpack.c.h.b16 %v3319
    %v3487 = vunpack.c.l.b16 %v3320
    %v3488 = vunpack.c.h.b16 %v3320
    %v3489 = vunpack.c.l.b16 %v3321
    %v3490 = vunpack.c.h.b16 %v3321
    %v3491 = vunpack.c.l.b16 %v3322
    %v3492 = vunpack.c.h.b16 %v3322
    %v3493 = vunpack.c.l.b16 %v3323
    %v3494 = vunpack.c.h.b16 %v3323
    %v3495 = vunpack.c.l.b16 %v3324
    %v3496 = vunpack.c.h.b16 %v3324
    %v3497 = vunpack.c.l.b16 %v3325
    %v3498 = vunpack.c.h.b16 %v3325
    %v3499 = vunpack.c.l.b16 %v3326
    %v3500 = vunpack.c.h.b16 %v3326
    %v3501 = vunpack.c.l.b16 %v3327
    %v3502 = vunpack.c.h.b16 %v3327
    %v3503 = vunpack.c.l.b16 %v3328
    %v3504 = vunpack.c.h.b16 %v3328
    %v3505 = vunpack.c.l.b16 %v3329
    %v3506 = vunpack.c.h.b16 %v3329
    %v3507 = vunpack.c.l.b16 %v3330
    %v3508 = vunpack.c.h.b16 %v3330
    %v3509 = vunpack.c.l.b16 %v3331
    %v3510 = vunpack.c.h.b16 %v3331
    %v3511 = vunpack.c.l.b16 %v3332
    %v3512 = vunpack.c.h.b16 %v3332
    %v3513 = vunpack.c.l.b16 %v3333
    %v3514 = vunpack.c.h.b16 %v3333
    %v3515 = vunpack.c.l.b16 %v3334
    %v3516 = vunpack.c.h.b16 %v3334
    %v3517 = vunpack.c.l.b16 %v3335
    %v3518 = vunpack.c.h.b16 %v3335
    %v3519 = vunpack.c.l.b16 %v3336
    %v3520 = vunpack.c.h.b16 %v3336
    %v3521 = vunpack.c.l.b16 %v3337
    %v3522 = vunpack.c.h.b16 %v3337
    %v3523 = vunpack.c.l.b16 %v3338
    %v3524 = vunpack.c.h.b16 %v3338
    %v3525 = vunpack.c.l.b16 %v3339
    %v3526 = vunpack.c.h.b16 %v3339
    %v3527 = vunpack.c.l.b16 %v3340
    %v3528 = vunpack.c.h.b16 %v3340
    %v3529 = vunpack.c.l.b16 %v3341
    %v3530 = vunpack.c.h.b16 %v3341
    %v3531 = vunpack.c.l.b16 %v3342
    %v3532 = vunpack.c.h.b16 %v3342
    %v3533 = vunpack.c.l.b16 %v3343
    %v3534 = vunpack.c.h.b16 %v3343
    %v3535 = vunpack.c.l.b16 %v3344
    %v3536 = vunpack.c.h.b16 %v3344
    %v3537 = vunpack.c.l.b16 %v3345
    %v3538 = vunpack.c.h.b16 %v3345
    %v3539 = vunpack.c.l.b16 %v3346
    %v3540 = vunpack.c.h.b16 %v3346
    %v3541 = vunpack.c.l.b16 %v3347
    %v3542 = vunpack.c.h.b16 %v3347
    %v3543 = vunpack.c.l.b16 %v3348
    %v3544 = vunpack.c.h.b16 %v3348
    %v3545 = vunpack.c.l.b16 %v3349
    %v3546 = vunpack.c.h.b16 %v3349
    %v3547 = vunpack.c.l.b16 %v3350
    %v3548 = vunpack.c.h.b16 %v3350
    %v3549 = vunpack.c.l.b16 %v3351
    %v3550 = vunpack.c.h.b16 %v3351
    %v3551 = vunpack.c.l.b16 %v3352
    %v3552 = vunpack.c.h.b16 %v3352
    %v3553 = vunpack.c.l.b16 %v3353
    %v3554 = vunpack.c.h.b16 %v3353
    %v3555 = vunpack.c.l.b16 %v3354
    %v3556 = vunpack.c.h.b16 %v3354
    %v3557 = vunpack.c.l.b16 %v3355
    %v3558 = vunpack.c.h.b16 %v3355
    %v3559 = vunpack.c.l.b16 %v3356
    %v3560 = vunpack.c.h.b16 %v3356
    %v3561 = vunpack.c.l.b16 %v3357
    %v3562 = vunpack.c.h.b16 %v3357
    %v3563 = vunpack.c.l.b16 %v3358
    %v3564 = vunpack.c.h.b16 %v3358
    %v3565 = vunpack.c.l.b16 %v3359
    %v3566 = vunpack.c.h.b16 %v3359
    %v3567 = vunpack.c.l.b16 %v3360
    %v3568 = vunpack.c.h.b16 %v3360
    %v3569 = vpack.c.b16 %v3443, %v3441
    %v3570 = vpack.c.b16 %v3444, %v3442
    %v3571 = vpack.c.b16 %v3447, %v3445
    %v3572 = vpack.c.b16 %v3448, %v3446
    %v3573 = vpack.c.b16 %v3451, %v3449
    %v3574 = vpack.c.b16 %v3452, %v3450
    %v3575 = vpack.c.b16 %v3455, %v3453
    %v3576 = vpack.c.b16 %v3456, %v3454
    %v3577 = vpack.c.b16 %v3459, %v3457
    %v3578 = vpack.c.b16 %v3460, %v3458
    %v3579 = vpack.c.b16 %v3463, %v3461
    %v3580 = vpack.c.b16 %v3464, %v3462
    %v3581 = vpack.c.b16 %v3467, %v3465
    %v3582 = vpack.c.b16 %v3468, %v3466
    %v3583 = vpack.c.b16 %v3471, %v3469
    %v3584 = vpack.c.b16 %v3472, %v3470
    %v3585 = vpack.c.b16 %v3475, %v3473
    %v3586 = vpack.c.b16 %v3476, %v3474
    %v3587 = vpack.c.b16 %v3479, %v3477
    %v3588 = vpack.c.b16 %v3480, %v3478
    %v3589 = vpack.c.b16 %v3483, %v3481
    %v3590 = vpack.c.b16 %v3484, %v3482
    %v3591 = vpack.c.b16 %v3487, %v3485
    %v3592 = vpack.c.b16 %v3488, %v3486
    %v3593 = vpack.c.b16 %v3491, %v3489
    %v3594 = vpack.c.b16 %v3492, %v3490
    %v3595 = vpack.c.b16 %v3495, %v3493
    %v3596 = vpack.c.b16 %v3496, %v3494
    %v3597 = vpack.c.b16 %v3499, %v3497
    %v3598 = vpack.c.b16 %v3500, %v3498
    %v3599 = vpack.c.b16 %v3503, %v3501
    %v3600 = vpack.c.b16 %v3504, %v3502
    %v3601 = vpack.c.b16 %v3507, %v3505
    %v3602 = vpack.c.b16 %v3508, %v3506
    %v3603 = vpack.c.b16 %v3511, %v3509
    %v3604 = vpack.c.b16 %v3512, %v3510
    %v3605 = vpack.c.b16 %v3515, %v3513
    %v3606 = vpack.c.b16 %v3516, %v3514
    %v3607 = vpack.c.b16 %v3519, %v3517
    %v3608 = vpack.c.b16 %v3520, %v3518
    %v3609 = vpack.c.b16 %v3523, %v3521
    %v3610 = vpack.c.b16 %v3524, %v3522
    %v3611 = vpack.c.b16 %v3527, %v3525
    %v3612 = vpack.c.b16 %v3528, %v3526
    %v3613 = vpack.c.b16 %v3531, %v3529
    %v3614 = vpack.c.b16 %v3532, %v3530
    %v3615 = vpack.c.b16 %v3535, %v3533
    %v3616 = vpack.c.b16 %v3536, %v3534
    %v3617 = vpack.c.b16 %v3539, %v3537
    %v3618 = vpack.c.b16 %v3540, %v3538
    %v3619 = vpack.c.b16 %v3543, %v3541
    %v3620 = vpack.c.b16 %v3544, %v3542
    %v3621 = vpack.c.b16 %v3547, %v3545
    %v3622 = vpack.c.b16 %v3548, %v3546
    %v3623 = vpack.c.b16 %v3551, %v3549
    %v3624 = vpack.c.b16 %v3552, %v3550
    %v3625 = vpack.c.b16 %v3555, %v3553
    %v3626 = vpack.c.b16 %v3556, %v3554
    %v3627 = vpack.c.b16 %v3559, %v3557
    %v3628 = vpack.c.b16 %v3560, %v3558
    %v3629 = vpack.c.b16 %v3563, %v3561
    %v3630 = vpack.c.b16 %v3564, %v3562
    %v3631 = vpack.c.b16 %v3567, %v3565
    %v3632 = vpack.c.b16 %v3568, %v3566
    %3697 = vmatprep.subr.bf16.mxu0 %v3584
    %3698 = vmatpush1.bf16.msra.mxu0 %v3583
    %3699 = vmatprep.subr.bf16.mxu0 %v3582
    %3700 = vmatpush1.bf16.msra.mxu0 %v3581
    %3701 = vmatprep.subr.bf16.mxu0 %v3580
    %3702 = vmatpush1.bf16.msra.mxu0 %v3579
    %3703 = vmatprep.subr.bf16.mxu0 %v3578
    %3704 = vmatpush1.bf16.msra.mxu0 %v3577
    %3705 = vmatprep.subr.bf16.mxu0 %v3576
    %3706 = vmatpush1.bf16.msra.mxu0 %v3575
    %3707 = vmatprep.subr.bf16.mxu0 %v3574
    %3708 = vmatpush1.bf16.msra.mxu0 %v3573
    %3709 = vmatprep.subr.bf16.mxu0 %v3572
    %3710 = vmatpush1.bf16.msra.mxu0 %v3571
    %3711 = vmatprep.subr.bf16.mxu0 %v3570
    %3712 = vmatpush1.bf16.msra.mxu0 %v3569
    %3713 = vmatprep.subr.bf16.mxu0 %v3600
    %3714 = vmatpush2.bf16.msra.mxu0 %v3599
    %3715 = vmatprep.subr.bf16.mxu0 %v3598
    %3716 = vmatpush2.bf16.msra.mxu0 %v3597
    %3717 = vmatprep.subr.bf16.mxu0 %v3596
    %3718 = vmatpush2.bf16.msra.mxu0 %v3595
    %3719 = vmatprep.subr.bf16.mxu0 %v3594
    %3720 = vmatpush2.bf16.msra.mxu0 %v3593
    %3721 = vmatprep.subr.bf16.mxu0 %v3592
    %3722 = vmatpush2.bf16.msra.mxu0 %v3591
    %3723 = vmatprep.subr.bf16.mxu0 %v3590
    %3724 = vmatpush2.bf16.msra.mxu0 %v3589
    %3725 = vmatprep.subr.bf16.mxu0 %v3588
    %3726 = vmatpush2.bf16.msra.mxu0 %v3587
    %3727 = vmatprep.subr.bf16.mxu0 %v3586
    %3728 = vmatpush2.bf16.msra.mxu0 %v3585
    %3729 = vmatprep.mubr.bf16.mxu0 %v3362
    %3730 = vmatmul.mubr.bf16.gmra.mxu0 %v3361
    %v3731 = vpop.f32.mrf.mxu0
    %v3732 = vadd.f32 %v3370, %v3731
    %v3733 = vpop.f32.mrf.mxu0
    %v3734 = vadd.f32 %v3374, %v3733
    %v3735 = vpop.f32.mrf.mxu0
    %v3736 = vpop.f32.mrf.mxu0
    %3737 = vdwg.mxu0
    %3738 = vmatprep.subr.bf16.mxu0 %v3616
    %3739 = vmatpush1.bf16.msra.mxu0 %v3615
    %3740 = vmatprep.subr.bf16.mxu0 %v3614
    %3741 = vmatpush1.bf16.msra.mxu0 %v3613
    %3742 = vmatprep.subr.bf16.mxu0 %v3612
    %3743 = vmatpush1.bf16.msra.mxu0 %v3611
    %3744 = vmatprep.subr.bf16.mxu0 %v3610
    %3745 = vmatpush1.bf16.msra.mxu0 %v3609
    %3746 = vmatprep.subr.bf16.mxu0 %v3608
    %3747 = vmatpush1.bf16.msra.mxu0 %v3607
    %3748 = vmatprep.subr.bf16.mxu0 %v3606
    %3749 = vmatpush1.bf16.msra.mxu0 %v3605
    %3750 = vmatprep.subr.bf16.mxu0 %v3604
    %3751 = vmatpush1.bf16.msra.mxu0 %v3603
    %3752 = vmatprep.subr.bf16.mxu0 %v3602
    %3753 = vmatpush1.bf16.msra.mxu0 %v3601
    %3754 = vmatprep.subr.bf16.mxu0 %v3632
    %3755 = vmatpush2.bf16.msra.mxu0 %v3631
    %3756 = vmatprep.subr.bf16.mxu0 %v3630
    %3757 = vmatpush2.bf16.msra.mxu0 %v3629
    %3758 = vmatprep.subr.bf16.mxu0 %v3628
    %3759 = vmatpush2.bf16.msra.mxu0 %v3627
    %3760 = vmatprep.subr.bf16.mxu0 %v3626
    %3761 = vmatpush2.bf16.msra.mxu0 %v3625
    %3762 = vmatprep.subr.bf16.mxu0 %v3624
    %3763 = vmatpush2.bf16.msra.mxu0 %v3623
    %3764 = vmatprep.subr.bf16.mxu0 %v3622
    %3765 = vmatpush2.bf16.msra.mxu0 %v3621
    %3766 = vmatprep.subr.bf16.mxu0 %v3620
    %3767 = vmatpush2.bf16.msra.mxu0 %v3619
    %3768 = vmatprep.subr.bf16.mxu0 %v3618
    %3769 = vmatpush2.bf16.msra.mxu0 %v3617
    %3770 = vmatprep.mubr.bf16.mxu0 %v3364
    %3771 = vmatmul.mubr.bf16.gmra.mxu0 %v3363
    %v3772 = vpop.f32.mrf.mxu0
    %v3773 = vadd.f32 %v3732, %v3772
    %v3774 = vpop.f32.mrf.mxu0
    %v3775 = vadd.f32 %v3734, %v3774
    %v3776 = vpop.f32.mrf.mxu0
    %v3777 = vpop.f32.mrf.mxu0
    %3778 = vdwg.mxu0
    %v3779 = vld [vmem:[%s17] sm:$0x1]
    %v3780 = vld [vmem:[%s18] sm:$0x1]
    %v3781 = vadd.f32 %v3773, %v3775
    %v3782 = vrot.slane %v3781, 4
    %v3783 = vadd.f32 %v3781, %v3782
    %v3784 = vrot.slane %v3783, 2
    %v3785 = vadd.f32 %v3783, %v3784
    %v3786 = vrot.slane %v3785, 1
    %v3787 = vadd.f32 %v3785, %v3786
    %v3788 = vrcp.pop 16.0
    %v3789 = vmul.f32 %v3787, %v3788
    %v3790 = vsub.f32 %v3773, %v3789
    %v3791 = vsub.f32 %v3775, %v3789
    %v3792 = vmul.f32 %v3790, %v3790
    %v3793 = vmul.f32 %v3791, %v3791
    %v3794 = vadd.f32 %v3792, %v3793
    %v3795 = vrot.slane %v3794, 4
    %v3796 = vadd.f32 %v3794, %v3795
    %v3797 = vrot.slane %v3796, 2
    %v3798 = vadd.f32 %v3796, %v3797
    %v3799 = vrot.slane %v3798, 1
    %v3800 = vadd.f32 %v3798, %v3799
    %v3801 = vmul.f32 %v3800, %v3788
    %v3802 = vadd.f32 %v3801, 1e-05
    %v3803 = vrsqrt.pop %v3802
    %v3804 = vmul.f32 %v3790, %v3803
    %v3805 = vmul.f32 %v3791, %v3803
    %v3807 = vlaneseq
    %v3808 = vshrl.u32 %v3807, 7
    %v3809 = vsub.s32 0, %v3808
    %v3810 = vrot.slane %v3779, %v3809
    %v3812 = vmul.f32 %v3804, %v3810
    %v3813 = vmul.f32 %v3805, %v3810
    %v3815 = vlaneseq
    %v3816 = vshrl.u32 %v3815, 7
    %v3817 = vsub.s32 0, %v3816
    %v3818 = vrot.slane %v3780, %v3817
    %v3820 = vadd.f32 %v3812, %v3818
    %v3821 = vadd.f32 %v3813, %v3818
    %v3822 = vmax.f32 %v3820, 0.0
    %v3823 = vmax.f32 %v3821, 0.0
    %v3824 = vld [vmem:[#allocation26] sm:$0xff]
    %v3825 = vld [vmem:[#allocation26 + $0x8] sm:$0xff]
    %v3826 = vld [vmem:[#allocation26 + $0x10] sm:$0xff]
    %v3827 = vld [vmem:[#allocation26 + $0x18] sm:$0xff]
    %v3828 = vld [vmem:[#allocation26 + $0x20] sm:$0xff]
    %v3829 = vld [vmem:[#allocation26 + $0x28] sm:$0xff]
    %v3830 = vld [vmem:[#allocation26 + $0x30] sm:$0xff]
    %v3831 = vld [vmem:[#allocation26 + $0x38] sm:$0xff]
    %v3832 = vld [vmem:[#allocation26 + $0x40] sm:$0xff]
    %v3833 = vld [vmem:[#allocation26 + $0x48] sm:$0xff]
    %v3834 = vld [vmem:[#allocation26 + $0x50] sm:$0xff]
    %v3835 = vld [vmem:[#allocation26 + $0x58] sm:$0xff]
    %v3836 = vld [vmem:[#allocation26 + $0x60] sm:$0xff]
    %v3837 = vld [vmem:[#allocation26 + $0x68] sm:$0xff]
    %v3838 = vld [vmem:[#allocation26 + $0x70] sm:$0xff]
    %v3839 = vld [vmem:[#allocation26 + $0x78] sm:$0xff]
    %v3840 = vld [vmem:[#allocation26 + $0x80] sm:$0xff]
    %v3841 = vld [vmem:[#allocation26 + $0x88] sm:$0xff]
    %v3842 = vld [vmem:[#allocation26 + $0x90] sm:$0xff]
    %v3843 = vld [vmem:[#allocation26 + $0x98] sm:$0xff]
    %v3844 = vld [vmem:[#allocation26 + $0xa0] sm:$0xff]
    %v3845 = vld [vmem:[#allocation26 + $0xa8] sm:$0xff]
    %v3846 = vld [vmem:[#allocation26 + $0xb0] sm:$0xff]
    %v3847 = vld [vmem:[#allocation26 + $0xb8] sm:$0xff]
    %v3848 = vld [vmem:[#allocation26 + $0xc0] sm:$0xff]
    %v3849 = vld [vmem:[#allocation26 + $0xc8] sm:$0xff]
    %v3850 = vld [vmem:[#allocation26 + $0xd0] sm:$0xff]
    %v3851 = vld [vmem:[#allocation26 + $0xd8] sm:$0xff]
    %v3852 = vld [vmem:[#allocation26 + $0xe0] sm:$0xff]
    %v3853 = vld [vmem:[#allocation26 + $0xe8] sm:$0xff]
    %v3854 = vld [vmem:[#allocation26 + $0xf0] sm:$0xff]
    %v3855 = vld [vmem:[#allocation26 + $0xf8] sm:$0xff]
    %v3856 = vld [vmem:[#allocation26 + $0x100] sm:$0xff]
    %v3857 = vld [vmem:[#allocation26 + $0x108] sm:$0xff]
    %v3858 = vld [vmem:[#allocation26 + $0x110] sm:$0xff]
    %v3859 = vld [vmem:[#allocation26 + $0x118] sm:$0xff]
    %v3860 = vld [vmem:[#allocation26 + $0x120] sm:$0xff]
    %v3861 = vld [vmem:[#allocation26 + $0x128] sm:$0xff]
    %v3862 = vld [vmem:[#allocation26 + $0x130] sm:$0xff]
    %v3863 = vld [vmem:[#allocation26 + $0x138] sm:$0xff]
    %v3864 = vld [vmem:[#allocation26 + $0x140] sm:$0xff]
    %v3865 = vld [vmem:[#allocation26 + $0x148] sm:$0xff]
    %v3866 = vld [vmem:[#allocation26 + $0x150] sm:$0xff]
    %v3867 = vld [vmem:[#allocation26 + $0x158] sm:$0xff]
    %v3868 = vld [vmem:[#allocation26 + $0x160] sm:$0xff]
    %v3869 = vld [vmem:[#allocation26 + $0x168] sm:$0xff]
    %v3870 = vld [vmem:[#allocation26 + $0x170] sm:$0xff]
    %v3871 = vld [vmem:[#allocation26 + $0x178] sm:$0xff]
    %v3872 = vld [vmem:[#allocation26 + $0x180] sm:$0xff]
    %v3873 = vld [vmem:[#allocation26 + $0x188] sm:$0xff]
    %v3874 = vld [vmem:[#allocation26 + $0x190] sm:$0xff]
    %v3875 = vld [vmem:[#allocation26 + $0x198] sm:$0xff]
    %v3876 = vld [vmem:[#allocation26 + $0x1a0] sm:$0xff]
    %v3877 = vld [vmem:[#allocation26 + $0x1a8] sm:$0xff]
    %v3878 = vld [vmem:[#allocation26 + $0x1b0] sm:$0xff]
    %v3879 = vld [vmem:[#allocation26 + $0x1b8] sm:$0xff]
    %v3880 = vld [vmem:[#allocation26 + $0x1c0] sm:$0xff]
    %v3881 = vld [vmem:[#allocation26 + $0x1c8] sm:$0xff]
    %v3882 = vld [vmem:[#allocation26 + $0x1d0] sm:$0xff]
    %v3883 = vld [vmem:[#allocation26 + $0x1d8] sm:$0xff]
    %v3884 = vld [vmem:[#allocation26 + $0x1e0] sm:$0xff]
    %v3885 = vld [vmem:[#allocation26 + $0x1e8] sm:$0xff]
    %v3886 = vld [vmem:[#allocation26 + $0x1f0] sm:$0xff]
    %v3887 = vld [vmem:[#allocation26 + $0x1f8] sm:$0xff]
    %v3888 = vpack.c.bf16 %v3823, %v3822
    %v3889 = vld [vmem:[%s20] sm:$0xff]
    %v3891 = vlaneseq
    %v3892 = vshrl.u32 %v3891, 7
    %v3893 = vsub.s32 0, %v3892
    %v3894 = vrot.slane %v3889, %v3893
    %v3895 = vlaneseq
    %v3896 = vshrl.u32 %v3895, 7
    %v3897 = vsub.s32 1, %v3896
    %v3898 = vrot.slane %v3889, %v3897
    %v3899 = vlaneseq
    %v3900 = vshrl.u32 %v3899, 7
    %v3901 = vsub.s32 2, %v3900
    %v3902 = vrot.slane %v3889, %v3901
    %v3903 = vlaneseq
    %v3904 = vshrl.u32 %v3903, 7
    %v3905 = vsub.s32 3, %v3904
    %v3906 = vrot.slane %v3889, %v3905
    %v3907 = vlaneseq
    %v3908 = vshrl.u32 %v3907, 7
    %v3909 = vsub.s32 4, %v3908
    %v3910 = vrot.slane %v3889, %v3909
    %v3911 = vlaneseq
    %v3912 = vshrl.u32 %v3911, 7
    %v3913 = vsub.s32 5, %v3912
    %v3914 = vrot.slane %v3889, %v3913
    %v3915 = vlaneseq
    %v3916 = vshrl.u32 %v3915, 7
    %v3917 = vsub.s32 6, %v3916
    %v3918 = vrot.slane %v3889, %v3917
    %v3919 = vlaneseq
    %v3920 = vshrl.u32 %v3919, 7
    %v3921 = vsub.s32 7, %v3920
    %v3922 = vrot.slane %v3889, %v3921
    %v3995 = vunpack.c.l.b16 %v3824
    %v3996 = vunpack.c.h.b16 %v3824
    %v3997 = vunpack.c.l.b16 %v3825
    %v3998 = vunpack.c.h.b16 %v3825
    %v3999 = vunpack.c.l.b16 %v3826
    %v4000 = vunpack.c.h.b16 %v3826
    %v4001 = vunpack.c.l.b16 %v3827
    %v4002 = vunpack.c.h.b16 %v3827
    %v4003 = vunpack.c.l.b16 %v3828
    %v4004 = vunpack.c.h.b16 %v3828
    %v4005 = vunpack.c.l.b16 %v3829
    %v4006 = vunpack.c.h.b16 %v3829
    %v4007 = vunpack.c.l.b16 %v3830
    %v4008 = vunpack.c.h.b16 %v3830
    %v4009 = vunpack.c.l.b16 %v3831
    %v4010 = vunpack.c.h.b16 %v3831
    %v4011 = vunpack.c.l.b16 %v3832
    %v4012 = vunpack.c.h.b16 %v3832
    %v4013 = vunpack.c.l.b16 %v3833
    %v4014 = vunpack.c.h.b16 %v3833
    %v4015 = vunpack.c.l.b16 %v3834
    %v4016 = vunpack.c.h.b16 %v3834
    %v4017 = vunpack.c.l.b16 %v3835
    %v4018 = vunpack.c.h.b16 %v3835
    %v4019 = vunpack.c.l.b16 %v3836
    %v4020 = vunpack.c.h.b16 %v3836
    %v4021 = vunpack.c.l.b16 %v3837
    %v4022 = vunpack.c.h.b16 %v3837
    %v4023 = vunpack.c.l.b16 %v3838
    %v4024 = vunpack.c.h.b16 %v3838
    %v4025 = vunpack.c.l.b16 %v3839
    %v4026 = vunpack.c.h.b16 %v3839
    %v4027 = vunpack.c.l.b16 %v3840
    %v4028 = vunpack.c.h.b16 %v3840
    %v4029 = vunpack.c.l.b16 %v3841
    %v4030 = vunpack.c.h.b16 %v3841
    %v4031 = vunpack.c.l.b16 %v3842
    %v4032 = vunpack.c.h.b16 %v3842
    %v4033 = vunpack.c.l.b16 %v3843
    %v4034 = vunpack.c.h.b16 %v3843
    %v4035 = vunpack.c.l.b16 %v3844
    %v4036 = vunpack.c.h.b16 %v3844
    %v4037 = vunpack.c.l.b16 %v3845
    %v4038 = vunpack.c.h.b16 %v3845
    %v4039 = vunpack.c.l.b16 %v3846
    %v4040 = vunpack.c.h.b16 %v3846
    %v4041 = vunpack.c.l.b16 %v3847
    %v4042 = vunpack.c.h.b16 %v3847
    %v4043 = vunpack.c.l.b16 %v3848
    %v4044 = vunpack.c.h.b16 %v3848
    %v4045 = vunpack.c.l.b16 %v3849
    %v4046 = vunpack.c.h.b16 %v3849
    %v4047 = vunpack.c.l.b16 %v3850
    %v4048 = vunpack.c.h.b16 %v3850
    %v4049 = vunpack.c.l.b16 %v3851
    %v4050 = vunpack.c.h.b16 %v3851
    %v4051 = vunpack.c.l.b16 %v3852
    %v4052 = vunpack.c.h.b16 %v3852
    %v4053 = vunpack.c.l.b16 %v3853
    %v4054 = vunpack.c.h.b16 %v3853
    %v4055 = vunpack.c.l.b16 %v3854
    %v4056 = vunpack.c.h.b16 %v3854
    %v4057 = vunpack.c.l.b16 %v3855
    %v4058 = vunpack.c.h.b16 %v3855
    %v4059 = vunpack.c.l.b16 %v3856
    %v4060 = vunpack.c.h.b16 %v3856
    %v4061 = vunpack.c.l.b16 %v3857
    %v4062 = vunpack.c.h.b16 %v3857
    %v4063 = vunpack.c.l.b16 %v3858
    %v4064 = vunpack.c.h.b16 %v3858
    %v4065 = vunpack.c.l.b16 %v3859
    %v4066 = vunpack.c.h.b16 %v3859
    %v4067 = vunpack.c.l.b16 %v3860
    %v4068 = vunpack.c.h.b16 %v3860
    %v4069 = vunpack.c.l.b16 %v3861
    %v4070 = vunpack.c.h.b16 %v3861
    %v4071 = vunpack.c.l.b16 %v3862
    %v4072 = vunpack.c.h.b16 %v3862
    %v4073 = vunpack.c.l.b16 %v3863
    %v4074 = vunpack.c.h.b16 %v3863
    %v4075 = vunpack.c.l.b16 %v3864
    %v4076 = vunpack.c.h.b16 %v3864
    %v4077 = vunpack.c.l.b16 %v3865
    %v4078 = vunpack.c.h.b16 %v3865
    %v4079 = vunpack.c.l.b16 %v3866
    %v4080 = vunpack.c.h.b16 %v3866
    %v4081 = vunpack.c.l.b16 %v3867
    %v4082 = vunpack.c.h.b16 %v3867
    %v4083 = vunpack.c.l.b16 %v3868
    %v4084 = vunpack.c.h.b16 %v3868
    %v4085 = vunpack.c.l.b16 %v3869
    %v4086 = vunpack.c.h.b16 %v3869
    %v4087 = vunpack.c.l.b16 %v3870
    %v4088 = vunpack.c.h.b16 %v3870
    %v4089 = vunpack.c.l.b16 %v3871
    %v4090 = vunpack.c.h.b16 %v3871
    %v4091 = vunpack.c.l.b16 %v3872
    %v4092 = vunpack.c.h.b16 %v3872
    %v4093 = vunpack.c.l.b16 %v3873
    %v4094 = vunpack.c.h.b16 %v3873
    %v4095 = vunpack.c.l.b16 %v3874
    %v4096 = vunpack.c.h.b16 %v3874
    %v4097 = vunpack.c.l.b16 %v3875
    %v4098 = vunpack.c.h.b16 %v3875
    %v4099 = vunpack.c.l.b16 %v3876
    %v4100 = vunpack.c.h.b16 %v3876
    %v4101 = vunpack.c.l.b16 %v3877
    %v4102 = vunpack.c.h.b16 %v3877
    %v4103 = vunpack.c.l.b16 %v3878
    %v4104 = vunpack.c.h.b16 %v3878
    %v4105 = vunpack.c.l.b16 %v3879
    %v4106 = vunpack.c.h.b16 %v3879
    %v4107 = vunpack.c.l.b16 %v3880
    %v4108 = vunpack.c.h.b16 %v3880
    %v4109 = vunpack.c.l.b16 %v3881
    %v4110 = vunpack.c.h.b16 %v3881
    %v4111 = vunpack.c.l.b16 %v3882
    %v4112 = vunpack.c.h.b16 %v3882
    %v4113 = vunpack.c.l.b16 %v3883
    %v4114 = vunpack.c.h.b16 %v3883
    %v4115 = vunpack.c.l.b16 %v3884
    %v4116 = vunpack.c.h.b16 %v3884
    %v4117 = vunpack.c.l.b16 %v3885
    %v4118 = vunpack.c.h.b16 %v3885
    %v4119 = vunpack.c.l.b16 %v3886
    %v4120 = vunpack.c.h.b16 %v3886
    %v4121 = vunpack.c.l.b16 %v3887
    %v4122 = vunpack.c.h.b16 %v3887
    %v4123 = vpack.c.b16 %v4003, %v3995
    %v4124 = vpack.c.b16 %v4004, %v3996
    %v4125 = vpack.c.b16 %v4005, %v3997
    %v4126 = vpack.c.b16 %v4006, %v3998
    %v4127 = vpack.c.b16 %v4007, %v3999
    %v4128 = vpack.c.b16 %v4008, %v4000
    %v4129 = vpack.c.b16 %v4009, %v4001
    %v4130 = vpack.c.b16 %v4010, %v4002
    %v4131 = vpack.c.b16 %v4019, %v4011
    %v4132 = vpack.c.b16 %v4020, %v4012
    %v4133 = vpack.c.b16 %v4021, %v4013
    %v4134 = vpack.c.b16 %v4022, %v4014
    %v4135 = vpack.c.b16 %v4023, %v4015
    %v4136 = vpack.c.b16 %v4024, %v4016
    %v4137 = vpack.c.b16 %v4025, %v4017
    %v4138 = vpack.c.b16 %v4026, %v4018
    %v4139 = vpack.c.b16 %v4035, %v4027
    %v4140 = vpack.c.b16 %v4036, %v4028
    %v4141 = vpack.c.b16 %v4037, %v4029
    %v4142 = vpack.c.b16 %v4038, %v4030
    %v4143 = vpack.c.b16 %v4039, %v4031
    %v4144 = vpack.c.b16 %v4040, %v4032
    %v4145 = vpack.c.b16 %v4041, %v4033
    %v4146 = vpack.c.b16 %v4042, %v4034
    %v4147 = vpack.c.b16 %v4051, %v4043
    %v4148 = vpack.c.b16 %v4052, %v4044
    %v4149 = vpack.c.b16 %v4053, %v4045
    %v4150 = vpack.c.b16 %v4054, %v4046
    %v4151 = vpack.c.b16 %v4055, %v4047
    %v4152 = vpack.c.b16 %v4056, %v4048
    %v4153 = vpack.c.b16 %v4057, %v4049
    %v4154 = vpack.c.b16 %v4058, %v4050
    %v4155 = vpack.c.b16 %v4067, %v4059
    %v4156 = vpack.c.b16 %v4068, %v4060
    %v4157 = vpack.c.b16 %v4069, %v4061
    %v4158 = vpack.c.b16 %v4070, %v4062
    %v4159 = vpack.c.b16 %v4071, %v4063
    %v4160 = vpack.c.b16 %v4072, %v4064
    %v4161 = vpack.c.b16 %v4073, %v4065
    %v4162 = vpack.c.b16 %v4074, %v4066
    %v4163 = vpack.c.b16 %v4083, %v4075
    %v4164 = vpack.c.b16 %v4084, %v4076
    %v4165 = vpack.c.b16 %v4085, %v4077
    %v4166 = vpack.c.b16 %v4086, %v4078
    %v4167 = vpack.c.b16 %v4087, %v4079
    %v4168 = vpack.c.b16 %v4088, %v4080
    %v4169 = vpack.c.b16 %v4089, %v4081
    %v4170 = vpack.c.b16 %v4090, %v4082
    %v4171 = vpack.c.b16 %v4099, %v4091
    %v4172 = vpack.c.b16 %v4100, %v4092
    %v4173 = vpack.c.b16 %v4101, %v4093
    %v4174 = vpack.c.b16 %v4102, %v4094
    %v4175 = vpack.c.b16 %v4103, %v4095
    %v4176 = vpack.c.b16 %v4104, %v4096
    %v4177 = vpack.c.b16 %v4105, %v4097
    %v4178 = vpack.c.b16 %v4106, %v4098
    %v4179 = vpack.c.b16 %v4115, %v4107
    %v4180 = vpack.c.b16 %v4116, %v4108
    %v4181 = vpack.c.b16 %v4117, %v4109
    %v4182 = vpack.c.b16 %v4118, %v4110
    %v4183 = vpack.c.b16 %v4119, %v4111
    %v4184 = vpack.c.b16 %v4120, %v4112
    %v4185 = vpack.c.b16 %v4121, %v4113
    %v4186 = vpack.c.b16 %v4122, %v4114
    %4251 = vmatprep.subr.bf16.mxu0 %v4180
    %4252 = vmatpush1.bf16.msra.mxu0 %v4179
    %4253 = vmatprep.subr.bf16.mxu0 %v4172
    %4254 = vmatpush1.bf16.msra.mxu0 %v4171
    %4255 = vmatprep.subr.bf16.mxu0 %v4164
    %4256 = vmatpush1.bf16.msra.mxu0 %v4163
    %4257 = vmatprep.subr.bf16.mxu0 %v4156
    %4258 = vmatpush1.bf16.msra.mxu0 %v4155
    %4259 = vmatprep.subr.bf16.mxu0 %v4148
    %4260 = vmatpush1.bf16.msra.mxu0 %v4147
    %4261 = vmatprep.subr.bf16.mxu0 %v4140
    %4262 = vmatpush1.bf16.msra.mxu0 %v4139
    %4263 = vmatprep.subr.bf16.mxu0 %v4132
    %4264 = vmatpush1.bf16.msra.mxu0 %v4131
    %4265 = vmatprep.subr.bf16.mxu0 %v4124
    %4266 = vmatpush1.bf16.msra.mxu0 %v4123
    %4267 = vmatprep.subr.bf16.mxu0 0
    %4268 = vmatpush2.bf16.msra.mxu0 0
    %4269 = vmatprep.subr.bf16.mxu0 0
    %4270 = vmatpush2.bf16.msra.mxu0 0
    %4271 = vmatprep.subr.bf16.mxu0 0
    %4272 = vmatpush2.bf16.msra.mxu0 0
    %4273 = vmatprep.subr.bf16.mxu0 0
    %4274 = vmatpush2.bf16.msra.mxu0 0
    %4275 = vmatprep.subr.bf16.mxu0 0
    %4276 = vmatpush2.bf16.msra.mxu0 0
    %4277 = vmatprep.subr.bf16.mxu0 0
    %4278 = vmatpush2.bf16.msra.mxu0 0
    %4279 = vmatprep.subr.bf16.mxu0 0
    %4280 = vmatpush2.bf16.msra.mxu0 0
    %4281 = vmatprep.subr.bf16.mxu0 0
    %4282 = vmatpush2.bf16.msra.mxu0 0
    %4283 = vmatprep.mubr.bf16.mxu0 0
    %4284 = vmatmul.mubr.bf16.gmra.mxu0 %v3888
    %v4285 = vpop.f32.mrf.mxu0
    %v4286 = vadd.f32 %v3894, %v4285
    %v4287 = vpop.f32.mrf.mxu0
    %v4288 = vadd.f32 %v3898, %v4287
    %v4289 = vpop.f32.mrf.mxu0
    %v4290 = vadd.f32 %v3894, %v4289
    %v4291 = vpop.f32.mrf.mxu0
    %v4292 = vadd.f32 %v3898, %v4291
    %4293 = vdwg.mxu0
    %4294 = vmatprep.subr.bf16.mxu0 %v4182
    %4295 = vmatpush1.bf16.msra.mxu0 %v4181
    %4296 = vmatprep.subr.bf16.mxu0 %v4174
    %4297 = vmatpush1.bf16.msra.mxu0 %v4173
    %4298 = vmatprep.subr.bf16.mxu0 %v4166
    %4299 = vmatpush1.bf16.msra.mxu0 %v4165
    %4300 = vmatprep.subr.bf16.mxu0 %v4158
    %4301 = vmatpush1.bf16.msra.mxu0 %v4157
    %4302 = vmatprep.subr.bf16.mxu0 %v4150
    %4303 = vmatpush1.bf16.msra.mxu0 %v4149
    %4304 = vmatprep.subr.bf16.mxu0 %v4142
    %4305 = vmatpush1.bf16.msra.mxu0 %v4141
    %4306 = vmatprep.subr.bf16.mxu0 %v4134
    %4307 = vmatpush1.bf16.msra.mxu0 %v4133
    %4308 = vmatprep.subr.bf16.mxu0 %v4126
    %4309 = vmatpush1.bf16.msra.mxu0 %v4125
    %4310 = vmatprep.subr.bf16.mxu0 0
    %4311 = vmatpush2.bf16.msra.mxu0 0
    %4312 = vmatprep.subr.bf16.mxu0 0
    %4313 = vmatpush2.bf16.msra.mxu0 0
    %4314 = vmatprep.subr.bf16.mxu0 0
    %4315 = vmatpush2.bf16.msra.mxu0 0
    %4316 = vmatprep.subr.bf16.mxu0 0
    %4317 = vmatpush2.bf16.msra.mxu0 0
    %4318 = vmatprep.subr.bf16.mxu0 0
    %4319 = vmatpush2.bf16.msra.mxu0 0
    %4320 = vmatprep.subr.bf16.mxu0 0
    %4321 = vmatpush2.bf16.msra.mxu0 0
    %4322 = vmatprep.subr.bf16.mxu0 0
    %4323 = vmatpush2.bf16.msra.mxu0 0
    %4324 = vmatprep.subr.bf16.mxu0 0
    %4325 = vmatpush2.bf16.msra.mxu0 0
    %4326 = vmatprep.mubr.bf16.mxu0 0
    %4327 = vmatmul.mubr.bf16.gmra.mxu0 %v3888
    %v4328 = vpop.f32.mrf.mxu0
    %v4329 = vadd.f32 %v3902, %v4328
    %v4330 = vpop.f32.mrf.mxu0
    %v4331 = vadd.f32 %v3906, %v4330
    %v4332 = vpop.f32.mrf.mxu0
    %v4333 = vadd.f32 %v3902, %v4332
    %v4334 = vpop.f32.mrf.mxu0
    %v4335 = vadd.f32 %v3906, %v4334
    %4336 = vdwg.mxu0
    %4337 = vmatprep.subr.bf16.mxu0 %v4184
    %4338 = vmatpush1.bf16.msra.mxu0 %v4183
    %4339 = vmatprep.subr.bf16.mxu0 %v4176
    %4340 = vmatpush1.bf16.msra.mxu0 %v4175
    %4341 = vmatprep.subr.bf16.mxu0 %v4168
    %4342 = vmatpush1.bf16.msra.mxu0 %v4167
    %4343 = vmatprep.subr.bf16.mxu0 %v4160
    %4344 = vmatpush1.bf16.msra.mxu0 %v4159
    %4345 = vmatprep.subr.bf16.mxu0 %v4152
    %4346 = vmatpush1.bf16.msra.mxu0 %v4151
    %4347 = vmatprep.subr.bf16.mxu0 %v4144
    %4348 = vmatpush1.bf16.msra.mxu0 %v4143
    %4349 = vmatprep.subr.bf16.mxu0 %v4136
    %4350 = vmatpush1.bf16.msra.mxu0 %v4135
    %4351 = vmatprep.subr.bf16.mxu0 %v4128
    %4352 = vmatpush1.bf16.msra.mxu0 %v4127
    %4353 = vmatprep.subr.bf16.mxu0 0
    %4354 = vmatpush2.bf16.msra.mxu0 0
    %4355 = vmatprep.subr.bf16.mxu0 0
    %4356 = vmatpush2.bf16.msra.mxu0 0
    %4357 = vmatprep.subr.bf16.mxu0 0
    %4358 = vmatpush2.bf16.msra.mxu0 0
    %4359 = vmatprep.subr.bf16.mxu0 0
    %4360 = vmatpush2.bf16.msra.mxu0 0
    %4361 = vmatprep.subr.bf16.mxu0 0
    %4362 = vmatpush2.bf16.msra.mxu0 0
    %4363 = vmatprep.subr.bf16.mxu0 0
    %4364 = vmatpush2.bf16.msra.mxu0 0
    %4365 = vmatprep.subr.bf16.mxu0 0
    %4366 = vmatpush2.bf16.msra.mxu0 0
    %4367 = vmatprep.subr.bf16.mxu0 0
    %4368 = vmatpush2.bf16.msra.mxu0 0
    %4369 = vmatprep.mubr.bf16.mxu0 0
    %4370 = vmatmul.mubr.bf16.gmra.mxu0 %v3888
    %v4371 = vpop.f32.mrf.mxu0
    %v4372 = vadd.f32 %v3910, %v4371
    %v4373 = vpop.f32.mrf.mxu0
    %v4374 = vadd.f32 %v3914, %v4373
    %v4375 = vpop.f32.mrf.mxu0
    %v4376 = vadd.f32 %v3910, %v4375
    %v4377 = vpop.f32.mrf.mxu0
    %v4378 = vadd.f32 %v3914, %v4377
    %4379 = vdwg.mxu0
    %4380 = vmatprep.subr.bf16.mxu0 %v4186
    %4381 = vmatpush1.bf16.msra.mxu0 %v4185
    %4382 = vmatprep.subr.bf16.mxu0 %v4178
    %4383 = vmatpush1.bf16.msra.mxu0 %v4177
    %4384 = vmatprep.subr.bf16.mxu0 %v4170
    %4385 = vmatpush1.bf16.msra.mxu0 %v4169
    %4386 = vmatprep.subr.bf16.mxu0 %v4162
    %4387 = vmatpush1.bf16.msra.mxu0 %v4161
    %4388 = vmatprep.subr.bf16.mxu0 %v4154
    %4389 = vmatpush1.bf16.msra.mxu0 %v4153
    %4390 = vmatprep.subr.bf16.mxu0 %v4146
    %4391 = vmatpush1.bf16.msra.mxu0 %v4145
    %4392 = vmatprep.subr.bf16.mxu0 %v4138
    %4393 = vmatpush1.bf16.msra.mxu0 %v4137
    %4394 = vmatprep.subr.bf16.mxu0 %v4130
    %4395 = vmatpush1.bf16.msra.mxu0 %v4129
    %4396 = vmatprep.subr.bf16.mxu0 0
    %4397 = vmatpush2.bf16.msra.mxu0 0
    %4398 = vmatprep.subr.bf16.mxu0 0
    %4399 = vmatpush2.bf16.msra.mxu0 0
    %4400 = vmatprep.subr.bf16.mxu0 0
    %4401 = vmatpush2.bf16.msra.mxu0 0
    %4402 = vmatprep.subr.bf16.mxu0 0
    %4403 = vmatpush2.bf16.msra.mxu0 0
    %4404 = vmatprep.subr.bf16.mxu0 0
    %4405 = vmatpush2.bf16.msra.mxu0 0
    %4406 = vmatprep.subr.bf16.mxu0 0
    %4407 = vmatpush2.bf16.msra.mxu0 0
    %4408 = vmatprep.subr.bf16.mxu0 0
    %4409 = vmatpush2.bf16.msra.mxu0 0
    %4410 = vmatprep.subr.bf16.mxu0 0
    %4411 = vmatpush2.bf16.msra.mxu0 0
    %4412 = vmatprep.mubr.bf16.mxu0 0
    %4413 = vmatmul.mubr.bf16.gmra.mxu0 %v3888
    %v4414 = vpop.f32.mrf.mxu0
    %v4415 = vadd.f32 %v3918, %v4414
    %v4416 = vpop.f32.mrf.mxu0
    %v4417 = vadd.f32 %v3922, %v4416
    %v4418 = vpop.f32.mrf.mxu0
    %v4419 = vadd.f32 %v3918, %v4418
    %v4420 = vpop.f32.mrf.mxu0
    %v4421 = vadd.f32 %v3922, %v4420
    %4422 = vdwg.mxu0
    %v4423 = vld [vmem:[%s21] sm:$0xff]
    %v4424 = vld [vmem:[%s22] sm:$0xff]
    %v4425 = vadd.f32 %v4286, %v4290
    %v4426 = vrot.slane %v4425, 4
    %v4427 = vadd.f32 %v4425, %v4426
    %v4428 = vrot.slane %v4427, 2
    %v4429 = vadd.f32 %v4427, %v4428
    %v4430 = vrot.slane %v4429, 1
    %v4431 = vadd.f32 %v4429, %v4430
    %v4432 = vadd.f32 %v4288, %v4292
    %v4433 = vrot.slane %v4432, 4
    %v4434 = vadd.f32 %v4432, %v4433
    %v4435 = vrot.slane %v4434, 2
    %v4436 = vadd.f32 %v4434, %v4435
    %v4437 = vrot.slane %v4436, 1
    %v4438 = vadd.f32 %v4436, %v4437
    %v4439 = vadd.f32 %v4329, %v4333
    %v4440 = vrot.slane %v4439, 4
    %v4441 = vadd.f32 %v4439, %v4440
    %v4442 = vrot.slane %v4441, 2
    %v4443 = vadd.f32 %v4441, %v4442
    %v4444 = vrot.slane %v4443, 1
    %v4445 = vadd.f32 %v4443, %v4444
    %v4446 = vadd.f32 %v4331, %v4335
    %v4447 = vrot.slane %v4446, 4
    %v4448 = vadd.f32 %v4446, %v4447
    %v4449 = vrot.slane %v4448, 2
    %v4450 = vadd.f32 %v4448, %v4449
    %v4451 = vrot.slane %v4450, 1
    %v4452 = vadd.f32 %v4450, %v4451
    %v4453 = vadd.f32 %v4372, %v4376
    %v4454 = vrot.slane %v4453, 4
    %v4455 = vadd.f32 %v4453, %v4454
    %v4456 = vrot.slane %v4455, 2
    %v4457 = vadd.f32 %v4455, %v4456
    %v4458 = vrot.slane %v4457, 1
    %v4459 = vadd.f32 %v4457, %v4458
    %v4460 = vadd.f32 %v4374, %v4378
    %v4461 = vrot.slane %v4460, 4
    %v4462 = vadd.f32 %v4460, %v4461
    %v4463 = vrot.slane %v4462, 2
    %v4464 = vadd.f32 %v4462, %v4463
    %v4465 = vrot.slane %v4464, 1
    %v4466 = vadd.f32 %v4464, %v4465
    %v4467 = vadd.f32 %v4415, %v4419
    %v4468 = vrot.slane %v4467, 4
    %v4469 = vadd.f32 %v4467, %v4468
    %v4470 = vrot.slane %v4469, 2
    %v4471 = vadd.f32 %v4469, %v4470
    %v4472 = vrot.slane %v4471, 1
    %v4473 = vadd.f32 %v4471, %v4472
    %v4474 = vadd.f32 %v4417, %v4421
    %v4475 = vrot.slane %v4474, 4
    %v4476 = vadd.f32 %v4474, %v4475
    %v4477 = vrot.slane %v4476, 2
    %v4478 = vadd.f32 %v4476, %v4477
    %v4479 = vrot.slane %v4478, 1
    %v4480 = vadd.f32 %v4478, %v4479
    %v4481 = vmul.f32 %v4431, %v3788
    %v4482 = vmul.f32 %v4438, %v3788
    %v4483 = vmul.f32 %v4445, %v3788
    %v4484 = vmul.f32 %v4452, %v3788
    %v4485 = vmul.f32 %v4459, %v3788
    %v4486 = vmul.f32 %v4466, %v3788
    %v4487 = vmul.f32 %v4473, %v3788
    %v4488 = vmul.f32 %v4480, %v3788
    %v4489 = vsub.f32 %v4286, %v4481
    %v4490 = vsub.f32 %v4288, %v4482
    %v4491 = vsub.f32 %v4329, %v4483
    %v4492 = vsub.f32 %v4331, %v4484
    %v4493 = vsub.f32 %v4372, %v4485
    %v4494 = vsub.f32 %v4374, %v4486
    %v4495 = vsub.f32 %v4415, %v4487
    %v4496 = vsub.f32 %v4417, %v4488
    %v4497 = vsub.f32 %v4290, %v4481
    %v4498 = vsub.f32 %v4292, %v4482
    %v4499 = vsub.f32 %v4333, %v4483
    %v4500 = vsub.f32 %v4335, %v4484
    %v4501 = vsub.f32 %v4376, %v4485
    %v4502 = vsub.f32 %v4378, %v4486
    %v4503 = vsub.f32 %v4419, %v4487
    %v4504 = vsub.f32 %v4421, %v4488
    %v4505 = vmul.f32 %v4489, %v4489
    %v4506 = vmul.f32 %v4490, %v4490
    %v4507 = vmul.f32 %v4491, %v4491
    %v4508 = vmul.f32 %v4492, %v4492
    %v4509 = vmul.f32 %v4493, %v4493
    %v4510 = vmul.f32 %v4494, %v4494
    %v4511 = vmul.f32 %v4495, %v4495
    %v4512 = vmul.f32 %v4496, %v4496
    %v4513 = vmul.f32 %v4497, %v4497
    %v4514 = vmul.f32 %v4498, %v4498
    %v4515 = vmul.f32 %v4499, %v4499
    %v4516 = vmul.f32 %v4500, %v4500
    %v4517 = vmul.f32 %v4501, %v4501
    %v4518 = vmul.f32 %v4502, %v4502
    %v4519 = vmul.f32 %v4503, %v4503
    %v4520 = vmul.f32 %v4504, %v4504
    %v4521 = vadd.f32 %v4505, %v4513
    %v4522 = vrot.slane %v4521, 4
    %v4523 = vadd.f32 %v4521, %v4522
    %v4524 = vrot.slane %v4523, 2
    %v4525 = vadd.f32 %v4523, %v4524
    %v4526 = vrot.slane %v4525, 1
    %v4527 = vadd.f32 %v4525, %v4526
    %v4528 = vadd.f32 %v4506, %v4514
    %v4529 = vrot.slane %v4528, 4
    %v4530 = vadd.f32 %v4528, %v4529
    %v4531 = vrot.slane %v4530, 2
    %v4532 = vadd.f32 %v4530, %v4531
    %v4533 = vrot.slane %v4532, 1
    %v4534 = vadd.f32 %v4532, %v4533
    %v4535 = vadd.f32 %v4507, %v4515
    %v4536 = vrot.slane %v4535, 4
    %v4537 = vadd.f32 %v4535, %v4536
    %v4538 = vrot.slane %v4537, 2
    %v4539 = vadd.f32 %v4537, %v4538
    %v4540 = vrot.slane %v4539, 1
    %v4541 = vadd.f32 %v4539, %v4540
    %v4542 = vadd.f32 %v4508, %v4516
    %v4543 = vrot.slane %v4542, 4
    %v4544 = vadd.f32 %v4542, %v4543
    %v4545 = vrot.slane %v4544, 2
    %v4546 = vadd.f32 %v4544, %v4545
    %v4547 = vrot.slane %v4546, 1
    %v4548 = vadd.f32 %v4546, %v4547
    %v4549 = vadd.f32 %v4509, %v4517
    %v4550 = vrot.slane %v4549, 4
    %v4551 = vadd.f32 %v4549, %v4550
    %v4552 = vrot.slane %v4551, 2
    %v4553 = vadd.f32 %v4551, %v4552
    %v4554 = vrot.slane %v4553, 1
    %v4555 = vadd.f32 %v4553, %v4554
    %v4556 = vadd.f32 %v4510, %v4518
    %v4557 = vrot.slane %v4556, 4
    %v4558 = vadd.f32 %v4556, %v4557
    %v4559 = vrot.slane %v4558, 2
    %v4560 = vadd.f32 %v4558, %v4559
    %v4561 = vrot.slane %v4560, 1
    %v4562 = vadd.f32 %v4560, %v4561
    %v4563 = vadd.f32 %v4511, %v4519
    %v4564 = vrot.slane %v4563, 4
    %v4565 = vadd.f32 %v4563, %v4564
    %v4566 = vrot.slane %v4565, 2
    %v4567 = vadd.f32 %v4565, %v4566
    %v4568 = vrot.slane %v4567, 1
    %v4569 = vadd.f32 %v4567, %v4568
    %v4570 = vadd.f32 %v4512, %v4520
    %v4571 = vrot.slane %v4570, 4
    %v4572 = vadd.f32 %v4570, %v4571
    %v4573 = vrot.slane %v4572, 2
    %v4574 = vadd.f32 %v4572, %v4573
    %v4575 = vrot.slane %v4574, 1
    %v4576 = vadd.f32 %v4574, %v4575
    %v4577 = vmul.f32 %v4527, %v3788
    %v4578 = vmul.f32 %v4534, %v3788
    %v4579 = vmul.f32 %v4541, %v3788
    %v4580 = vmul.f32 %v4548, %v3788
    %v4581 = vmul.f32 %v4555, %v3788
    %v4582 = vmul.f32 %v4562, %v3788
    %v4583 = vmul.f32 %v4569, %v3788
    %v4584 = vmul.f32 %v4576, %v3788
    %v4585 = vadd.f32 %v4577, 1e-05
    %v4586 = vadd.f32 %v4578, 1e-05
    %v4587 = vadd.f32 %v4579, 1e-05
    %v4588 = vadd.f32 %v4580, 1e-05
    %v4589 = vadd.f32 %v4581, 1e-05
    %v4590 = vadd.f32 %v4582, 1e-05
    %v4591 = vadd.f32 %v4583, 1e-05
    %v4592 = vadd.f32 %v4584, 1e-05
    %v4593 = vrsqrt.pop %v4585
    %v4594 = vrsqrt.pop %v4586
    %v4595 = vrsqrt.pop %v4587
    %v4596 = vrsqrt.pop %v4588
    %v4597 = vrsqrt.pop %v4589
    %v4598 = vrsqrt.pop %v4590
    %v4599 = vrsqrt.pop %v4591
    %v4600 = vrsqrt.pop %v4592
    %v4601 = vmul.f32 %v4489, %v4593
    %v4602 = vmul.f32 %v4490, %v4594
    %v4603 = vmul.f32 %v4491, %v4595
    %v4604 = vmul.f32 %v4492, %v4596
    %v4605 = vmul.f32 %v4493, %v4597
    %v4606 = vmul.f32 %v4494, %v4598
    %v4607 = vmul.f32 %v4495, %v4599
    %v4608 = vmul.f32 %v4496, %v4600
    %v4609 = vmul.f32 %v4497, %v4593
    %v4610 = vmul.f32 %v4498, %v4594
    %v4611 = vmul.f32 %v4499, %v4595
    %v4612 = vmul.f32 %v4500, %v4596
    %v4613 = vmul.f32 %v4501, %v4597
    %v4614 = vmul.f32 %v4502, %v4598
    %v4615 = vmul.f32 %v4503, %v4599
    %v4616 = vmul.f32 %v4504, %v4600
    %v4618 = vlaneseq
    %v4619 = vshrl.u32 %v4618, 7
    %v4620 = vsub.s32 0, %v4619
    %v4621 = vrot.slane %v4423, %v4620
    %v4622 = vlaneseq
    %v4623 = vshrl.u32 %v4622, 7
    %v4624 = vsub.s32 1, %v4623
    %v4625 = vrot.slane %v4423, %v4624
    %v4626 = vlaneseq
    %v4627 = vshrl.u32 %v4626, 7
    %v4628 = vsub.s32 2, %v4627
    %v4629 = vrot.slane %v4423, %v4628
    %v4630 = vlaneseq
    %v4631 = vshrl.u32 %v4630, 7
    %v4632 = vsub.s32 3, %v4631
    %v4633 = vrot.slane %v4423, %v4632
    %v4634 = vlaneseq
    %v4635 = vshrl.u32 %v4634, 7
    %v4636 = vsub.s32 4, %v4635
    %v4637 = vrot.slane %v4423, %v4636
    %v4638 = vlaneseq
    %v4639 = vshrl.u32 %v4638, 7
    %v4640 = vsub.s32 5, %v4639
    %v4641 = vrot.slane %v4423, %v4640
    %v4642 = vlaneseq
    %v4643 = vshrl.u32 %v4642, 7
    %v4644 = vsub.s32 6, %v4643
    %v4645 = vrot.slane %v4423, %v4644
    %v4646 = vlaneseq
    %v4647 = vshrl.u32 %v4646, 7
    %v4648 = vsub.s32 7, %v4647
    %v4649 = vrot.slane %v4423, %v4648
    %v4658 = vmul.f32 %v4601, %v4621
    %v4659 = vmul.f32 %v4602, %v4625
    %v4660 = vmul.f32 %v4603, %v4629
    %v4661 = vmul.f32 %v4604, %v4633
    %v4662 = vmul.f32 %v4605, %v4637
    %v4663 = vmul.f32 %v4606, %v4641
    %v4664 = vmul.f32 %v4607, %v4645
    %v4665 = vmul.f32 %v4608, %v4649
    %v4666 = vmul.f32 %v4609, %v4621
    %v4667 = vmul.f32 %v4610, %v4625
    %v4668 = vmul.f32 %v4611, %v4629
    %v4669 = vmul.f32 %v4612, %v4633
    %v4670 = vmul.f32 %v4613, %v4637
    %v4671 = vmul.f32 %v4614, %v4641
    %v4672 = vmul.f32 %v4615, %v4645
    %v4673 = vmul.f32 %v4616, %v4649
    %v4675 = vlaneseq
    %v4676 = vshrl.u32 %v4675, 7
    %v4677 = vsub.s32 0, %v4676
    %v4678 = vrot.slane %v4424, %v4677
    %v4679 = vlaneseq
    %v4680 = vshrl.u32 %v4679, 7
    %v4681 = vsub.s32 1, %v4680
    %v4682 = vrot.slane %v4424, %v4681
    %v4683 = vlaneseq
    %v4684 = vshrl.u32 %v4683, 7
    %v4685 = vsub.s32 2, %v4684
    %v4686 = vrot.slane %v4424, %v4685
    %v4687 = vlaneseq
    %v4688 = vshrl.u32 %v4687, 7
    %v4689 = vsub.s32 3, %v4688
    %v4690 = vrot.slane %v4424, %v4689
    %v4691 = vlaneseq
    %v4692 = vshrl.u32 %v4691, 7
    %v4693 = vsub.s32 4, %v4692
    %v4694 = vrot.slane %v4424, %v4693
    %v4695 = vlaneseq
    %v4696 = vshrl.u32 %v4695, 7
    %v4697 = vsub.s32 5, %v4696
    %v4698 = vrot.slane %v4424, %v4697
    %v4699 = vlaneseq
    %v4700 = vshrl.u32 %v4699, 7
    %v4701 = vsub.s32 6, %v4700
    %v4702 = vrot.slane %v4424, %v4701
    %v4703 = vlaneseq
    %v4704 = vshrl.u32 %v4703, 7
    %v4705 = vsub.s32 7, %v4704
    %v4706 = vrot.slane %v4424, %v4705
    %v4715 = vadd.f32 %v4658, %v4678
    %v4716 = vadd.f32 %v4659, %v4682
    %v4717 = vadd.f32 %v4660, %v4686
    %v4718 = vadd.f32 %v4661, %v4690
    %v4719 = vadd.f32 %v4662, %v4694
    %v4720 = vadd.f32 %v4663, %v4698
    %v4721 = vadd.f32 %v4664, %v4702
    %v4722 = vadd.f32 %v4665, %v4706
    %v4723 = vadd.f32 %v4666, %v4678
    %v4724 = vadd.f32 %v4667, %v4682
    %v4725 = vadd.f32 %v4668, %v4686
    %v4726 = vadd.f32 %v4669, %v4690
    %v4727 = vadd.f32 %v4670, %v4694
    %v4728 = vadd.f32 %v4671, %v4698
    %v4729 = vadd.f32 %v4672, %v4702
    %v4730 = vadd.f32 %v4673, %v4706
    %v4731 = vmax.f32 %v4715, 0.0
    %v4732 = vmax.f32 %v4716, 0.0
    %v4733 = vmax.f32 %v4717, 0.0
    %v4734 = vmax.f32 %v4718, 0.0
    %v4735 = vmax.f32 %v4719, 0.0
    %v4736 = vmax.f32 %v4720, 0.0
    %v4737 = vmax.f32 %v4721, 0.0
    %v4738 = vmax.f32 %v4722, 0.0
    %v4739 = vmax.f32 %v4723, 0.0
    %v4740 = vmax.f32 %v4724, 0.0
    %v4741 = vmax.f32 %v4725, 0.0
    %v4742 = vmax.f32 %v4726, 0.0
    %v4743 = vmax.f32 %v4727, 0.0
    %v4744 = vmax.f32 %v4728, 0.0
    %v4745 = vmax.f32 %v4729, 0.0
    %v4746 = vmax.f32 %v4730, 0.0
    %v4747 = vld [vmem:[#allocation28] sm:$0xff]
    %v4748 = vld [vmem:[#allocation28 + $0x8] sm:$0xff]
    %v4749 = vld [vmem:[#allocation28 + $0x10] sm:$0xff]
    %v4750 = vld [vmem:[#allocation28 + $0x18] sm:$0xff]
    %v4751 = vld [vmem:[#allocation28 + $0x20] sm:$0xff]
    %v4752 = vld [vmem:[#allocation28 + $0x28] sm:$0xff]
    %v4753 = vld [vmem:[#allocation28 + $0x30] sm:$0xff]
    %v4754 = vld [vmem:[#allocation28 + $0x38] sm:$0xff]
    %v4755 = vld [vmem:[#allocation28 + $0x40] sm:$0xff]
    %v4756 = vld [vmem:[#allocation28 + $0x48] sm:$0xff]
    %v4757 = vld [vmem:[#allocation28 + $0x50] sm:$0xff]
    %v4758 = vld [vmem:[#allocation28 + $0x58] sm:$0xff]
    %v4759 = vld [vmem:[#allocation28 + $0x60] sm:$0xff]
    %v4760 = vld [vmem:[#allocation28 + $0x68] sm:$0xff]
    %v4761 = vld [vmem:[#allocation28 + $0x70] sm:$0xff]
    %v4762 = vld [vmem:[#allocation28 + $0x78] sm:$0xff]
    %v4763 = vld [vmem:[#allocation28 + $0x80] sm:$0xff]
    %v4764 = vld [vmem:[#allocation28 + $0x88] sm:$0xff]
    %v4765 = vld [vmem:[#allocation28 + $0x90] sm:$0xff]
    %v4766 = vld [vmem:[#allocation28 + $0x98] sm:$0xff]
    %v4767 = vld [vmem:[#allocation28 + $0xa0] sm:$0xff]
    %v4768 = vld [vmem:[#allocation28 + $0xa8] sm:$0xff]
    %v4769 = vld [vmem:[#allocation28 + $0xb0] sm:$0xff]
    %v4770 = vld [vmem:[#allocation28 + $0xb8] sm:$0xff]
    %v4771 = vld [vmem:[#allocation28 + $0xc0] sm:$0xff]
    %v4772 = vld [vmem:[#allocation28 + $0xc8] sm:$0xff]
    %v4773 = vld [vmem:[#allocation28 + $0xd0] sm:$0xff]
    %v4774 = vld [vmem:[#allocation28 + $0xd8] sm:$0xff]
    %v4775 = vld [vmem:[#allocation28 + $0xe0] sm:$0xff]
    %v4776 = vld [vmem:[#allocation28 + $0xe8] sm:$0xff]
    %v4777 = vld [vmem:[#allocation28 + $0xf0] sm:$0xff]
    %v4778 = vld [vmem:[#allocation28 + $0xf8] sm:$0xff]
    %v4779 = vld [vmem:[#allocation28 + $0x100] sm:$0xff]
    %v4780 = vld [vmem:[#allocation28 + $0x108] sm:$0xff]
    %v4781 = vld [vmem:[#allocation28 + $0x110] sm:$0xff]
    %v4782 = vld [vmem:[#allocation28 + $0x118] sm:$0xff]
    %v4783 = vld [vmem:[#allocation28 + $0x120] sm:$0xff]
    %v4784 = vld [vmem:[#allocation28 + $0x128] sm:$0xff]
    %v4785 = vld [vmem:[#allocation28 + $0x130] sm:$0xff]
    %v4786 = vld [vmem:[#allocation28 + $0x138] sm:$0xff]
    %v4787 = vld [vmem:[#allocation28 + $0x140] sm:$0xff]
    %v4788 = vld [vmem:[#allocation28 + $0x148] sm:$0xff]
    %v4789 = vld [vmem:[#allocation28 + $0x150] sm:$0xff]
    %v4790 = vld [vmem:[#allocation28 + $0x158] sm:$0xff]
    %v4791 = vld [vmem:[#allocation28 + $0x160] sm:$0xff]
    %v4792 = vld [vmem:[#allocation28 + $0x168] sm:$0xff]
    %v4793 = vld [vmem:[#allocation28 + $0x170] sm:$0xff]
    %v4794 = vld [vmem:[#allocation28 + $0x178] sm:$0xff]
    %v4795 = vld [vmem:[#allocation28 + $0x180] sm:$0xff]
    %v4796 = vld [vmem:[#allocation28 + $0x188] sm:$0xff]
    %v4797 = vld [vmem:[#allocation28 + $0x190] sm:$0xff]
    %v4798 = vld [vmem:[#allocation28 + $0x198] sm:$0xff]
    %v4799 = vld [vmem:[#allocation28 + $0x1a0] sm:$0xff]
    %v4800 = vld [vmem:[#allocation28 + $0x1a8] sm:$0xff]
    %v4801 = vld [vmem:[#allocation28 + $0x1b0] sm:$0xff]
    %v4802 = vld [vmem:[#allocation28 + $0x1b8] sm:$0xff]
    %v4803 = vld [vmem:[#allocation28 + $0x1c0] sm:$0xff]
    %v4804 = vld [vmem:[#allocation28 + $0x1c8] sm:$0xff]
    %v4805 = vld [vmem:[#allocation28 + $0x1d0] sm:$0xff]
    %v4806 = vld [vmem:[#allocation28 + $0x1d8] sm:$0xff]
    %v4807 = vld [vmem:[#allocation28 + $0x1e0] sm:$0xff]
    %v4808 = vld [vmem:[#allocation28 + $0x1e8] sm:$0xff]
    %v4809 = vld [vmem:[#allocation28 + $0x1f0] sm:$0xff]
    %v4810 = vld [vmem:[#allocation28 + $0x1f8] sm:$0xff]
    %v4811 = vld [vmem:[#allocation28 + $0x200] sm:$0xff]
    %v4812 = vld [vmem:[#allocation28 + $0x208] sm:$0xff]
    %v4813 = vld [vmem:[#allocation28 + $0x210] sm:$0xff]
    %v4814 = vld [vmem:[#allocation28 + $0x218] sm:$0xff]
    %v4815 = vld [vmem:[#allocation28 + $0x220] sm:$0xff]
    %v4816 = vld [vmem:[#allocation28 + $0x228] sm:$0xff]
    %v4817 = vld [vmem:[#allocation28 + $0x230] sm:$0xff]
    %v4818 = vld [vmem:[#allocation28 + $0x238] sm:$0xff]
    %v4819 = vld [vmem:[#allocation28 + $0x240] sm:$0xff]
    %v4820 = vld [vmem:[#allocation28 + $0x248] sm:$0xff]
    %v4821 = vld [vmem:[#allocation28 + $0x250] sm:$0xff]
    %v4822 = vld [vmem:[#allocation28 + $0x258] sm:$0xff]
    %v4823 = vld [vmem:[#allocation28 + $0x260] sm:$0xff]
    %v4824 = vld [vmem:[#allocation28 + $0x268] sm:$0xff]
    %v4825 = vld [vmem:[#allocation28 + $0x270] sm:$0xff]
    %v4826 = vld [vmem:[#allocation28 + $0x278] sm:$0xff]
    %v4827 = vld [vmem:[#allocation28 + $0x280] sm:$0xff]
    %v4828 = vld [vmem:[#allocation28 + $0x288] sm:$0xff]
    %v4829 = vld [vmem:[#allocation28 + $0x290] sm:$0xff]
    %v4830 = vld [vmem:[#allocation28 + $0x298] sm:$0xff]
    %v4831 = vld [vmem:[#allocation28 + $0x2a0] sm:$0xff]
    %v4832 = vld [vmem:[#allocation28 + $0x2a8] sm:$0xff]
    %v4833 = vld [vmem:[#allocation28 + $0x2b0] sm:$0xff]
    %v4834 = vld [vmem:[#allocation28 + $0x2b8] sm:$0xff]
    %v4835 = vld [vmem:[#allocation28 + $0x2c0] sm:$0xff]
    %v4836 = vld [vmem:[#allocation28 + $0x2c8] sm:$0xff]
    %v4837 = vld [vmem:[#allocation28 + $0x2d0] sm:$0xff]
    %v4838 = vld [vmem:[#allocation28 + $0x2d8] sm:$0xff]
    %v4839 = vld [vmem:[#allocation28 + $0x2e0] sm:$0xff]
    %v4840 = vld [vmem:[#allocation28 + $0x2e8] sm:$0xff]
    %v4841 = vld [vmem:[#allocation28 + $0x2f0] sm:$0xff]
    %v4842 = vld [vmem:[#allocation28 + $0x2f8] sm:$0xff]
    %v4843 = vld [vmem:[#allocation28 + $0x300] sm:$0xff]
    %v4844 = vld [vmem:[#allocation28 + $0x308] sm:$0xff]
    %v4845 = vld [vmem:[#allocation28 + $0x310] sm:$0xff]
    %v4846 = vld [vmem:[#allocation28 + $0x318] sm:$0xff]
    %v4847 = vld [vmem:[#allocation28 + $0x320] sm:$0xff]
    %v4848 = vld [vmem:[#allocation28 + $0x328] sm:$0xff]
    %v4849 = vld [vmem:[#allocation28 + $0x330] sm:$0xff]
    %v4850 = vld [vmem:[#allocation28 + $0x338] sm:$0xff]
    %v4851 = vld [vmem:[#allocation28 + $0x340] sm:$0xff]
    %v4852 = vld [vmem:[#allocation28 + $0x348] sm:$0xff]
    %v4853 = vld [vmem:[#allocation28 + $0x350] sm:$0xff]
    %v4854 = vld [vmem:[#allocation28 + $0x358] sm:$0xff]
    %v4855 = vld [vmem:[#allocation28 + $0x360] sm:$0xff]
    %v4856 = vld [vmem:[#allocation28 + $0x368] sm:$0xff]
    %v4857 = vld [vmem:[#allocation28 + $0x370] sm:$0xff]
    %v4858 = vld [vmem:[#allocation28 + $0x378] sm:$0xff]
    %v4859 = vld [vmem:[#allocation28 + $0x380] sm:$0xff]
    %v4860 = vld [vmem:[#allocation28 + $0x388] sm:$0xff]
    %v4861 = vld [vmem:[#allocation28 + $0x390] sm:$0xff]
    %v4862 = vld [vmem:[#allocation28 + $0x398] sm:$0xff]
    %v4863 = vld [vmem:[#allocation28 + $0x3a0] sm:$0xff]
    %v4864 = vld [vmem:[#allocation28 + $0x3a8] sm:$0xff]
    %v4865 = vld [vmem:[#allocation28 + $0x3b0] sm:$0xff]
    %v4866 = vld [vmem:[#allocation28 + $0x3b8] sm:$0xff]
    %v4867 = vld [vmem:[#allocation28 + $0x3c0] sm:$0xff]
    %v4868 = vld [vmem:[#allocation28 + $0x3c8] sm:$0xff]
    %v4869 = vld [vmem:[#allocation28 + $0x3d0] sm:$0xff]
    %v4870 = vld [vmem:[#allocation28 + $0x3d8] sm:$0xff]
    %v4871 = vld [vmem:[#allocation28 + $0x3e0] sm:$0xff]
    %v4872 = vld [vmem:[#allocation28 + $0x3e8] sm:$0xff]
    %v4873 = vld [vmem:[#allocation28 + $0x3f0] sm:$0xff]
    %v4874 = vld [vmem:[#allocation28 + $0x3f8] sm:$0xff]
    %v4875 = vpack.c.bf16 %v4739, %v4731
    %v4876 = vpack.c.bf16 %v4740, %v4732
    %v4877 = vpack.c.bf16 %v4741, %v4733
    %v4878 = vpack.c.bf16 %v4742, %v4734
    %v4879 = vpack.c.bf16 %v4743, %v4735
    %v4880 = vpack.c.bf16 %v4744, %v4736
    %v4881 = vpack.c.bf16 %v4745, %v4737
    %v4882 = vpack.c.bf16 %v4746, %v4738
    %v4883 = vld [vmem:[%s24] sm:$0x3]
    %v4885 = vlaneseq
    %v4886 = vshrl.u32 %v4885, 7
    %v4887 = vsub.s32 0, %v4886
    %v4888 = vrot.slane %v4883, %v4887
    %v4889 = vlaneseq
    %v4890 = vshrl.u32 %v4889, 7
    %v4891 = vsub.s32 1, %v4890
    %v4892 = vrot.slane %v4883, %v4891
    %v5023 = vunpack.c.l.b16 %v4747
    %v5024 = vunpack.c.h.b16 %v4747
    %v5025 = vunpack.c.l.b16 %v4748
    %v5026 = vunpack.c.h.b16 %v4748
    %v5027 = vunpack.c.l.b16 %v4749
    %v5028 = vunpack.c.h.b16 %v4749
    %v5029 = vunpack.c.l.b16 %v4750
    %v5030 = vunpack.c.h.b16 %v4750
    %v5031 = vunpack.c.l.b16 %v4751
    %v5032 = vunpack.c.h.b16 %v4751
    %v5033 = vunpack.c.l.b16 %v4752
    %v5034 = vunpack.c.h.b16 %v4752
    %v5035 = vunpack.c.l.b16 %v4753
    %v5036 = vunpack.c.h.b16 %v4753
    %v5037 = vunpack.c.l.b16 %v4754
    %v5038 = vunpack.c.h.b16 %v4754
    %v5039 = vunpack.c.l.b16 %v4755
    %v5040 = vunpack.c.h.b16 %v4755
    %v5041 = vunpack.c.l.b16 %v4756
    %v5042 = vunpack.c.h.b16 %v4756
    %v5043 = vunpack.c.l.b16 %v4757
    %v5044 = vunpack.c.h.b16 %v4757
    %v5045 = vunpack.c.l.b16 %v4758
    %v5046 = vunpack.c.h.b16 %v4758
    %v5047 = vunpack.c.l.b16 %v4759
    %v5048 = vunpack.c.h.b16 %v4759
    %v5049 = vunpack.c.l.b16 %v4760
    %v5050 = vunpack.c.h.b16 %v4760
    %v5051 = vunpack.c.l.b16 %v4761
    %v5052 = vunpack.c.h.b16 %v4761
    %v5053 = vunpack.c.l.b16 %v4762
    %v5054 = vunpack.c.h.b16 %v4762
    %v5055 = vunpack.c.l.b16 %v4763
    %v5056 = vunpack.c.h.b16 %v4763
    %v5057 = vunpack.c.l.b16 %v4764
    %v5058 = vunpack.c.h.b16 %v4764
    %v5059 = vunpack.c.l.b16 %v4765
    %v5060 = vunpack.c.h.b16 %v4765
    %v5061 = vunpack.c.l.b16 %v4766
    %v5062 = vunpack.c.h.b16 %v4766
    %v5063 = vunpack.c.l.b16 %v4767
    %v5064 = vunpack.c.h.b16 %v4767
    %v5065 = vunpack.c.l.b16 %v4768
    %v5066 = vunpack.c.h.b16 %v4768
    %v5067 = vunpack.c.l.b16 %v4769
    %v5068 = vunpack.c.h.b16 %v4769
    %v5069 = vunpack.c.l.b16 %v4770
    %v5070 = vunpack.c.h.b16 %v4770
    %v5071 = vunpack.c.l.b16 %v4771
    %v5072 = vunpack.c.h.b16 %v4771
    %v5073 = vunpack.c.l.b16 %v4772
    %v5074 = vunpack.c.h.b16 %v4772
    %v5075 = vunpack.c.l.b16 %v4773
    %v5076 = vunpack.c.h.b16 %v4773
    %v5077 = vunpack.c.l.b16 %v4774
    %v5078 = vunpack.c.h.b16 %v4774
    %v5079 = vunpack.c.l.b16 %v4775
    %v5080 = vunpack.c.h.b16 %v4775
    %v5081 = vunpack.c.l.b16 %v4776
    %v5082 = vunpack.c.h.b16 %v4776
    %v5083 = vunpack.c.l.b16 %v4777
    %v5084 = vunpack.c.h.b16 %v4777
    %v5085 = vunpack.c.l.b16 %v4778
    %v5086 = vunpack.c.h.b16 %v4778
    %v5087 = vunpack.c.l.b16 %v4779
    %v5088 = vunpack.c.h.b16 %v4779
    %v5089 = vunpack.c.l.b16 %v4780
    %v5090 = vunpack.c.h.b16 %v4780
    %v5091 = vunpack.c.l.b16 %v4781
    %v5092 = vunpack.c.h.b16 %v4781
    %v5093 = vunpack.c.l.b16 %v4782
    %v5094 = vunpack.c.h.b16 %v4782
    %v5095 = vunpack.c.l.b16 %v4783
    %v5096 = vunpack.c.h.b16 %v4783
    %v5097 = vunpack.c.l.b16 %v4784
    %v5098 = vunpack.c.h.b16 %v4784
    %v5099 = vunpack.c.l.b16 %v4785
    %v5100 = vunpack.c.h.b16 %v4785
    %v5101 = vunpack.c.l.b16 %v4786
    %v5102 = vunpack.c.h.b16 %v4786
    %v5103 = vunpack.c.l.b16 %v4787
    %v5104 = vunpack.c.h.b16 %v4787
    %v5105 = vunpack.c.l.b16 %v4788
    %v5106 = vunpack.c.h.b16 %v4788
    %v5107 = vunpack.c.l.b16 %v4789
    %v5108 = vunpack.c.h.b16 %v4789
    %v5109 = vunpack.c.l.b16 %v4790
    %v5110 = vunpack.c.h.b16 %v4790
    %v5111 = vunpack.c.l.b16 %v4791
    %v5112 = vunpack.c.h.b16 %v4791
    %v5113 = vunpack.c.l.b16 %v4792
    %v5114 = vunpack.c.h.b16 %v4792
    %v5115 = vunpack.c.l.b16 %v4793
    %v5116 = vunpack.c.h.b16 %v4793
    %v5117 = vunpack.c.l.b16 %v4794
    %v5118 = vunpack.c.h.b16 %v4794
    %v5119 = vunpack.c.l.b16 %v4795
    %v5120 = vunpack.c.h.b16 %v4795
    %v5121 = vunpack.c.l.b16 %v4796
    %v5122 = vunpack.c.h.b16 %v4796
    %v5123 = vunpack.c.l.b16 %v4797
    %v5124 = vunpack.c.h.b16 %v4797
    %v5125 = vunpack.c.l.b16 %v4798
    %v5126 = vunpack.c.h.b16 %v4798
    %v5127 = vunpack.c.l.b16 %v4799
    %v5128 = vunpack.c.h.b16 %v4799
    %v5129 = vunpack.c.l.b16 %v4800
    %v5130 = vunpack.c.h.b16 %v4800
    %v5131 = vunpack.c.l.b16 %v4801
    %v5132 = vunpack.c.h.b16 %v4801
    %v5133 = vunpack.c.l.b16 %v4802
    %v5134 = vunpack.c.h.b16 %v4802
    %v5135 = vunpack.c.l.b16 %v4803
    %v5136 = vunpack.c.h.b16 %v4803
    %v5137 = vunpack.c.l.b16 %v4804
    %v5138 = vunpack.c.h.b16 %v4804
    %v5139 = vunpack.c.l.b16 %v4805
    %v5140 = vunpack.c.h.b16 %v4805
    %v5141 = vunpack.c.l.b16 %v4806
    %v5142 = vunpack.c.h.b16 %v4806
    %v5143 = vunpack.c.l.b16 %v4807
    %v5144 = vunpack.c.h.b16 %v4807
    %v5145 = vunpack.c.l.b16 %v4808
    %v5146 = vunpack.c.h.b16 %v4808
    %v5147 = vunpack.c.l.b16 %v4809
    %v5148 = vunpack.c.h.b16 %v4809
    %v5149 = vunpack.c.l.b16 %v4810
    %v5150 = vunpack.c.h.b16 %v4810
    %v5151 = vunpack.c.l.b16 %v4811
    %v5152 = vunpack.c.h.b16 %v4811
    %v5153 = vunpack.c.l.b16 %v4812
    %v5154 = vunpack.c.h.b16 %v4812
    %v5155 = vunpack.c.l.b16 %v4813
    %v5156 = vunpack.c.h.b16 %v4813
    %v5157 = vunpack.c.l.b16 %v4814
    %v5158 = vunpack.c.h.b16 %v4814
    %v5159 = vunpack.c.l.b16 %v4815
    %v5160 = vunpack.c.h.b16 %v4815
    %v5161 = vunpack.c.l.b16 %v4816
    %v5162 = vunpack.c.h.b16 %v4816
    %v5163 = vunpack.c.l.b16 %v4817
    %v5164 = vunpack.c.h.b16 %v4817
    %v5165 = vunpack.c.l.b16 %v4818
    %v5166 = vunpack.c.h.b16 %v4818
    %v5167 = vunpack.c.l.b16 %v4819
    %v5168 = vunpack.c.h.b16 %v4819
    %v5169 = vunpack.c.l.b16 %v4820
    %v5170 = vunpack.c.h.b16 %v4820
    %v5171 = vunpack.c.l.b16 %v4821
    %v5172 = vunpack.c.h.b16 %v4821
    %v5173 = vunpack.c.l.b16 %v4822
    %v5174 = vunpack.c.h.b16 %v4822
    %v5175 = vunpack.c.l.b16 %v4823
    %v5176 = vunpack.c.h.b16 %v4823
    %v5177 = vunpack.c.l.b16 %v4824
    %v5178 = vunpack.c.h.b16 %v4824
    %v5179 = vunpack.c.l.b16 %v4825
    %v5180 = vunpack.c.h.b16 %v4825
    %v5181 = vunpack.c.l.b16 %v4826
    %v5182 = vunpack.c.h.b16 %v4826
    %v5183 = vunpack.c.l.b16 %v4827
    %v5184 = vunpack.c.h.b16 %v4827
    %v5185 = vunpack.c.l.b16 %v4828
    %v5186 = vunpack.c.h.b16 %v4828
    %v5187 = vunpack.c.l.b16 %v4829
    %v5188 = vunpack.c.h.b16 %v4829
    %v5189 = vunpack.c.l.b16 %v4830
    %v5190 = vunpack.c.h.b16 %v4830
    %v5191 = vunpack.c.l.b16 %v4831
    %v5192 = vunpack.c.h.b16 %v4831
    %v5193 = vunpack.c.l.b16 %v4832
    %v5194 = vunpack.c.h.b16 %v4832
    %v5195 = vunpack.c.l.b16 %v4833
    %v5196 = vunpack.c.h.b16 %v4833
    %v5197 = vunpack.c.l.b16 %v4834
    %v5198 = vunpack.c.h.b16 %v4834
    %v5199 = vunpack.c.l.b16 %v4835
    %v5200 = vunpack.c.h.b16 %v4835
    %v5201 = vunpack.c.l.b16 %v4836
    %v5202 = vunpack.c.h.b16 %v4836
    %v5203 = vunpack.c.l.b16 %v4837
    %v5204 = vunpack.c.h.b16 %v4837
    %v5205 = vunpack.c.l.b16 %v4838
    %v5206 = vunpack.c.h.b16 %v4838
    %v5207 = vunpack.c.l.b16 %v4839
    %v5208 = vunpack.c.h.b16 %v4839
    %v5209 = vunpack.c.l.b16 %v4840
    %v5210 = vunpack.c.h.b16 %v4840
    %v5211 = vunpack.c.l.b16 %v4841
    %v5212 = vunpack.c.h.b16 %v4841
    %v5213 = vunpack.c.l.b16 %v4842
    %v5214 = vunpack.c.h.b16 %v4842
    %v5215 = vunpack.c.l.b16 %v4843
    %v5216 = vunpack.c.h.b16 %v4843
    %v5217 = vunpack.c.l.b16 %v4844
    %v5218 = vunpack.c.h.b16 %v4844
    %v5219 = vunpack.c.l.b16 %v4845
    %v5220 = vunpack.c.h.b16 %v4845
    %v5221 = vunpack.c.l.b16 %v4846
    %v5222 = vunpack.c.h.b16 %v4846
    %v5223 = vunpack.c.l.b16 %v4847
    %v5224 = vunpack.c.h.b16 %v4847
    %v5225 = vunpack.c.l.b16 %v4848
    %v5226 = vunpack.c.h.b16 %v4848
    %v5227 = vunpack.c.l.b16 %v4849
    %v5228 = vunpack.c.h.b16 %v4849
    %v5229 = vunpack.c.l.b16 %v4850
    %v5230 = vunpack.c.h.b16 %v4850
    %v5231 = vunpack.c.l.b16 %v4851
    %v5232 = vunpack.c.h.b16 %v4851
    %v5233 = vunpack.c.l.b16 %v4852
    %v5234 = vunpack.c.h.b16 %v4852
    %v5235 = vunpack.c.l.b16 %v4853
    %v5236 = vunpack.c.h.b16 %v4853
    %v5237 = vunpack.c.l.b16 %v4854
    %v5238 = vunpack.c.h.b16 %v4854
    %v5239 = vunpack.c.l.b16 %v4855
    %v5240 = vunpack.c.h.b16 %v4855
    %v5241 = vunpack.c.l.b16 %v4856
    %v5242 = vunpack.c.h.b16 %v4856
    %v5243 = vunpack.c.l.b16 %v4857
    %v5244 = vunpack.c.h.b16 %v4857
    %v5245 = vunpack.c.l.b16 %v4858
    %v5246 = vunpack.c.h.b16 %v4858
    %v5247 = vunpack.c.l.b16 %v4859
    %v5248 = vunpack.c.h.b16 %v4859
    %v5249 = vunpack.c.l.b16 %v4860
    %v5250 = vunpack.c.h.b16 %v4860
    %v5251 = vunpack.c.l.b16 %v4861
    %v5252 = vunpack.c.h.b16 %v4861
    %v5253 = vunpack.c.l.b16 %v4862
    %v5254 = vunpack.c.h.b16 %v4862
    %v5255 = vunpack.c.l.b16 %v4863
    %v5256 = vunpack.c.h.b16 %v4863
    %v5257 = vunpack.c.l.b16 %v4864
    %v5258 = vunpack.c.h.b16 %v4864
    %v5259 = vunpack.c.l.b16 %v4865
    %v5260 = vunpack.c.h.b16 %v4865
    %v5261 = vunpack.c.l.b16 %v4866
    %v5262 = vunpack.c.h.b16 %v4866
    %v5263 = vunpack.c.l.b16 %v4867
    %v5264 = vunpack.c.h.b16 %v4867
    %v5265 = vunpack.c.l.b16 %v4868
    %v5266 = vunpack.c.h.b16 %v4868
    %v5267 = vunpack.c.l.b16 %v4869
    %v5268 = vunpack.c.h.b16 %v4869
    %v5269 = vunpack.c.l.b16 %v4870
    %v5270 = vunpack.c.h.b16 %v4870
    %v5271 = vunpack.c.l.b16 %v4871
    %v5272 = vunpack.c.h.b16 %v4871
    %v5273 = vunpack.c.l.b16 %v4872
    %v5274 = vunpack.c.h.b16 %v4872
    %v5275 = vunpack.c.l.b16 %v4873
    %v5276 = vunpack.c.h.b16 %v4873
    %v5277 = vunpack.c.l.b16 %v4874
    %v5278 = vunpack.c.h.b16 %v4874
    %v5279 = vpack.c.b16 %v5025, %v5023
    %v5280 = vpack.c.b16 %v5026, %v5024
    %v5281 = vpack.c.b16 %v5029, %v5027
    %v5282 = vpack.c.b16 %v5030, %v5028
    %v5283 = vpack.c.b16 %v5033, %v5031
    %v5284 = vpack.c.b16 %v5034, %v5032
    %v5285 = vpack.c.b16 %v5037, %v5035
    %v5286 = vpack.c.b16 %v5038, %v5036
    %v5287 = vpack.c.b16 %v5041, %v5039
    %v5288 = vpack.c.b16 %v5042, %v5040
    %v5289 = vpack.c.b16 %v5045, %v5043
    %v5290 = vpack.c.b16 %v5046, %v5044
    %v5291 = vpack.c.b16 %v5049, %v5047
    %v5292 = vpack.c.b16 %v5050, %v5048
    %v5293 = vpack.c.b16 %v5053, %v5051
    %v5294 = vpack.c.b16 %v5054, %v5052
    %v5295 = vpack.c.b16 %v5057, %v5055
    %v5296 = vpack.c.b16 %v5058, %v5056
    %v5297 = vpack.c.b16 %v5061, %v5059
    %v5298 = vpack.c.b16 %v5062, %v5060
    %v5299 = vpack.c.b16 %v5065, %v5063
    %v5300 = vpack.c.b16 %v5066, %v5064
    %v5301 = vpack.c.b16 %v5069, %v5067
    %v5302 = vpack.c.b16 %v5070, %v5068
    %v5303 = vpack.c.b16 %v5073, %v5071
    %v5304 = vpack.c.b16 %v5074, %v5072
    %v5305 = vpack.c.b16 %v5077, %v5075
    %v5306 = vpack.c.b16 %v5078, %v5076
    %v5307 = vpack.c.b16 %v5081, %v5079
    %v5308 = vpack.c.b16 %v5082, %v5080
    %v5309 = vpack.c.b16 %v5085, %v5083
    %v5310 = vpack.c.b16 %v5086, %v5084
    %v5311 = vpack.c.b16 %v5089, %v5087
    %v5312 = vpack.c.b16 %v5090, %v5088
    %v5313 = vpack.c.b16 %v5093, %v5091
    %v5314 = vpack.c.b16 %v5094, %v5092
    %v5315 = vpack.c.b16 %v5097, %v5095
    %v5316 = vpack.c.b16 %v5098, %v5096
    %v5317 = vpack.c.b16 %v5101, %v5099
    %v5318 = vpack.c.b16 %v5102, %v5100
    %v5319 = vpack.c.b16 %v5105, %v5103
    %v5320 = vpack.c.b16 %v5106, %v5104
    %v5321 = vpack.c.b16 %v5109, %v5107
    %v5322 = vpack.c.b16 %v5110, %v5108
    %v5323 = vpack.c.b16 %v5113, %v5111
    %v5324 = vpack.c.b16 %v5114, %v5112
    %v5325 = vpack.c.b16 %v5117, %v5115
    %v5326 = vpack.c.b16 %v5118, %v5116
    %v5327 = vpack.c.b16 %v5121, %v5119
    %v5328 = vpack.c.b16 %v5122, %v5120
    %v5329 = vpack.c.b16 %v5125, %v5123
    %v5330 = vpack.c.b16 %v5126, %v5124
    %v5331 = vpack.c.b16 %v5129, %v5127
    %v5332 = vpack.c.b16 %v5130, %v5128
    %v5333 = vpack.c.b16 %v5133, %v5131
    %v5334 = vpack.c.b16 %v5134, %v5132
    %v5335 = vpack.c.b16 %v5137, %v5135
    %v5336 = vpack.c.b16 %v5138, %v5136
    %v5337 = vpack.c.b16 %v5141, %v5139
    %v5338 = vpack.c.b16 %v5142, %v5140
    %v5339 = vpack.c.b16 %v5145, %v5143
    %v5340 = vpack.c.b16 %v5146, %v5144
    %v5341 = vpack.c.b16 %v5149, %v5147
    %v5342 = vpack.c.b16 %v5150, %v5148
    %v5343 = vpack.c.b16 %v5153, %v5151
    %v5344 = vpack.c.b16 %v5154, %v5152
    %v5345 = vpack.c.b16 %v5157, %v5155
    %v5346 = vpack.c.b16 %v5158, %v5156
    %v5347 = vpack.c.b16 %v5161, %v5159
    %v5348 = vpack.c.b16 %v5162, %v5160
    %v5349 = vpack.c.b16 %v5165, %v5163
    %v5350 = vpack.c.b16 %v5166, %v5164
    %v5351 = vpack.c.b16 %v5169, %v5167
    %v5352 = vpack.c.b16 %v5170, %v5168
    %v5353 = vpack.c.b16 %v5173, %v5171
    %v5354 = vpack.c.b16 %v5174, %v5172
    %v5355 = vpack.c.b16 %v5177, %v5175
    %v5356 = vpack.c.b16 %v5178, %v5176
    %v5357 = vpack.c.b16 %v5181, %v5179
    %v5358 = vpack.c.b16 %v5182, %v5180
    %v5359 = vpack.c.b16 %v5185, %v5183
    %v5360 = vpack.c.b16 %v5186, %v5184
    %v5361 = vpack.c.b16 %v5189, %v5187
    %v5362 = vpack.c.b16 %v5190, %v5188
    %v5363 = vpack.c.b16 %v5193, %v5191
    %v5364 = vpack.c.b16 %v5194, %v5192
    %v5365 = vpack.c.b16 %v5197, %v5195
    %v5366 = vpack.c.b16 %v5198, %v5196
    %v5367 = vpack.c.b16 %v5201, %v5199
    %v5368 = vpack.c.b16 %v5202, %v5200
    %v5369 = vpack.c.b16 %v5205, %v5203
    %v5370 = vpack.c.b16 %v5206, %v5204
    %v5371 = vpack.c.b16 %v5209, %v5207
    %v5372 = vpack.c.b16 %v5210, %v5208
    %v5373 = vpack.c.b16 %v5213, %v5211
    %v5374 = vpack.c.b16 %v5214, %v5212
    %v5375 = vpack.c.b16 %v5217, %v5215
    %v5376 = vpack.c.b16 %v5218, %v5216
    %v5377 = vpack.c.b16 %v5221, %v5219
    %v5378 = vpack.c.b16 %v5222, %v5220
    %v5379 = vpack.c.b16 %v5225, %v5223
    %v5380 = vpack.c.b16 %v5226, %v5224
    %v5381 = vpack.c.b16 %v5229, %v5227
    %v5382 = vpack.c.b16 %v5230, %v5228
    %v5383 = vpack.c.b16 %v5233, %v5231
    %v5384 = vpack.c.b16 %v5234, %v5232
    %v5385 = vpack.c.b16 %v5237, %v5235
    %v5386 = vpack.c.b16 %v5238, %v5236
    %v5387 = vpack.c.b16 %v5241, %v5239
    %v5388 = vpack.c.b16 %v5242, %v5240
    %v5389 = vpack.c.b16 %v5245, %v5243
    %v5390 = vpack.c.b16 %v5246, %v5244
    %v5391 = vpack.c.b16 %v5249, %v5247
    %v5392 = vpack.c.b16 %v5250, %v5248
    %v5393 = vpack.c.b16 %v5253, %v5251
    %v5394 = vpack.c.b16 %v5254, %v5252
    %v5395 = vpack.c.b16 %v5257, %v5255
    %v5396 = vpack.c.b16 %v5258, %v5256
    %v5397 = vpack.c.b16 %v5261, %v5259
    %v5398 = vpack.c.b16 %v5262, %v5260
    %v5399 = vpack.c.b16 %v5265, %v5263
    %v5400 = vpack.c.b16 %v5266, %v5264
    %v5401 = vpack.c.b16 %v5269, %v5267
    %v5402 = vpack.c.b16 %v5270, %v5268
    %v5403 = vpack.c.b16 %v5273, %v5271
    %v5404 = vpack.c.b16 %v5274, %v5272
    %v5405 = vpack.c.b16 %v5277, %v5275
    %v5406 = vpack.c.b16 %v5278, %v5276
    %5535 = vmatprep.subr.bf16.mxu0 %v5294
    %5536 = vmatpush1.bf16.msra.mxu0 %v5293
    %5537 = vmatprep.subr.bf16.mxu0 %v5292
    %5538 = vmatpush1.bf16.msra.mxu0 %v5291
    %5539 = vmatprep.subr.bf16.mxu0 %v5290
    %5540 = vmatpush1.bf16.msra.mxu0 %v5289
    %5541 = vmatprep.subr.bf16.mxu0 %v5288
    %5542 = vmatpush1.bf16.msra.mxu0 %v5287
    %5543 = vmatprep.subr.bf16.mxu0 %v5286
    %5544 = vmatpush1.bf16.msra.mxu0 %v5285
    %5545 = vmatprep.subr.bf16.mxu0 %v5284
    %5546 = vmatpush1.bf16.msra.mxu0 %v5283
    %5547 = vmatprep.subr.bf16.mxu0 %v5282
    %5548 = vmatpush1.bf16.msra.mxu0 %v5281
    %5549 = vmatprep.subr.bf16.mxu0 %v5280
    %5550 = vmatpush1.bf16.msra.mxu0 %v5279
    %5551 = vmatprep.subr.bf16.mxu0 %v5310
    %5552 = vmatpush2.bf16.msra.mxu0 %v5309
    %5553 = vmatprep.subr.bf16.mxu0 %v5308
    %5554 = vmatpush2.bf16.msra.mxu0 %v5307
    %5555 = vmatprep.subr.bf16.mxu0 %v5306
    %5556 = vmatpush2.bf16.msra.mxu0 %v5305
    %5557 = vmatprep.subr.bf16.mxu0 %v5304
    %5558 = vmatpush2.bf16.msra.mxu0 %v5303
    %5559 = vmatprep.subr.bf16.mxu0 %v5302
    %5560 = vmatpush2.bf16.msra.mxu0 %v5301
    %5561 = vmatprep.subr.bf16.mxu0 %v5300
    %5562 = vmatpush2.bf16.msra.mxu0 %v5299
    %5563 = vmatprep.subr.bf16.mxu0 %v5298
    %5564 = vmatpush2.bf16.msra.mxu0 %v5297
    %5565 = vmatprep.subr.bf16.mxu0 %v5296
    %5566 = vmatpush2.bf16.msra.mxu0 %v5295
    %5567 = vmatprep.mubr.bf16.mxu0 %v4876
    %5568 = vmatmul.mubr.bf16.gmra.mxu0 %v4875
    %v5569 = vpop.f32.mrf.mxu0
    %v5570 = vadd.f32 %v4888, %v5569
    %v5571 = vpop.f32.mrf.mxu0
    %v5572 = vadd.f32 %v4892, %v5571
    %v5573 = vpop.f32.mrf.mxu0
    %v5574 = vadd.f32 %v4888, %v5573
    %v5575 = vpop.f32.mrf.mxu0
    %v5576 = vadd.f32 %v4892, %v5575
    %5577 = vdwg.mxu0
    %5578 = vmatprep.subr.bf16.mxu0 %v5326
    %5579 = vmatpush1.bf16.msra.mxu0 %v5325
    %5580 = vmatprep.subr.bf16.mxu0 %v5324
    %5581 = vmatpush1.bf16.msra.mxu0 %v5323
    %5582 = vmatprep.subr.bf16.mxu0 %v5322
    %5583 = vmatpush1.bf16.msra.mxu0 %v5321
    %5584 = vmatprep.subr.bf16.mxu0 %v5320
    %5585 = vmatpush1.bf16.msra.mxu0 %v5319
    %5586 = vmatprep.subr.bf16.mxu0 %v5318
    %5587 = vmatpush1.bf16.msra.mxu0 %v5317
    %5588 = vmatprep.subr.bf16.mxu0 %v5316
    %5589 = vmatpush1.bf16.msra.mxu0 %v5315
    %5590 = vmatprep.subr.bf16.mxu0 %v5314
    %5591 = vmatpush1.bf16.msra.mxu0 %v5313
    %5592 = vmatprep.subr.bf16.mxu0 %v5312
    %5593 = vmatpush1.bf16.msra.mxu0 %v5311
    %5594 = vmatprep.subr.bf16.mxu0 %v5342
    %5595 = vmatpush2.bf16.msra.mxu0 %v5341
    %5596 = vmatprep.subr.bf16.mxu0 %v5340
    %5597 = vmatpush2.bf16.msra.mxu0 %v5339
    %5598 = vmatprep.subr.bf16.mxu0 %v5338
    %5599 = vmatpush2.bf16.msra.mxu0 %v5337
    %5600 = vmatprep.subr.bf16.mxu0 %v5336
    %5601 = vmatpush2.bf16.msra.mxu0 %v5335
    %5602 = vmatprep.subr.bf16.mxu0 %v5334
    %5603 = vmatpush2.bf16.msra.mxu0 %v5333
    %5604 = vmatprep.subr.bf16.mxu0 %v5332
    %5605 = vmatpush2.bf16.msra.mxu0 %v5331
    %5606 = vmatprep.subr.bf16.mxu0 %v5330
    %5607 = vmatpush2.bf16.msra.mxu0 %v5329
    %5608 = vmatprep.subr.bf16.mxu0 %v5328
    %5609 = vmatpush2.bf16.msra.mxu0 %v5327
    %5610 = vmatprep.mubr.bf16.mxu0 %v4878
    %5611 = vmatmul.mubr.bf16.gmra.mxu0 %v4877
    %v5612 = vpop.f32.mrf.mxu0
    %v5613 = vadd.f32 %v5570, %v5612
    %v5614 = vpop.f32.mrf.mxu0
    %v5615 = vadd.f32 %v5572, %v5614
    %v5616 = vpop.f32.mrf.mxu0
    %v5617 = vadd.f32 %v5574, %v5616
    %v5618 = vpop.f32.mrf.mxu0
    %v5619 = vadd.f32 %v5576, %v5618
    %5620 = vdwg.mxu0
    %5621 = vmatprep.subr.bf16.mxu0 %v5358
    %5622 = vmatpush1.bf16.msra.mxu0 %v5357
    %5623 = vmatprep.subr.bf16.mxu0 %v5356
    %5624 = vmatpush1.bf16.msra.mxu0 %v5355
    %5625 = vmatprep.subr.bf16.mxu0 %v5354
    %5626 = vmatpush1.bf16.msra.mxu0 %v5353
    %5627 = vmatprep.subr.bf16.mxu0 %v5352
    %5628 = vmatpush1.bf16.msra.mxu0 %v5351
    %5629 = vmatprep.subr.bf16.mxu0 %v5350
    %5630 = vmatpush1.bf16.msra.mxu0 %v5349
    %5631 = vmatprep.subr.bf16.mxu0 %v5348
    %5632 = vmatpush1.bf16.msra.mxu0 %v5347
    %5633 = vmatprep.subr.bf16.mxu0 %v5346
    %5634 = vmatpush1.bf16.msra.mxu0 %v5345
    %5635 = vmatprep.subr.bf16.mxu0 %v5344
    %5636 = vmatpush1.bf16.msra.mxu0 %v5343
    %5637 = vmatprep.subr.bf16.mxu0 %v5374
    %5638 = vmatpush2.bf16.msra.mxu0 %v5373
    %5639 = vmatprep.subr.bf16.mxu0 %v5372
    %5640 = vmatpush2.bf16.msra.mxu0 %v5371
    %5641 = vmatprep.subr.bf16.mxu0 %v5370
    %5642 = vmatpush2.bf16.msra.mxu0 %v5369
    %5643 = vmatprep.subr.bf16.mxu0 %v5368
    %5644 = vmatpush2.bf16.msra.mxu0 %v5367
    %5645 = vmatprep.subr.bf16.mxu0 %v5366
    %5646 = vmatpush2.bf16.msra.mxu0 %v5365
    %5647 = vmatprep.subr.bf16.mxu0 %v5364
    %5648 = vmatpush2.bf16.msra.mxu0 %v5363
    %5649 = vmatprep.subr.bf16.mxu0 %v5362
    %5650 = vmatpush2.bf16.msra.mxu0 %v5361
    %5651 = vmatprep.subr.bf16.mxu0 %v5360
    %5652 = vmatpush2.bf16.msra.mxu0 %v5359
    %5653 = vmatprep.mubr.bf16.mxu0 %v4880
    %5654 = vmatmul.mubr.bf16.gmra.mxu0 %v4879
    %v5655 = vpop.f32.mrf.mxu0
    %v5656 = vadd.f32 %v5613, %v5655
    %v5657 = vpop.f32.mrf.mxu0
    %v5658 = vadd.f32 %v5615, %v5657
    %v5659 = vpop.f32.mrf.mxu0
    %v5660 = vadd.f32 %v5617, %v5659
    %v5661 = vpop.f32.mrf.mxu0
    %v5662 = vadd.f32 %v5619, %v5661
    %5663 = vdwg.mxu0
    %5664 = vmatprep.subr.bf16.mxu0 %v5390
    %5665 = vmatpush1.bf16.msra.mxu0 %v5389
    %5666 = vmatprep.subr.bf16.mxu0 %v5388
    %5667 = vmatpush1.bf16.msra.mxu0 %v5387
    %5668 = vmatprep.subr.bf16.mxu0 %v5386
    %5669 = vmatpush1.bf16.msra.mxu0 %v5385
    %5670 = vmatprep.subr.bf16.mxu0 %v5384
    %5671 = vmatpush1.bf16.msra.mxu0 %v5383
    %5672 = vmatprep.subr.bf16.mxu0 %v5382
    %5673 = vmatpush1.bf16.msra.mxu0 %v5381
    %5674 = vmatprep.subr.bf16.mxu0 %v5380
    %5675 = vmatpush1.bf16.msra.mxu0 %v5379
    %5676 = vmatprep.subr.bf16.mxu0 %v5378
    %5677 = vmatpush1.bf16.msra.mxu0 %v5377
    %5678 = vmatprep.subr.bf16.mxu0 %v5376
    %5679 = vmatpush1.bf16.msra.mxu0 %v5375
    %5680 = vmatprep.subr.bf16.mxu0 %v5406
    %5681 = vmatpush2.bf16.msra.mxu0 %v5405
    %5682 = vmatprep.subr.bf16.mxu0 %v5404
    %5683 = vmatpush2.bf16.msra.mxu0 %v5403
    %5684 = vmatprep.subr.bf16.mxu0 %v5402
    %5685 = vmatpush2.bf16.msra.mxu0 %v5401
    %5686 = vmatprep.subr.bf16.mxu0 %v5400
    %5687 = vmatpush2.bf16.msra.mxu0 %v5399
    %5688 = vmatprep.subr.bf16.mxu0 %v5398
    %5689 = vmatpush2.bf16.msra.mxu0 %v5397
    %5690 = vmatprep.subr.bf16.mxu0 %v5396
    %5691 = vmatpush2.bf16.msra.mxu0 %v5395
    %5692 = vmatprep.subr.bf16.mxu0 %v5394
    %5693 = vmatpush2.bf16.msra.mxu0 %v5393
    %5694 = vmatprep.subr.bf16.mxu0 %v5392
    %5695 = vmatpush2.bf16.msra.mxu0 %v5391
    %5696 = vmatprep.mubr.bf16.mxu0 %v4882
    %5697 = vmatmul.mubr.bf16.gmra.mxu0 %v4881
    %v5698 = vpop.f32.mrf.mxu0
    %v5699 = vadd.f32 %v5656, %v5698
    %v5700 = vpop.f32.mrf.mxu0
    %v5701 = vadd.f32 %v5658, %v5700
    %v5702 = vpop.f32.mrf.mxu0
    %v5703 = vadd.f32 %v5660, %v5702
    %v5704 = vpop.f32.mrf.mxu0
    %v5705 = vadd.f32 %v5662, %v5704
    %5706 = vdwg.mxu0
    %v5707 = vsub.f32 0.0, %v5699
    %v5708 = vsub.f32 0.0, %v5701
    %v5709 = vsub.f32 0.0, %v5703
    %v5710 = vsub.f32 0.0, %v5705
    %v5711 = vmul.f32 %v5707, 1.442695
    %v5712 = vpow.pop %v5711
    %v5713 = vmul.f32 %v5708, 1.442695
    %v5714 = vpow.pop %v5713
    %v5715 = vmul.f32 %v5709, 1.442695
    %v5716 = vpow.pop %v5715
    %v5717 = vmul.f32 %v5710, 1.442695
    %v5718 = vpow.pop %v5717
    %v5719 = vadd.f32 %v5712, 1.0
    %v5720 = vadd.f32 %v5714, 1.0
    %v5721 = vadd.f32 %v5716, 1.0
    %v5722 = vadd.f32 %v5718, 1.0
    %v5723 = vrcp.pop %v5719
    %v5724 = vrcp.pop %v5720
    %v5725 = vrcp.pop %v5721
    %v5726 = vrcp.pop %v5722
    %5727 = vst [vmem:[#allocation29] sm:$0xff] %v5723
    %5728 = vst [vmem:[#allocation29 + $0x8] sm:$0xff] %v5724
    %5729 = vst [vmem:[#allocation29 + $0x10] sm:$0xff] %v5725
    %5730 = vst [vmem:[#allocation29 + $0x18] sm:$0xff] %v5726
    // Predicated region
    $region170: #{tpu_custom_call.1} parent=1 // pred_check
      _
    $region171: #{tpu_custom_call.1} parent=1 // pred_check_branch
      %5732 = sbr.rel (0) target = $region173
    $region172: #{tpu_custom_call.1} parent=1 // pred_region
      %s5734 = ssub.s32 512, 512
      %5735 = vsyncadd [#allocation4], %s5734
      %s5737 = sshll.u32 [#allocation29], 4
      %s5738 = int_to_ptr.vmem [resolvable:$true] %s5737
      %5740 = dma.vmem_to_hbm [thread:$0]  %s5738, 512, %s25, [#allocation4]
    $region173: #{tpu_custom_call.1} parent=1 // pred_fallthru
      _
    // Predicated region
    $region174: #{tpu_custom_call.1} parent=1 // pred_check
      _
    $region175: #{tpu_custom_call.1} parent=1 // pred_check_branch
      %5742 = sbr.rel (0) target = $region177
    $region176: #{tpu_custom_call.1} parent=1 // pred_region
      %5743 = dma.done [#allocation4], 512
    $region177: #{tpu_custom_call.1} parent=1 // pred_fallthru
      _
    %5744 = vsyncpa [#allocation3], 1
    %5745 = vsyncpa [#allocation6], 1
    %5746 = vsyncpa [#allocation9], 1
    %5747 = vsyncpa [#allocation12], 1
    %5748 = vsyncpa [#allocation15], 1
    %5749 = vsyncpa [#allocation18], 1
    %5750 = vsyncpa [#allocation21], 1
    %5751 = vsyncpa [#allocation24], 1
    %5752 = vsyncpa [#allocation27], 1
    %5753 = vsyncpa [#allocation4], 1

</llo_original>
